<compile_context>
chip_gen: v7x
topology: tpu7x:2x2x1
jax: 0.10.0
libtpu: 0.0.40
codegen_flags: <defaults>
</compile_context>

<pallas_src>
import math
import numpy as np
import jax
import jax.numpy as jnp
from jax.experimental import pallas as pl
from jax.experimental.pallas import tpu as pltpu

# ---------------- demo hyper-params (small but consistent with __init__) -----
GRAPHS_PER_GROUP = 2          # graphs folded block-diagonally into one grid step
NUM_GROUPS = 8                # grid steps (pipeline depth; 4 per TC on v7x)
N_NODES = 64                  # nodes per graph
BN = GRAPHS_PER_GROUP * N_NODES   # 128 -> lane-dense node dimension
NUM_FEATURES = 32             # num_features (logical); zero-padded to F_PAD lanes
F_PAD = 128                   # lane-dense feature width presented to the kernel
HIDDEN = 256                  # lin1 width (module default 512; 256 fills the 256-wide MXU)
K = 10                        # Chebyshev order (module default)


# --------------------------- Chebyshev coefficients --------------------------
def cheby(i, x):
    if i == 0:
        return 1.0
    t0, t1 = 1.0, x
    for _ in range(2, i + 1):
        t0, t1 = t1, 2.0 * x * t1 - t0
    return t1


def chebnetii_coeffs(temp, K):
    """Exact replica of ChebnetII_prop coefficient interpolation (relu(temp))."""
    temp = np.maximum(np.asarray(temp, dtype=np.float64), 0.0)
    coe = np.zeros(K + 1, dtype=np.float64)
    for i in range(K + 1):
        c = temp[0] * cheby(i, math.cos((K + 0.5) * math.pi / (K + 1)))
        for j in range(1, K + 1):
            x_j = math.cos((K - j + 0.5) * math.pi / (K + 1))
            c += temp[j] * cheby(i, x_j)
        coe[i] = 2.0 * c / (K + 1)
    return coe


# ------------------------------- Pallas kernel -------------------------------
def _chebnetii_kernel(coe_ref, p_ref, x_ref, w_ref, b_ref, o_ref):
    """One block-diagonal group of graphs per grid step.

    coe_ref: (K+1,)          f32 SMEM  Chebyshev coefficients (coe[0] pre-halved)
    p_ref  : (1, BN, BN)     bf16      block-diagonal propagation matrix P = L_tilde
    x_ref  : (1, BN, F_PAD)  bf16      zero-padded, graph-stacked node features
    w_ref  : (F_PAD, HIDDEN) bf16      lin1 weight W^T (rows >= NUM_FEATURES are zero)
    b_ref  : (1, HIDDEN)     f32       lin1 bias
    o_ref  : (1, BN, HIDDEN) f32       output (also used as the f32 accumulator)
    """
    p = p_ref[0]                       # (BN, BN) bf16
    w = w_ref[...]                     # (F_PAD, H) bf16
    x_bf = x_ref[0]                    # (BN, F_PAD) bf16

    # Tx_0 contribution (coe[0] already includes the 1/2 factor).
    tx_prev = x_bf.astype(jnp.float32)
    o_ref[0] = jnp.dot((coe_ref[0] * tx_prev).astype(jnp.bfloat16), w,
                       preferred_element_type=jnp.float32)

    # Tx_1 = P @ Tx_0
    tx_cur = jnp.dot(p, x_bf, preferred_element_type=jnp.float32)
    o_ref[0] += jnp.dot((coe_ref[1] * tx_cur).astype(jnp.bfloat16), w,
                        preferred_element_type=jnp.float32)

    for k in range(2, K + 1):          # static unroll; K is small
        # Tx_k = 2 P Tx_{k-1} - Tx_{k-2}. The factor 2 is folded into the f32
        # operand before the bf16 cast (exact; no bf16 (N,N) p+p temp).
        tx_next = jnp.dot(p, (2.0 * tx_cur).astype(jnp.bfloat16),
                          preferred_element_type=jnp.float32) - tx_prev
        o_ref[0] += jnp.dot((coe_ref[k] * tx_next).astype(jnp.bfloat16), w,
                            preferred_element_type=jnp.float32)
        tx_prev, tx_cur = tx_cur, tx_next

    # lin1 bias + ReLU. Dropout (dprate/dropout) is identity at inference and
    # BatchNorm1d is skipped (is_bns=False).
    o_ref[0] = jnp.maximum(o_ref[0] + b_ref[...], 0.0)


def chebnetii_forward(coe, p_grp, x_grp, w, b):
    """coe: (K+1,) f32; p_grp: (G,BN,BN) bf16; x_grp: (G,BN,F_PAD) bf16;
       w: (F_PAD,H) bf16; b: (1,H) f32.  Returns (G,BN,H) f32."""
    G, BN_, _ = p_grp.shape
    FP = x_grp.shape[-1]
    H = w.shape[1]
    return pl.pallas_call(
        _chebnetii_kernel,
        out_shape=jax.ShapeDtypeStruct((G, BN_, H), jnp.float32),
        grid=(G,),
        in_specs=[
            pl.BlockSpec(memory_space=pltpu.MemorySpace.SMEM),     # coe scalars
            pl.BlockSpec((1, BN_, BN_), lambda g: (g, 0, 0)),      # block-diag P
            pl.BlockSpec((1, BN_, FP), lambda g: (g, 0, 0)),       # stacked features
            pl.BlockSpec((FP, H), lambda g: (0, 0)),               # shared lin1 W^T
            pl.BlockSpec((1, H), lambda g: (0, 0)),                # shared bias
        ],
        out_specs=pl.BlockSpec((1, BN_, H), lambda g: (g, 0, 0)),
        compiler_params=pltpu.CompilerParams(
            dimension_semantics=("parallel",)),   # 2 TCs on v7x; harmless on v5e/v6e
    )(coe, p_grp, x_grp, w, b)


# ---------------------------- numpy reference ---------------------------------
def _bf16(a):
    """Round to bfloat16 (round-to-nearest-even), returned as float64."""
    return np.asarray(jnp.asarray(np.asarray(a, np.float32),
                                  dtype=jnp.bfloat16)).astype(np.float64)


def ref_forward(p_bf, x_bf, w_bf, bias, coe_f32):
    """float64 reference mirroring the kernel's bf16 operand rounding."""
    p = np.asarray(p_bf).astype(np.float64)       # bf16-valued
    x = np.asarray(x_bf).astype(np.float64)       # bf16-valued
    w = np.asarray(w_bf).astype(np.float64)       # bf16-valued
    bb = np.asarray(bias).astype(np.float64)
    coe = np.asarray(coe_f32).astype(np.float64)  # f32-valued, coe[0] pre-halved

    tx_prev = x                                   # Tx_0
    acc = _bf16(coe[0] * tx_prev) @ w
    tx_cur = p @ x                                # Tx_1
    acc = acc + _bf16(coe[1] * tx_cur) @ w
    for k in range(2, K + 1):
        tx_next = p @ _bf16(2.0 * tx_cur) - tx_prev
        acc = acc + _bf16(coe[k] * tx_next) @ w
        tx_prev, tx_cur = tx_cur, tx_next
    return np.maximum(acc + bb, 0.0)


# ----------------------------------- main -------------------------------------
if __name__ == "__main__":
    key = jax.random.PRNGKey(0)
    k_x, k_adj, k_w, k_b, k_t = jax.random.split(key, 5)

    TOTAL = NUM_GROUPS * GRAPHS_PER_GROUP

    # node features (TOTAL, N, F) -> zero-padded, graph-stacked, bf16
    x = jax.random.normal(k_x, (TOTAL, N_NODES, NUM_FEATURES), dtype=jnp.float32)
    x_pad = jnp.zeros((TOTAL, N_NODES, F_PAD), jnp.float32)
    x_pad = x_pad.at[:, :, :NUM_FEATURES].set(x)
    x_grp = x_pad.reshape(NUM_GROUPS, BN, F_PAD).astype(jnp.bfloat16)

    # synthetic undirected graphs -> block-diagonal dense L_tilde = -D^-1/2 A D^-1/2
    # (highpass=True; lowpass would flip the sign). Entries are in [-1, 1].
    p_np = np.zeros((NUM_GROUPS, BN, BN), np.float32)
    adj_keys = jax.random.split(k_adj, TOTAL)
    for g in range(TOTAL):
        rnd = np.asarray(jax.random.uniform(adj_keys[g], (N_NODES, N_NODES)))
        adj = (rnd < 0.08).astype(np.float32)
        adj = np.maximum(adj, adj.T)                       # symmetrize
        np.fill_diagonal(adj, 0.0)                         # no self loops
        deg = adj.sum(axis=1)
        dinv = np.where(deg > 0, 1.0 / np.sqrt(np.maximum(deg, 1e-12)), 0.0)
        a_norm = adj * dinv[:, None] * dinv[None, :]       # D^-1/2 A D^-1/2
        grp, slot = divmod(g, GRAPHS_PER_GROUP)
        lo = slot * N_NODES
        p_np[grp, lo:lo + N_NODES, lo:lo + N_NODES] = -a_norm
    p_grp = jnp.asarray(p_np, jnp.bfloat16)

    # ChebnetII_prop.temp is a learnable parameter (reset_parameters fills 1.0);
    # use a deterministic non-trivial value so every Chebyshev term is exercised.
    temp = np.asarray(jax.random.uniform(k_t, (K + 1,), minval=0.0, maxval=1.0))
    coe = chebnetii_coeffs(temp, K)
    coe[0] *= 0.5                                          # fold the coe[0]/2 factor
    coe_f32 = jnp.asarray(coe, jnp.float32)

    # lin1: Linear(num_features, hidden), PyTorch-style uniform init (W^T layout)
    bound = 1.0 / math.sqrt(NUM_FEATURES)
    w_t = jax.random.uniform(k_w, (NUM_FEATURES, HIDDEN),
                             minval=-bound, maxval=bound, dtype=jnp.float32)
    w_pad = jnp.zeros((F_PAD, HIDDEN), jnp.float32).at[:NUM_FEATURES, :].set(w_t)
    w_bf = w_pad.astype(jnp.bfloat16)
    b = jax.random.uniform(k_b, (1, HIDDEN), minval=-bound, maxval=bound,
                           dtype=jnp.float32)

    out = chebnetii_forward(coe_f32, p_grp, x_grp, w_bf, b)
    out = jax.block_until_ready(out)

    ref = np.stack([ref_forward(p_grp[g], x_grp[g], w_bf, b, coe_f32)
                    for g in range(NUM_GROUPS)])
    np.testing.assert_allclose(np.asarray(out), ref, rtol=2e-2, atol=2e-2)

    print("KERNEL_OK")
</pallas_src>

<mosaic_0001>
module attributes {stable_mosaic.version = 11 : i64} {
  func.func @_chebnetii_kernel(%arg0: i32, %arg1: memref<11xf32, #tpu.memory_space<smem>>, %arg2: memref<1x128x128xbf16, #tpu.memory_space<vmem>>, %arg3: memref<1x128x128xbf16, #tpu.memory_space<vmem>>, %arg4: memref<128x256xbf16, #tpu.memory_space<vmem>>, %arg5: memref<1x256xf32, #tpu.memory_space<vmem>>, %arg6: memref<1x128x256xf32, #tpu.memory_space<vmem>>) attributes {dimension_semantics = [#tpu.dimension_semantics<parallel>], iteration_bounds = array<i64: 8>, scalar_prefetch = 0 : i64, scratch_operands = 0 : i64, tpu.core_type = #tpu.core_type<tc>, window_params = [{transform_indices = @transform_0, window_bounds = array<i64: 11>}, {transform_indices = @transform_1, window_bounds = array<i64: 1, 128, 128>}, {transform_indices = @transform_2, window_bounds = array<i64: 1, 128, 128>}, {pipeline_mode = #tpu.pipeline_mode<synchronous>, transform_indices = @transform_3, window_bounds = array<i64: 128, 256>}, {pipeline_mode = #tpu.pipeline_mode<synchronous>, transform_indices = @transform_4, window_bounds = array<i64: 1, 256>}, {transform_indices = @transform_5, window_bounds = array<i64: 1, 128, 256>}]} {
    %c0 = arith.constant 0 : index
    %c0_0 = arith.constant 0 : index
    %c0_1 = arith.constant 0 : index
    %0 = vector.load %arg2[%c0, %c0_0, %c0_1] : memref<1x128x128xbf16, #tpu.memory_space<vmem>>, vector<1x128x128xbf16>
    %1 = vector.shape_cast %0 : vector<1x128x128xbf16> to vector<128x128xbf16>
    %c0_2 = arith.constant 0 : index
    %c0_3 = arith.constant 0 : index
    %2 = vector.load %arg4[%c0_2, %c0_3] : memref<128x256xbf16, #tpu.memory_space<vmem>>, vector<128x256xbf16>
    %c0_4 = arith.constant 0 : index
    %c0_5 = arith.constant 0 : index
    %c0_6 = arith.constant 0 : index
    %3 = vector.load %arg3[%c0_4, %c0_5, %c0_6] : memref<1x128x128xbf16, #tpu.memory_space<vmem>>, vector<1x128x128xbf16>
    %4 = vector.shape_cast %3 : vector<1x128x128xbf16> to vector<128x128xbf16>
    %5 = arith.extf %4 : vector<128x128xbf16> to vector<128x128xf32>
    %c0_7 = arith.constant 0 : index
    %6 = memref.load %arg1[%c0_7] : memref<11xf32, #tpu.memory_space<smem>>
    %7 = vector.broadcast %6 : f32 to vector<128x128xf32>
    %8 = arith.mulf %7, %5 : vector<128x128xf32>
    %9 = arith.truncf %8 : vector<128x128xf32> to vector<128x128xbf16>
    %cst = arith.constant dense<0.000000e+00> : vector<128x256xf32>
    %10 = tpu.matmul %9, %2, %cst {dimension_numbers = #tpu.dot_dimension_numbers<[1], [0], [0], [1], [0, 0, 1, 1], [], []>} : vector<128x128xbf16>, vector<128x256xbf16>, vector<128x256xf32> -> vector<128x256xf32>
    %c0_8 = arith.constant 0 : index
    %c0_9 = arith.constant 0 : index
    %c0_10 = arith.constant 0 : index
    %11 = vector.load %arg6[%c0_8, %c0_9, %c0_10] : memref<1x128x256xf32, #tpu.memory_space<vmem>>, vector<1x128x256xf32>
    %12 = vector.shape_cast %11 : vector<1x128x256xf32> to vector<128x256xf32>
    %13 = vector.shape_cast %10 : vector<128x256xf32> to vector<1x128x256xf32>
    tpu.vector_store %arg6[%c0_8, %c0_9, %c0_10], %13 {strides = array<i32>} : memref<1x128x256xf32, #tpu.memory_space<vmem>>, vector<1x128x256xf32>,
    %cst_11 = arith.constant dense<0.000000e+00> : vector<128x128xf32>
    %14 = tpu.matmul %1, %4, %cst_11 {dimension_numbers = #tpu.dot_dimension_numbers<[1], [0], [0], [1], [0, 0, 1, 1], [], []>} : vector<128x128xbf16>, vector<128x128xbf16>, vector<128x128xf32> -> vector<128x128xf32>
    %c0_12 = arith.constant 0 : index
    %c0_13 = arith.constant 0 : index
    %c0_14 = arith.constant 0 : index
    %15 = vector.load %arg6[%c0_12, %c0_13, %c0_14] : memref<1x128x256xf32, #tpu.memory_space<vmem>>, vector<1x128x256xf32>
    %16 = vector.shape_cast %15 : vector<1x128x256xf32> to vector<128x256xf32>
    %c1 = arith.constant 1 : index
    %17 = memref.load %arg1[%c1] : memref<11xf32, #tpu.memory_space<smem>>
    %18 = vector.broadcast %17 : f32 to vector<128x128xf32>
    %19 = arith.mulf %18, %14 : vector<128x128xf32>
    %20 = arith.truncf %19 : vector<128x128xf32> to vector<128x128xbf16>
    %cst_15 = arith.constant dense<0.000000e+00> : vector<128x256xf32>
    %21 = tpu.matmul %20, %2, %cst_15 {dimension_numbers = #tpu.dot_dimension_numbers<[1], [0], [0], [1], [0, 0, 1, 1], [], []>} : vector<128x128xbf16>, vector<128x256xbf16>, vector<128x256xf32> -> vector<128x256xf32>
    %22 = arith.addf %16, %21 : vector<128x256xf32>
    %c0_16 = arith.constant 0 : index
    %c0_17 = arith.constant 0 : index
    %c0_18 = arith.constant 0 : index
    %23 = vector.load %arg6[%c0_16, %c0_17, %c0_18] : memref<1x128x256xf32, #tpu.memory_space<vmem>>, vector<1x128x256xf32>
    %24 = vector.shape_cast %23 : vector<1x128x256xf32> to vector<128x256xf32>
    %25 = vector.shape_cast %22 : vector<128x256xf32> to vector<1x128x256xf32>
    tpu.vector_store %arg6[%c0_16, %c0_17, %c0_18], %25 {strides = array<i32>} : memref<1x128x256xf32, #tpu.memory_space<vmem>>, vector<1x128x256xf32>,
    %cst_19 = arith.constant 2.000000e+00 : f32
    %26 = vector.broadcast %cst_19 : f32 to vector<128x128xf32>
    %27 = arith.mulf %26, %14 : vector<128x128xf32>
    %28 = arith.truncf %27 : vector<128x128xf32> to vector<128x128xbf16>
    %cst_20 = arith.constant dense<0.000000e+00> : vector<128x128xf32>
    %29 = tpu.matmul %1, %28, %cst_20 {dimension_numbers = #tpu.dot_dimension_numbers<[1], [0], [0], [1], [0, 0, 1, 1], [], []>} : vector<128x128xbf16>, vector<128x128xbf16>, vector<128x128xf32> -> vector<128x128xf32>
    %30 = arith.subf %29, %5 : vector<128x128xf32>
    %c0_21 = arith.constant 0 : index
    %c0_22 = arith.constant 0 : index
    %c0_23 = arith.constant 0 : index
    %31 = vector.load %arg6[%c0_21, %c0_22, %c0_23] : memref<1x128x256xf32, #tpu.memory_space<vmem>>, vector<1x128x256xf32>
    %32 = vector.shape_cast %31 : vector<1x128x256xf32> to vector<128x256xf32>
    %c2 = arith.constant 2 : index
    %33 = memref.load %arg1[%c2] : memref<11xf32, #tpu.memory_space<smem>>
    %34 = vector.broadcast %33 : f32 to vector<128x128xf32>
    %35 = arith.mulf %34, %30 : vector<128x128xf32>
    %36 = arith.truncf %35 : vector<128x128xf32> to vector<128x128xbf16>
    %cst_24 = arith.constant dense<0.000000e+00> : vector<128x256xf32>
    %37 = tpu.matmul %36, %2, %cst_24 {dimension_numbers = #tpu.dot_dimension_numbers<[1], [0], [0], [1], [0, 0, 1, 1], [], []>} : vector<128x128xbf16>, vector<128x256xbf16>, vector<128x256xf32> -> vector<128x256xf32>
    %38 = arith.addf %32, %37 : vector<128x256xf32>
    %c0_25 = arith.constant 0 : index
    %c0_26 = arith.constant 0 : index
    %c0_27 = arith.constant 0 : index
    %39 = vector.load %arg6[%c0_25, %c0_26, %c0_27] : memref<1x128x256xf32, #tpu.memory_space<vmem>>, vector<1x128x256xf32>
    %40 = vector.shape_cast %39 : vector<1x128x256xf32> to vector<128x256xf32>
    %41 = vector.shape_cast %38 : vector<128x256xf32> to vector<1x128x256xf32>
    tpu.vector_store %arg6[%c0_25, %c0_26, %c0_27], %41 {strides = array<i32>} : memref<1x128x256xf32, #tpu.memory_space<vmem>>, vector<1x128x256xf32>,
    %cst_28 = arith.constant 2.000000e+00 : f32
    %42 = vector.broadcast %cst_28 : f32 to vector<128x128xf32>
    %43 = arith.mulf %42, %30 : vector<128x128xf32>
    %44 = arith.truncf %43 : vector<128x128xf32> to vector<128x128xbf16>
    %cst_29 = arith.constant dense<0.000000e+00> : vector<128x128xf32>
    %45 = tpu.matmul %1, %44, %cst_29 {dimension_numbers = #tpu.dot_dimension_numbers<[1], [0], [0], [1], [0, 0, 1, 1], [], []>} : vector<128x128xbf16>, vector<128x128xbf16>, vector<128x128xf32> -> vector<128x128xf32>
    %46 = arith.subf %45, %14 : vector<128x128xf32>
    %c0_30 = arith.constant 0 : index
    %c0_31 = arith.constant 0 : index
    %c0_32 = arith.constant 0 : index
    %47 = vector.load %arg6[%c0_30, %c0_31, %c0_32] : memref<1x128x256xf32, #tpu.memory_space<vmem>>, vector<1x128x256xf32>
    %48 = vector.shape_cast %47 : vector<1x128x256xf32> to vector<128x256xf32>
    %c3 = arith.constant 3 : index
    %49 = memref.load %arg1[%c3] : memref<11xf32, #tpu.memory_space<smem>>
    %50 = vector.broadcast %49 : f32 to vector<128x128xf32>
    %51 = arith.mulf %50, %46 : vector<128x128xf32>
    %52 = arith.truncf %51 : vector<128x128xf32> to vector<128x128xbf16>
    %cst_33 = arith.constant dense<0.000000e+00> : vector<128x256xf32>
    %53 = tpu.matmul %52, %2, %cst_33 {dimension_numbers = #tpu.dot_dimension_numbers<[1], [0], [0], [1], [0, 0, 1, 1], [], []>} : vector<128x128xbf16>, vector<128x256xbf16>, vector<128x256xf32> -> vector<128x256xf32>
    %54 = arith.addf %48, %53 : vector<128x256xf32>
    %c0_34 = arith.constant 0 : index
    %c0_35 = arith.constant 0 : index
    %c0_36 = arith.constant 0 : index
    %55 = vector.load %arg6[%c0_34, %c0_35, %c0_36] : memref<1x128x256xf32, #tpu.memory_space<vmem>>, vector<1x128x256xf32>
    %56 = vector.shape_cast %55 : vector<1x128x256xf32> to vector<128x256xf32>
    %57 = vector.shape_cast %54 : vector<128x256xf32> to vector<1x128x256xf32>
    tpu.vector_store %arg6[%c0_34, %c0_35, %c0_36], %57 {strides = array<i32>} : memref<1x128x256xf32, #tpu.memory_space<vmem>>, vector<1x128x256xf32>,
    %cst_37 = arith.constant 2.000000e+00 : f32
    %58 = vector.broadcast %cst_37 : f32 to vector<128x128xf32>
    %59 = arith.mulf %58, %46 : vector<128x128xf32>
    %60 = arith.truncf %59 : vector<128x128xf32> to vector<128x128xbf16>
    %cst_38 = arith.constant dense<0.000000e+00> : vector<128x128xf32>
    %61 = tpu.matmul %1, %60, %cst_38 {dimension_numbers = #tpu.dot_dimension_numbers<[1], [0], [0], [1], [0, 0, 1, 1], [], []>} : vector<128x128xbf16>, vector<128x128xbf16>, vector<128x128xf32> -> vector<128x128xf32>
    %62 = arith.subf %61, %30 : vector<128x128xf32>
    %c0_39 = arith.constant 0 : index
    %c0_40 = arith.constant 0 : index
    %c0_41 = arith.constant 0 : index
    %63 = vector.load %arg6[%c0_39, %c0_40, %c0_41] : memref<1x128x256xf32, #tpu.memory_space<vmem>>, vector<1x128x256xf32>
    %64 = vector.shape_cast %63 : vector<1x128x256xf32> to vector<128x256xf32>
    %c4 = arith.constant 4 : index
    %65 = memref.load %arg1[%c4] : memref<11xf32, #tpu.memory_space<smem>>
    %66 = vector.broadcast %65 : f32 to vector<128x128xf32>
    %67 = arith.mulf %66, %62 : vector<128x128xf32>
    %68 = arith.truncf %67 : vector<128x128xf32> to vector<128x128xbf16>
    %cst_42 = arith.constant dense<0.000000e+00> : vector<128x256xf32>
    %69 = tpu.matmul %68, %2, %cst_42 {dimension_numbers = #tpu.dot_dimension_numbers<[1], [0], [0], [1], [0, 0, 1, 1], [], []>} : vector<128x128xbf16>, vector<128x256xbf16>, vector<128x256xf32> -> vector<128x256xf32>
    %70 = arith.addf %64, %69 : vector<128x256xf32>
    %c0_43 = arith.constant 0 : index
    %c0_44 = arith.constant 0 : index
    %c0_45 = arith.constant 0 : index
    %71 = vector.load %arg6[%c0_43, %c0_44, %c0_45] : memref<1x128x256xf32, #tpu.memory_space<vmem>>, vector<1x128x256xf32>
    %72 = vector.shape_cast %71 : vector<1x128x256xf32> to vector<128x256xf32>
    %73 = vector.shape_cast %70 : vector<128x256xf32> to vector<1x128x256xf32>
    tpu.vector_store %arg6[%c0_43, %c0_44, %c0_45], %73 {strides = array<i32>} : memref<1x128x256xf32, #tpu.memory_space<vmem>>, vector<1x128x256xf32>,
    %cst_46 = arith.constant 2.000000e+00 : f32
    %74 = vector.broadcast %cst_46 : f32 to vector<128x128xf32>
    %75 = arith.mulf %74, %62 : vector<128x128xf32>
    %76 = arith.truncf %75 : vector<128x128xf32> to vector<128x128xbf16>
    %cst_47 = arith.constant dense<0.000000e+00> : vector<128x128xf32>
    %77 = tpu.matmul %1, %76, %cst_47 {dimension_numbers = #tpu.dot_dimension_numbers<[1], [0], [0], [1], [0, 0, 1, 1], [], []>} : vector<128x128xbf16>, vector<128x128xbf16>, vector<128x128xf32> -> vector<128x128xf32>
    %78 = arith.subf %77, %46 : vector<128x128xf32>
    %c0_48 = arith.constant 0 : index
    %c0_49 = arith.constant 0 : index
    %c0_50 = arith.constant 0 : index
    %79 = vector.load %arg6[%c0_48, %c0_49, %c0_50] : memref<1x128x256xf32, #tpu.memory_space<vmem>>, vector<1x128x256xf32>
    %80 = vector.shape_cast %79 : vector<1x128x256xf32> to vector<128x256xf32>
    %c5 = arith.constant 5 : index
    %81 = memref.load %arg1[%c5] : memref<11xf32, #tpu.memory_space<smem>>
    %82 = vector.broadcast %81 : f32 to vector<128x128xf32>
    %83 = arith.mulf %82, %78 : vector<128x128xf32>
    %84 = arith.truncf %83 : vector<128x128xf32> to vector<128x128xbf16>
    %cst_51 = arith.constant dense<0.000000e+00> : vector<128x256xf32>
    %85 = tpu.matmul %84, %2, %cst_51 {dimension_numbers = #tpu.dot_dimension_numbers<[1], [0], [0], [1], [0, 0, 1, 1], [], []>} : vector<128x128xbf16>, vector<128x256xbf16>, vector<128x256xf32> -> vector<128x256xf32>
    %86 = arith.addf %80, %85 : vector<128x256xf32>
    %c0_52 = arith.constant 0 : index
    %c0_53 = arith.constant 0 : index
    %c0_54 = arith.constant 0 : index
    %87 = vector.load %arg6[%c0_52, %c0_53, %c0_54] : memref<1x128x256xf32, #tpu.memory_space<vmem>>, vector<1x128x256xf32>
    %88 = vector.shape_cast %87 : vector<1x128x256xf32> to vector<128x256xf32>
    %89 = vector.shape_cast %86 : vector<128x256xf32> to vector<1x128x256xf32>
    tpu.vector_store %arg6[%c0_52, %c0_53, %c0_54], %89 {strides = array<i32>} : memref<1x128x256xf32, #tpu.memory_space<vmem>>, vector<1x128x256xf32>,
    %cst_55 = arith.constant 2.000000e+00 : f32
    %90 = vector.broadcast %cst_55 : f32 to vector<128x128xf32>
    %91 = arith.mulf %90, %78 : vector<128x128xf32>
    %92 = arith.truncf %91 : vector<128x128xf32> to vector<128x128xbf16>
    %cst_56 = arith.constant dense<0.000000e+00> : vector<128x128xf32>
    %93 = tpu.matmul %1, %92, %cst_56 {dimension_numbers = #tpu.dot_dimension_numbers<[1], [0], [0], [1], [0, 0, 1, 1], [], []>} : vector<128x128xbf16>, vector<128x128xbf16>, vector<128x128xf32> -> vector<128x128xf32>
    %94 = arith.subf %93, %62 : vector<128x128xf32>
    %c0_57 = arith.constant 0 : index
    %c0_58 = arith.constant 0 : index
    %c0_59 = arith.constant 0 : index
    %95 = vector.load %arg6[%c0_57, %c0_58, %c0_59] : memref<1x128x256xf32, #tpu.memory_space<vmem>>, vector<1x128x256xf32>
    %96 = vector.shape_cast %95 : vector<1x128x256xf32> to vector<128x256xf32>
    %c6 = arith.constant 6 : index
    %97 = memref.load %arg1[%c6] : memref<11xf32, #tpu.memory_space<smem>>
    %98 = vector.broadcast %97 : f32 to vector<128x128xf32>
    %99 = arith.mulf %98, %94 : vector<128x128xf32>
    %100 = arith.truncf %99 : vector<128x128xf32> to vector<128x128xbf16>
    %cst_60 = arith.constant dense<0.000000e+00> : vector<128x256xf32>
    %101 = tpu.matmul %100, %2, %cst_60 {dimension_numbers = #tpu.dot_dimension_numbers<[1], [0], [0], [1], [0, 0, 1, 1], [], []>} : vector<128x128xbf16>, vector<128x256xbf16>, vector<128x256xf32> -> vector<128x256xf32>
    %102 = arith.addf %96, %101 : vector<128x256xf32>
    %c0_61 = arith.constant 0 : index
    %c0_62 = arith.constant 0 : index
    %c0_63 = arith.constant 0 : index
    %103 = vector.load %arg6[%c0_61, %c0_62, %c0_63] : memref<1x128x256xf32, #tpu.memory_space<vmem>>, vector<1x128x256xf32>
    %104 = vector.shape_cast %103 : vector<1x128x256xf32> to vector<128x256xf32>
    %105 = vector.shape_cast %102 : vector<128x256xf32> to vector<1x128x256xf32>
    tpu.vector_store %arg6[%c0_61, %c0_62, %c0_63], %105 {strides = array<i32>} : memref<1x128x256xf32, #tpu.memory_space<vmem>>, vector<1x128x256xf32>,
    %cst_64 = arith.constant 2.000000e+00 : f32
    %106 = vector.broadcast %cst_64 : f32 to vector<128x128xf32>
    %107 = arith.mulf %106, %94 : vector<128x128xf32>
    %108 = arith.truncf %107 : vector<128x128xf32> to vector<128x128xbf16>
    %cst_65 = arith.constant dense<0.000000e+00> : vector<128x128xf32>
    %109 = tpu.matmul %1, %108, %cst_65 {dimension_numbers = #tpu.dot_dimension_numbers<[1], [0], [0], [1], [0, 0, 1, 1], [], []>} : vector<128x128xbf16>, vector<128x128xbf16>, vector<128x128xf32> -> vector<128x128xf32>
    %110 = arith.subf %109, %78 : vector<128x128xf32>
    %c0_66 = arith.constant 0 : index
    %c0_67 = arith.constant 0 : index
    %c0_68 = arith.constant 0 : index
    %111 = vector.load %arg6[%c0_66, %c0_67, %c0_68] : memref<1x128x256xf32, #tpu.memory_space<vmem>>, vector<1x128x256xf32>
    %112 = vector.shape_cast %111 : vector<1x128x256xf32> to vector<128x256xf32>
    %c7 = arith.constant 7 : index
    %113 = memref.load %arg1[%c7] : memref<11xf32, #tpu.memory_space<smem>>
    %114 = vector.broadcast %113 : f32 to vector<128x128xf32>
    %115 = arith.mulf %114, %110 : vector<128x128xf32>
    %116 = arith.truncf %115 : vector<128x128xf32> to vector<128x128xbf16>
    %cst_69 = arith.constant dense<0.000000e+00> : vector<128x256xf32>
    %117 = tpu.matmul %116, %2, %cst_69 {dimension_numbers = #tpu.dot_dimension_numbers<[1], [0], [0], [1], [0, 0, 1, 1], [], []>} : vector<128x128xbf16>, vector<128x256xbf16>, vector<128x256xf32> -> vector<128x256xf32>
    %118 = arith.addf %112, %117 : vector<128x256xf32>
    %c0_70 = arith.constant 0 : index
    %c0_71 = arith.constant 0 : index
    %c0_72 = arith.constant 0 : index
    %119 = vector.load %arg6[%c0_70, %c0_71, %c0_72] : memref<1x128x256xf32, #tpu.memory_space<vmem>>, vector<1x128x256xf32>
    %120 = vector.shape_cast %119 : vector<1x128x256xf32> to vector<128x256xf32>
    %121 = vector.shape_cast %118 : vector<128x256xf32> to vector<1x128x256xf32>
    tpu.vector_store %arg6[%c0_70, %c0_71, %c0_72], %121 {strides = array<i32>} : memref<1x128x256xf32, #tpu.memory_space<vmem>>, vector<1x128x256xf32>,
    %cst_73 = arith.constant 2.000000e+00 : f32
    %122 = vector.broadcast %cst_73 : f32 to vector<128x128xf32>
    %123 = arith.mulf %122, %110 : vector<128x128xf32>
    %124 = arith.truncf %123 : vector<128x128xf32> to vector<128x128xbf16>
    %cst_74 = arith.constant dense<0.000000e+00> : vector<128x128xf32>
    %125 = tpu.matmul %1, %124, %cst_74 {dimension_numbers = #tpu.dot_dimension_numbers<[1], [0], [0], [1], [0, 0, 1, 1], [], []>} : vector<128x128xbf16>, vector<128x128xbf16>, vector<128x128xf32> -> vector<128x128xf32>
    %126 = arith.subf %125, %94 : vector<128x128xf32>
    %c0_75 = arith.constant 0 : index
    %c0_76 = arith.constant 0 : index
    %c0_77 = arith.constant 0 : index
    %127 = vector.load %arg6[%c0_75, %c0_76, %c0_77] : memref<1x128x256xf32, #tpu.memory_space<vmem>>, vector<1x128x256xf32>
    %128 = vector.shape_cast %127 : vector<1x128x256xf32> to vector<128x256xf32>
    %c8 = arith.constant 8 : index
    %129 = memref.load %arg1[%c8] : memref<11xf32, #tpu.memory_space<smem>>
    %130 = vector.broadcast %129 : f32 to vector<128x128xf32>
    %131 = arith.mulf %130, %126 : vector<128x128xf32>
    %132 = arith.truncf %131 : vector<128x128xf32> to vector<128x128xbf16>
    %cst_78 = arith.constant dense<0.000000e+00> : vector<128x256xf32>
    %133 = tpu.matmul %132, %2, %cst_78 {dimension_numbers = #tpu.dot_dimension_numbers<[1], [0], [0], [1], [0, 0, 1, 1], [], []>} : vector<128x128xbf16>, vector<128x256xbf16>, vector<128x256xf32> -> vector<128x256xf32>
    %134 = arith.addf %128, %133 : vector<128x256xf32>
    %c0_79 = arith.constant 0 : index
    %c0_80 = arith.constant 0 : index
    %c0_81 = arith.constant 0 : index
    %135 = vector.load %arg6[%c0_79, %c0_80, %c0_81] : memref<1x128x256xf32, #tpu.memory_space<vmem>>, vector<1x128x256xf32>
    %136 = vector.shape_cast %135 : vector<1x128x256xf32> to vector<128x256xf32>
    %137 = vector.shape_cast %134 : vector<128x256xf32> to vector<1x128x256xf32>
    tpu.vector_store %arg6[%c0_79, %c0_80, %c0_81], %137 {strides = array<i32>} : memref<1x128x256xf32, #tpu.memory_space<vmem>>, vector<1x128x256xf32>,
    %cst_82 = arith.constant 2.000000e+00 : f32
    %138 = vector.broadcast %cst_82 : f32 to vector<128x128xf32>
    %139 = arith.mulf %138, %126 : vector<128x128xf32>
    %140 = arith.truncf %139 : vector<128x128xf32> to vector<128x128xbf16>
    %cst_83 = arith.constant dense<0.000000e+00> : vector<128x128xf32>
    %141 = tpu.matmul %1, %140, %cst_83 {dimension_numbers = #tpu.dot_dimension_numbers<[1], [0], [0], [1], [0, 0, 1, 1], [], []>} : vector<128x128xbf16>, vector<128x128xbf16>, vector<128x128xf32> -> vector<128x128xf32>
    %142 = arith.subf %141, %110 : vector<128x128xf32>
    %c0_84 = arith.constant 0 : index
    %c0_85 = arith.constant 0 : index
    %c0_86 = arith.constant 0 : index
    %143 = vector.load %arg6[%c0_84, %c0_85, %c0_86] : memref<1x128x256xf32, #tpu.memory_space<vmem>>, vector<1x128x256xf32>
    %144 = vector.shape_cast %143 : vector<1x128x256xf32> to vector<128x256xf32>
    %c9 = arith.constant 9 : index
    %145 = memref.load %arg1[%c9] : memref<11xf32, #tpu.memory_space<smem>>
    %146 = vector.broadcast %145 : f32 to vector<128x128xf32>
    %147 = arith.mulf %146, %142 : vector<128x128xf32>
    %148 = arith.truncf %147 : vector<128x128xf32> to vector<128x128xbf16>
    %cst_87 = arith.constant dense<0.000000e+00> : vector<128x256xf32>
    %149 = tpu.matmul %148, %2, %cst_87 {dimension_numbers = #tpu.dot_dimension_numbers<[1], [0], [0], [1], [0, 0, 1, 1], [], []>} : vector<128x128xbf16>, vector<128x256xbf16>, vector<128x256xf32> -> vector<128x256xf32>
    %150 = arith.addf %144, %149 : vector<128x256xf32>
    %c0_88 = arith.constant 0 : index
    %c0_89 = arith.constant 0 : index
    %c0_90 = arith.constant 0 : index
    %151 = vector.load %arg6[%c0_88, %c0_89, %c0_90] : memref<1x128x256xf32, #tpu.memory_space<vmem>>, vector<1x128x256xf32>
    %152 = vector.shape_cast %151 : vector<1x128x256xf32> to vector<128x256xf32>
    %153 = vector.shape_cast %150 : vector<128x256xf32> to vector<1x128x256xf32>
    tpu.vector_store %arg6[%c0_88, %c0_89, %c0_90], %153 {strides = array<i32>} : memref<1x128x256xf32, #tpu.memory_space<vmem>>, vector<1x128x256xf32>,
    %cst_91 = arith.constant 2.000000e+00 : f32
    %154 = vector.broadcast %cst_91 : f32 to vector<128x128xf32>
    %155 = arith.mulf %154, %142 : vector<128x128xf32>
    %156 = arith.truncf %155 : vector<128x128xf32> to vector<128x128xbf16>
    %cst_92 = arith.constant dense<0.000000e+00> : vector<128x128xf32>
    %157 = tpu.matmul %1, %156, %cst_92 {dimension_numbers = #tpu.dot_dimension_numbers<[1], [0], [0], [1], [0, 0, 1, 1], [], []>} : vector<128x128xbf16>, vector<128x128xbf16>, vector<128x128xf32> -> vector<128x128xf32>
    %158 = arith.subf %157, %126 : vector<128x128xf32>
    %c0_93 = arith.constant 0 : index
    %c0_94 = arith.constant 0 : index
    %c0_95 = arith.constant 0 : index
    %159 = vector.load %arg6[%c0_93, %c0_94, %c0_95] : memref<1x128x256xf32, #tpu.memory_space<vmem>>, vector<1x128x256xf32>
    %160 = vector.shape_cast %159 : vector<1x128x256xf32> to vector<128x256xf32>
    %c10 = arith.constant 10 : index
    %161 = memref.load %arg1[%c10] : memref<11xf32, #tpu.memory_space<smem>>
    %162 = vector.broadcast %161 : f32 to vector<128x128xf32>
    %163 = arith.mulf %162, %158 : vector<128x128xf32>
    %164 = arith.truncf %163 : vector<128x128xf32> to vector<128x128xbf16>
    %cst_96 = arith.constant dense<0.000000e+00> : vector<128x256xf32>
    %165 = tpu.matmul %164, %2, %cst_96 {dimension_numbers = #tpu.dot_dimension_numbers<[1], [0], [0], [1], [0, 0, 1, 1], [], []>} : vector<128x128xbf16>, vector<128x256xbf16>, vector<128x256xf32> -> vector<128x256xf32>
    %166 = arith.addf %160, %165 : vector<128x256xf32>
    %c0_97 = arith.constant 0 : index
    %c0_98 = arith.constant 0 : index
    %c0_99 = arith.constant 0 : index
    %167 = vector.load %arg6[%c0_97, %c0_98, %c0_99] : memref<1x128x256xf32, #tpu.memory_space<vmem>>, vector<1x128x256xf32>
    %168 = vector.shape_cast %167 : vector<1x128x256xf32> to vector<128x256xf32>
    %169 = vector.shape_cast %166 : vector<128x256xf32> to vector<1x128x256xf32>
    tpu.vector_store %arg6[%c0_97, %c0_98, %c0_99], %169 {strides = array<i32>} : memref<1x128x256xf32, #tpu.memory_space<vmem>>, vector<1x128x256xf32>,
    %c0_100 = arith.constant 0 : index
    %c0_101 = arith.constant 0 : index
    %c0_102 = arith.constant 0 : index
    %170 = vector.load %arg6[%c0_100, %c0_101, %c0_102] : memref<1x128x256xf32, #tpu.memory_space<vmem>>, vector<1x128x256xf32>
    %171 = vector.shape_cast %170 : vector<1x128x256xf32> to vector<128x256xf32>
    %c0_103 = arith.constant 0 : index
    %c0_104 = arith.constant 0 : index
    %172 = vector.load %arg5[%c0_103, %c0_104] : memref<1x256xf32, #tpu.memory_space<vmem>>, vector<1x256xf32>
    %173 = vector.broadcast %172 : vector<1x256xf32> to vector<128x256xf32>
    %174 = arith.addf %171, %173 : vector<128x256xf32>
    %cst_105 = arith.constant 0.000000e+00 : f32
    %175 = vector.broadcast %cst_105 : f32 to vector<128x256xf32>
    %176 = arith.maximumf %174, %175 : vector<128x256xf32>
    %c0_106 = arith.constant 0 : index
    %c0_107 = arith.constant 0 : index
    %c0_108 = arith.constant 0 : index
    %177 = vector.load %arg6[%c0_106, %c0_107, %c0_108] : memref<1x128x256xf32, #tpu.memory_space<vmem>>, vector<1x128x256xf32>
    %178 = vector.shape_cast %177 : vector<1x128x256xf32> to vector<128x256xf32>
    %179 = vector.shape_cast %176 : vector<128x256xf32> to vector<1x128x256xf32>
    tpu.vector_store %arg6[%c0_106, %c0_107, %c0_108], %179 {strides = array<i32>} : memref<1x128x256xf32, #tpu.memory_space<vmem>>, vector<1x128x256xf32>,
    return
  }
  func.func @transform_0(%arg0: i32) -> i32 {
    %c0_i32 = arith.constant 0 : i32
    %c0_i32_0 = arith.constant 0 : i32
    return %c0_i32 : i32
  }
  func.func @transform_1(%arg0: i32) -> (i32, i32, i32) {
    %c0_i32 = arith.constant 0 : i32
    %c0_i32_0 = arith.constant 0 : i32
    %c0_i32_1 = arith.constant 0 : i32
    return %arg0, %c0_i32, %c0_i32_0 : i32, i32, i32
  }
  func.func @transform_2(%arg0: i32) -> (i32, i32, i32) {
    %c0_i32 = arith.constant 0 : i32
    %c0_i32_0 = arith.constant 0 : i32
    %c0_i32_1 = arith.constant 0 : i32
    return %arg0, %c0_i32, %c0_i32_0 : i32, i32, i32
  }
  func.func @transform_3(%arg0: i32) -> (i32, i32) {
    %c0_i32 = arith.constant 0 : i32
    %c0_i32_0 = arith.constant 0 : i32
    %c0_i32_1 = arith.constant 0 : i32
    return %c0_i32, %c0_i32_0 : i32, i32
  }
  func.func @transform_4(%arg0: i32) -> (i32, i32) {
    %c0_i32 = arith.constant 0 : i32
    %c0_i32_0 = arith.constant 0 : i32
    %c0_i32_1 = arith.constant 0 : i32
    return %c0_i32, %c0_i32_0 : i32, i32
  }
  func.func @transform_5(%arg0: i32) -> (i32, i32, i32) {
    %c0_i32 = arith.constant 0 : i32
    %c0_i32_0 = arith.constant 0 : i32
    %c0_i32_1 = arith.constant 0 : i32
    return %arg0, %c0_i32, %c0_i32_0 : i32, i32, i32
  }
}

</mosaic_0001>

<llo_original>
// kernel: tpu_custom_call.1
$region0: #{tpu_custom_call.1}
  #allocation0 [shape = 'u32[]', space=smem, size = 0x4, offset = 0x4, fixed_abs, tag = 'smem constant byte address 0x4 - core index']
  #allocation1 [shape = 'u32[144,128]{1,0:T(1,128)}', space=vmem, size = 0x12000, scoped, tag = 'internal scratch']
  %s0 = inlined_call_operand.hbm [shape: f32[11], index: 0, kind: input, shape index: {}]
  %s1 = inlined_call_operand.hbm [shape: bf16[8,128,128], index: 1, kind: input, shape index: {}]
  %s2 = inlined_call_operand.hbm [shape: bf16[8,128,128], index: 2, kind: input, shape index: {}]
  %s3 = inlined_call_operand.hbm [shape: bf16[128,256], index: 3, kind: input, shape index: {}]
  %s4 = inlined_call_operand.vmem [shape: f32[1,256], index: 4, kind: input, shape index: {}]
  %s5 = inlined_call_operand.hbm [shape: f32[8,128,256], index: 5, kind: output, shape index: {}]
  %s6 = sld [smem:[#allocation0]]
  $region69: #{tpu_custom_call.1} parent=0
    _
  %s8 = ssub.s32 1, %s6
  %s9 = scalar_select 0, %s8, %s6
  $region1: #{tpu_custom_call.1} parent=0
    #allocation2 [shape = 'u8[512]{0}', space=smem, size = 0x200, scoped, tag = 'input window, operand 0, single buffered']
    #allocation3 [shape = 's32[2]{0}', space=sflag, size = 0x8, scoped, tag = 'scoped memory for tpu_custom_call.1']
    #allocation4 [shape = 's32[2]{0}', space=sflag, size = 0x8, scoped, tag = 'scoped memory for tpu_custom_call.1']
    #allocation5 [shape = 's32[2]{0}', space=sflag, size = 0x8, scoped, tag = 'scoped memory for tpu_custom_call.1']
    #allocation6 [shape = 'u8[65536]{0}', space=vmem, size = 0x10000, scoped, tag = 'input window, operand 1']
    #allocation7 [shape = 'u8[65536]{0}', space=vmem, size = 0x10000, scoped, tag = 'input window, operand 2']
    #allocation8 [shape = 's32[2]{0}', space=sflag, size = 0x8, scoped, tag = 'scoped memory for tpu_custom_call.1']
    #allocation9 [shape = 'u8[65536]{0}', space=vmem, size = 0x10000, scoped, tag = 'input window, operand 3, single buffered']
    #allocation10 [shape = 'u8[262144]{0}', space=vmem, size = 0x40000, scoped, tag = 'output window, operand 0']
    %10 = vsyncpa [#allocation5], 0
    %11 = vsyncpa [#allocation3], 0
    %s12 = scalar_lea.sflag [#allocation3], 1
    %13 = vsyncpa %s12, 0
    %14 = vsyncpa [#allocation8], 0
    %s15 = scalar_lea.sflag [#allocation8], 1
    %16 = vsyncpa %s15, 0
    %17 = vsyncpa [#allocation4], 0
    %s18 = scalar_lea.sflag [#allocation4], 1
    %19 = vsyncpa %s18, 0
    loop: start=0, step=1, limit=10
    $region2: #{tpu_custom_call.1} parent=1 // loop_pre_header
      _
    $region3: #{tpu_custom_call.1} parent=1 // loop_header
      %s21 = sphi 0, %s25
      %p22 = scmp.ge.s32.totalorder %s21, 10
      %s29 = sphi 0, %s29
      %s31 = sphi 0, %s29
      %s32 = sphi 0, %s31
      %s46 = sphi 0, %s32
      %s52 = sphi 0, %s54
      %s55 = sphi 0, %s52
      %s56 = sphi 0, %s55
      %s72 = sphi 0, %s56
      %s78 = sphi 0, %s80
      %s81 = sphi 0, %s78
      %s82 = sphi 0, %s81
      %s98 = sphi 0, %s82
      %s102 = sphi 0, %s102
      %s104 = sphi 0, %s102
      %s105 = sphi 0, %s104
      %s119 = sphi 0, %s105
      %s123 = sphi 0, %s123
      %s125 = sphi 0, %s123
      %s126 = sphi 0, %s125
      %s140 = sphi 0, %s126
      %s146 = sphi 0, %s148
      %s149 = sphi 0, %s146
      %s150 = sphi 0, %s149
      %s166 = sphi 0, %s150
    $region4: #{tpu_custom_call.1} parent=1 // loop_header_branch
      %24 = sbr.rel (%p22) target = $region8
    $region5: #{tpu_custom_call.1} parent=1 // loop_body
      %s26 = ssub.s32 %s21, 1
      %s27 = ssub.s32 %s21, 2
      %s28 = sadd.s32 %s21, 1
      %s30 = sadd.s32 %s29, 1
      %p33 = scmp.eq.s32.totalorder %s21, 7
      %p34 = scmp.ne.s32.totalorder %s29, %s31
      %p35 = scmp.eq.s32.totalorder %s21, 0
      %p36 = por %p34, %p35
      %p37 = scmp.ne.s32.totalorder %s29, %s31
      %p38 = scmp.eq.s32.totalorder %s26, 7
      %p39 = por %p37, %p38
      %p40 = scmp.ne.s32.totalorder %s31, %s32
      %p41 = scmp.eq.s32.totalorder %s26, 0
      %p42 = por %p40, %p41
      %p43 = scmp.ne.s32.totalorder %s31, %s32
      %p44 = scmp.eq.s32.totalorder %s27, 7
      %p45 = por %p43, %p44
      %p47 = scmp.ne.s32.totalorder %s32, %s46
      %p48 = scmp.eq.s32.totalorder %s27, 0
      %p49 = por %p47, %p48
      %s50 = ssub.s32 %s21, %s28
      %p51 = scmp.eq.s32.totalorder %s50, 0
      %s53 = sadd.s32 %s52, 1
      %s54 = scalar_select %p51, %s52, %s53
      %p57 = pneg %p51
      %p58 = scmp.eq.s32.totalorder %s21, 7
      %p59 = por %p57, %p58
      %p60 = scmp.ne.s32.totalorder %s52, %s55
      %p61 = scmp.eq.s32.totalorder %s21, 0
      %p62 = por %p60, %p61
      %p63 = scmp.ne.s32.totalorder %s52, %s55
      %p64 = scmp.eq.s32.totalorder %s26, 7
      %p65 = por %p63, %p64
      %p66 = scmp.ne.s32.totalorder %s55, %s56
      %p67 = scmp.eq.s32.totalorder %s26, 0
      %p68 = por %p66, %p67
      %p69 = scmp.ne.s32.totalorder %s55, %s56
      %p70 = scmp.eq.s32.totalorder %s27, 7
      %p71 = por %p69, %p70
      %p73 = scmp.ne.s32.totalorder %s56, %s72
      %p74 = scmp.eq.s32.totalorder %s27, 0
      %p75 = por %p73, %p74
      %s76 = ssub.s32 %s21, %s28
      %p77 = scmp.eq.s32.totalorder %s76, 0
      %s79 = sadd.s32 %s78, 1
      %s80 = scalar_select %p77, %s78, %s79
      %p83 = pneg %p77
      %p84 = scmp.eq.s32.totalorder %s21, 7
      %p85 = por %p83, %p84
      %p86 = scmp.ne.s32.totalorder %s78, %s81
      %p87 = scmp.eq.s32.totalorder %s21, 0
      %p88 = por %p86, %p87
      %p89 = scmp.ne.s32.totalorder %s78, %s81
      %p90 = scmp.eq.s32.totalorder %s26, 7
      %p91 = por %p89, %p90
      %p92 = scmp.ne.s32.totalorder %s81, %s82
      %p93 = scmp.eq.s32.totalorder %s26, 0
      %p94 = por %p92, %p93
      %p95 = scmp.ne.s32.totalorder %s81, %s82
      %p96 = scmp.eq.s32.totalorder %s27, 7
      %p97 = por %p95, %p96
      %p99 = scmp.ne.s32.totalorder %s82, %s98
      %p100 = scmp.eq.s32.totalorder %s27, 0
      %p101 = por %p99, %p100
      %s103 = sadd.s32 %s102, 1
      %p106 = scmp.eq.s32.totalorder %s21, 7
      %p107 = scmp.ne.s32.totalorder %s102, %s104
      %p108 = scmp.eq.s32.totalorder %s21, 0
      %p109 = por %p107, %p108
      %p110 = scmp.ne.s32.totalorder %s102, %s104
      %p111 = scmp.eq.s32.totalorder %s26, 7
      %p112 = por %p110, %p111
      %p113 = scmp.ne.s32.totalorder %s104, %s105
      %p114 = scmp.eq.s32.totalorder %s26, 0
      %p115 = por %p113, %p114
      %p116 = scmp.ne.s32.totalorder %s104, %s105
      %p117 = scmp.eq.s32.totalorder %s27, 7
      %p118 = por %p116, %p117
      %p120 = scmp.ne.s32.totalorder %s105, %s119
      %p121 = scmp.eq.s32.totalorder %s27, 0
      %p122 = por %p120, %p121
      %s124 = sadd.s32 %s123, 1
      %p127 = scmp.eq.s32.totalorder %s21, 7
      %p128 = scmp.ne.s32.totalorder %s123, %s125
      %p129 = scmp.eq.s32.totalorder %s21, 0
      %p130 = por %p128, %p129
      %p131 = scmp.ne.s32.totalorder %s123, %s125
      %p132 = scmp.eq.s32.totalorder %s26, 7
      %p133 = por %p131, %p132
      %p134 = scmp.ne.s32.totalorder %s125, %s126
      %p135 = scmp.eq.s32.totalorder %s26, 0
      %p136 = por %p134, %p135
      %p137 = scmp.ne.s32.totalorder %s125, %s126
      %p138 = scmp.eq.s32.totalorder %s27, 7
      %p139 = por %p137, %p138
      %p141 = scmp.ne.s32.totalorder %s126, %s140
      %p142 = scmp.eq.s32.totalorder %s27, 0
      %p143 = por %p141, %p142
      %s144 = ssub.s32 %s21, %s28
      %p145 = scmp.eq.s32.totalorder %s144, 0
      %s147 = sadd.s32 %s146, 1
      %s148 = scalar_select %p145, %s146, %s147
      %p151 = pneg %p145
      %p152 = scmp.eq.s32.totalorder %s21, 7
      %p153 = por %p151, %p152
      %p154 = scmp.ne.s32.totalorder %s146, %s149
      %p155 = scmp.eq.s32.totalorder %s21, 0
      %p156 = por %p154, %p155
      %p157 = scmp.ne.s32.totalorder %s146, %s149
      %p158 = scmp.eq.s32.totalorder %s26, 7
      %p159 = por %p157, %p158
      %p160 = scmp.ne.s32.totalorder %s149, %s150
      %p161 = scmp.eq.s32.totalorder %s26, 0
      %p162 = por %p160, %p161
      %p163 = scmp.ne.s32.totalorder %s149, %s150
      %p164 = scmp.eq.s32.totalorder %s27, 7
      %p165 = por %p163, %p164
      %p167 = scmp.ne.s32.totalorder %s150, %s166
      %p168 = scmp.eq.s32.totalorder %s27, 0
      %p169 = por %p167, %p168
      %p170 = scmp.le.s32.totalorder 1, %s21
      %p171 = scmp.lt.s32.totalorder %s21, 9
      %p172 = pnand %p170, %p171
      %p173 = pneg %p172
      // Predicated region
      $region9: #{tpu_custom_call.1} parent=5 // pred_check
        _
      $region10: #{tpu_custom_call.1} parent=5 // pred_check_branch
        %175 = sbr.rel (%p172) target = $region12
      $region11: #{tpu_custom_call.1} parent=5 // pred_region
        %s176 = ssub.s32 %s21, 1
        // Predicated region
        $region13: #{tpu_custom_call.1} parent=11 // pred_check
          %p177 = pneg %p42
        $region14: #{tpu_custom_call.1} parent=11 // pred_check_branch
          %179 = sbr.rel (%p177) target = $region16
        $region15: #{tpu_custom_call.1} parent=11 // pred_region
          %s181 = ssub.s32 16, 16
          %182 = vsyncadd [#allocation5], %s181
          %185 = dma.hbm_to_smem %s0, 16, [#allocation2], [#allocation5]
        $region16: #{tpu_custom_call.1} parent=11 // pred_fallthru
          _
        // Predicated region
        $region17: #{tpu_custom_call.1} parent=11 // pred_check
          %p186 = pneg %p115
        $region18: #{tpu_custom_call.1} parent=11 // pred_check_branch
          %188 = sbr.rel (%p186) target = $region20
        $region19: #{tpu_custom_call.1} parent=11 // pred_region
          %s190 = ssub.s32 2048, 2048
          %191 = vsyncadd [#allocation8], %s190
          %s192 = sshll.u32 [#allocation9], 4
          %s193 = int_to_ptr.vmem [resolvable:$true] %s192
          %198 = dma.hbm_to_vmem [thread:$0]  %s3, 2048, %s193, [#allocation8], 128, 128, 8
        $region20: #{tpu_custom_call.1} parent=11 // pred_fallthru
          _
        // Predicated region
        $region21: #{tpu_custom_call.1} parent=11 // pred_check
          %p199 = pneg %p136
        $region22: #{tpu_custom_call.1} parent=11 // pred_check_branch
          %201 = sbr.rel (%p199) target = $region24
        $region23: #{tpu_custom_call.1} parent=11 // pred_region
          _
        $region24: #{tpu_custom_call.1} parent=11 // pred_fallthru
          _
      $region12: #{tpu_custom_call.1} parent=5 // pred_fallthru
        _
      %p202 = scmp.lt.s32.totalorder %s21, 8
      // Predicated region
      $region25: #{tpu_custom_call.1} parent=5 // pred_check
        %p203 = pneg %p202
      $region26: #{tpu_custom_call.1} parent=5 // pred_check_branch
        %205 = sbr.rel (%p203) target = $region28
      $region27: #{tpu_custom_call.1} parent=5 // pred_region
        // Predicated region
        $region29: #{tpu_custom_call.1} parent=27 // pred_check
          %p206 = pneg %p62
        $region30: #{tpu_custom_call.1} parent=27 // pred_check_branch
          %208 = sbr.rel (%p206) target = $region32
        $region31: #{tpu_custom_call.1} parent=27 // pred_region
          %s209 = sand.u32 %s52, 1
          %s210 = scalar_lea.sflag [#allocation3], %s209
          %s211 = sand.u32 %s52, 1
          %s212 = smul.addr %s211, 64
          %s213 = scalar_lea.vmem [#allocation6], %s212
          %s215 = ssub.s32 1024, 1024
          %216 = vsyncadd %s210, %s215
          %s217 = smul.addr %s21, 16
          %s218 = smul.addr %s217, 64
          %s219 = scalar_lea.hbm %s1, %s218
          %s220 = sshll.u32 %s213, 4
          %s221 = int_to_ptr.vmem [resolvable:$true] %s220
          %226 = dma.hbm_to_vmem [thread:$0]  %s219, 1024, %s221, %s210, 64, 64, 4
        $region32: #{tpu_custom_call.1} parent=27 // pred_fallthru
          _
        // Predicated region
        $region33: #{tpu_custom_call.1} parent=27 // pred_check
          %p227 = pneg %p88
        $region34: #{tpu_custom_call.1} parent=27 // pred_check_branch
          %229 = sbr.rel (%p227) target = $region36
        $region35: #{tpu_custom_call.1} parent=27 // pred_region
          %s230 = sand.u32 %s21, 1
          %s231 = scalar_lea.sflag [#allocation8], %s230
          %s232 = sand.u32 %s78, 1
          %s233 = smul.addr %s232, 64
          %s234 = scalar_lea.vmem [#allocation7], %s233
          %s236 = ssub.s32 1024, 1024
          %237 = vsyncadd %s231, %s236
          %s238 = smul.addr %s21, 16
          %s239 = smul.addr %s238, 64
          %s240 = scalar_lea.hbm %s2, %s239
          %s241 = sshll.u32 %s234, 4
          %s242 = int_to_ptr.vmem [resolvable:$true] %s241
          %247 = dma.hbm_to_vmem [thread:$0]  %s240, 1024, %s242, %s231, 64, 64, 4
        $region36: #{tpu_custom_call.1} parent=27 // pred_fallthru
          _
      $region28: #{tpu_custom_call.1} parent=5 // pred_fallthru
        _
      %p248 = scmp.le.s32.totalorder 1, %s21
      %p249 = scmp.lt.s32.totalorder %s21, 9
      %p250 = pnand %p248, %p249
      %p251 = pneg %p250
      // Predicated region
      $region37: #{tpu_custom_call.1} parent=5 // pred_check
        _
      $region38: #{tpu_custom_call.1} parent=5 // pred_check_branch
        %253 = sbr.rel (%p250) target = $region40
      $region39: #{tpu_custom_call.1} parent=5 // pred_region
        %s254 = ssub.s32 %s21, 1
        // Predicated region
        $region41: #{tpu_custom_call.1} parent=39 // pred_check
          %p255 = pneg %p42
        $region42: #{tpu_custom_call.1} parent=39 // pred_check_branch
          %257 = sbr.rel (%p255) target = $region44
        $region43: #{tpu_custom_call.1} parent=39 // pred_region
          %258 = dma.done [#allocation5], 16
        $region44: #{tpu_custom_call.1} parent=39 // pred_fallthru
          _
        %s259 = sand.u32 %s55, 1
        %s260 = scalar_lea.sflag [#allocation3], %s259
        %s261 = sand.u32 %s55, 1
        %s262 = smul.addr %s261, 64
        %s263 = scalar_lea.vmem [#allocation6], %s262
        // Predicated region
        $region45: #{tpu_custom_call.1} parent=39 // pred_check
          %p264 = pneg %p68
        $region46: #{tpu_custom_call.1} parent=39 // pred_check_branch
          %266 = sbr.rel (%p264) target = $region48
        $region47: #{tpu_custom_call.1} parent=39 // pred_region
          %267 = dma.done %s260, 1024
        $region48: #{tpu_custom_call.1} parent=39 // pred_fallthru
          _
        %s268 = sand.u32 %s26, 1
        %s269 = scalar_lea.sflag [#allocation8], %s268
        %s270 = sand.u32 %s81, 1
        %s271 = smul.addr %s270, 64
        %s272 = scalar_lea.vmem [#allocation7], %s271
        // Predicated region
        $region49: #{tpu_custom_call.1} parent=39 // pred_check
          %p273 = pneg %p94
        $region50: #{tpu_custom_call.1} parent=39 // pred_check_branch
          %275 = sbr.rel (%p273) target = $region52
        $region51: #{tpu_custom_call.1} parent=39 // pred_region
          %276 = dma.done %s269, 1024
        $region52: #{tpu_custom_call.1} parent=39 // pred_fallthru
          _
        // Predicated region
        $region53: #{tpu_custom_call.1} parent=39 // pred_check
          %p277 = pneg %p115
        $region54: #{tpu_custom_call.1} parent=39 // pred_check_branch
          %279 = sbr.rel (%p277) target = $region56
        $region55: #{tpu_custom_call.1} parent=39 // pred_region
          %280 = dma.done [#allocation8], 2048
        $region56: #{tpu_custom_call.1} parent=39 // pred_fallthru
          _
        %281 = sfence
        %p282 = pneg %p42
        %p283 = pneg %p39
        %s284 = sand.u32 %s55, 1
        %s285 = scalar_lea.sflag [#allocation3], %s284
        %s286 = sand.u32 %s55, 1
        %s287 = smul.addr %s286, 64
        %s288 = scalar_lea.vmem [#allocation6], %s287
        %p289 = pneg %p68
        %p290 = pneg %p65
        %s291 = sand.u32 %s26, 1
        %s292 = scalar_lea.sflag [#allocation8], %s291
        %s293 = sand.u32 %s81, 1
        %s294 = smul.addr %s293, 64
        %s295 = scalar_lea.vmem [#allocation7], %s294
        %p296 = pneg %p94
        %p297 = pneg %p91
        %p298 = pneg %p115
        %p299 = pneg %p112
        %p300 = pneg %p136
        %p301 = pneg %p133
        %p302 = pneg %p162
        %p303 = pneg %p159
        %s304 = sand.u32 %s149, 1
        %s305 = scalar_lea.sflag [#allocation4], %s304
        %s306 = sand.u32 %s149, 1
        %s307 = smul.addr %s306, 256
        %s308 = scalar_lea.vmem [#allocation10], %s307
        %v310 = vld [vmem:[%s263] sm:$0xf]
        %v311 = vld [vmem:[%s263 + $0x4] sm:$0xf]
        %v312 = vld [vmem:[%s263 + $0x8] sm:$0xf]
        %v313 = vld [vmem:[%s263 + $0xc] sm:$0xf]
        %v314 = vld [vmem:[%s263 + $0x10] sm:$0xf]
        %v315 = vld [vmem:[%s263 + $0x14] sm:$0xf]
        %v316 = vld [vmem:[%s263 + $0x18] sm:$0xf]
        %v317 = vld [vmem:[%s263 + $0x1c] sm:$0xf]
        %v318 = vld [vmem:[%s263 + $0x20] sm:$0xf]
        %v319 = vld [vmem:[%s263 + $0x24] sm:$0xf]
        %v320 = vld [vmem:[%s263 + $0x28] sm:$0xf]
        %v321 = vld [vmem:[%s263 + $0x2c] sm:$0xf]
        %v322 = vld [vmem:[%s263 + $0x30] sm:$0xf]
        %v323 = vld [vmem:[%s263 + $0x34] sm:$0xf]
        %v324 = vld [vmem:[%s263 + $0x38] sm:$0xf]
        %v325 = vld [vmem:[%s263 + $0x3c] sm:$0xf]
        %v326 = vld [vmem:[#allocation9] sm:$0xff]
        %v327 = vld [vmem:[#allocation9 + $0x8] sm:$0xff]
        %v328 = vld [vmem:[#allocation9 + $0x10] sm:$0xff]
        %v329 = vld [vmem:[#allocation9 + $0x18] sm:$0xff]
        %v330 = vld [vmem:[#allocation9 + $0x20] sm:$0xff]
        %v331 = vld [vmem:[#allocation9 + $0x28] sm:$0xff]
        %v332 = vld [vmem:[#allocation9 + $0x30] sm:$0xff]
        %v333 = vld [vmem:[#allocation9 + $0x38] sm:$0xff]
        %v334 = vld [vmem:[#allocation9 + $0x40] sm:$0xff]
        %v335 = vld [vmem:[#allocation9 + $0x48] sm:$0xff]
        %v336 = vld [vmem:[#allocation9 + $0x50] sm:$0xff]
        %v337 = vld [vmem:[#allocation9 + $0x58] sm:$0xff]
        %v338 = vld [vmem:[#allocation9 + $0x60] sm:$0xff]
        %v339 = vld [vmem:[#allocation9 + $0x68] sm:$0xff]
        %v340 = vld [vmem:[#allocation9 + $0x70] sm:$0xff]
        %v341 = vld [vmem:[#allocation9 + $0x78] sm:$0xff]
        %v342 = vld [vmem:[%s272] sm:$0xf]
        %v343 = vld [vmem:[%s272 + $0x4] sm:$0xf]
        %v344 = vld [vmem:[%s272 + $0x8] sm:$0xf]
        %v345 = vld [vmem:[%s272 + $0xc] sm:$0xf]
        %v346 = vld [vmem:[%s272 + $0x10] sm:$0xf]
        %v347 = vld [vmem:[%s272 + $0x14] sm:$0xf]
        %v348 = vld [vmem:[%s272 + $0x18] sm:$0xf]
        %v349 = vld [vmem:[%s272 + $0x1c] sm:$0xf]
        %v350 = vld [vmem:[%s272 + $0x20] sm:$0xf]
        %v351 = vld [vmem:[%s272 + $0x24] sm:$0xf]
        %v352 = vld [vmem:[%s272 + $0x28] sm:$0xf]
        %v353 = vld [vmem:[%s272 + $0x2c] sm:$0xf]
        %v354 = vld [vmem:[%s272 + $0x30] sm:$0xf]
        %v355 = vld [vmem:[%s272 + $0x34] sm:$0xf]
        %v356 = vld [vmem:[%s272 + $0x38] sm:$0xf]
        %v357 = vld [vmem:[%s272 + $0x3c] sm:$0xf]
        %v358 = vunpack.c.l.bf16 %v342
        %v359 = vunpack.c.l.bf16 %v343
        %v360 = vunpack.c.l.bf16 %v344
        %v361 = vunpack.c.l.bf16 %v345
        %v362 = vunpack.c.l.bf16 %v346
        %v363 = vunpack.c.l.bf16 %v347
        %v364 = vunpack.c.l.bf16 %v348
        %v365 = vunpack.c.l.bf16 %v349
        %v366 = vunpack.c.l.bf16 %v350
        %v367 = vunpack.c.l.bf16 %v351
        %v368 = vunpack.c.l.bf16 %v352
        %v369 = vunpack.c.l.bf16 %v353
        %v370 = vunpack.c.l.bf16 %v354
        %v371 = vunpack.c.l.bf16 %v355
        %v372 = vunpack.c.l.bf16 %v356
        %v373 = vunpack.c.l.bf16 %v357
        %s374 = sld [smem:[#allocation2]]
        %v375 = vstv %s374
        %v376 = vmul.f32 %v375, %v358
        %v377 = vmul.f32 %v375, %v359
        %v378 = vmul.f32 %v375, %v360
        %v379 = vmul.f32 %v375, %v361
        %v380 = vmul.f32 %v375, %v362
        %v381 = vmul.f32 %v375, %v363
        %v382 = vmul.f32 %v375, %v364
        %v383 = vmul.f32 %v375, %v365
        %v384 = vmul.f32 %v375, %v366
        %v385 = vmul.f32 %v375, %v367
        %v386 = vmul.f32 %v375, %v368
        %v387 = vmul.f32 %v375, %v369
        %v388 = vmul.f32 %v375, %v370
        %v389 = vmul.f32 %v375, %v371
        %v390 = vmul.f32 %v375, %v372
        %v391 = vmul.f32 %v375, %v373
        %v392 = vpack.c.bf16 %v377, %v376
        %v393 = vpack.c.bf16 %v379, %v378
        %v394 = vpack.c.bf16 %v381, %v380
        %v395 = vpack.c.bf16 %v383, %v382
        %v396 = vpack.c.bf16 %v385, %v384
        %v397 = vpack.c.bf16 %v387, %v386
        %v398 = vpack.c.bf16 %v389, %v388
        %v399 = vpack.c.bf16 %v391, %v390
        %v416 = vunpack.c.l.b16 %v326
        %v417 = vunpack.c.h.b16 %v326
        %v418 = vunpack.c.l.b16 %v327
        %v419 = vunpack.c.h.b16 %v327
        %v420 = vunpack.c.l.b16 %v328
        %v421 = vunpack.c.h.b16 %v328
        %v422 = vunpack.c.l.b16 %v329
        %v423 = vunpack.c.h.b16 %v329
        %v424 = vunpack.c.l.b16 %v330
        %v425 = vunpack.c.h.b16 %v330
        %v426 = vunpack.c.l.b16 %v331
        %v427 = vunpack.c.h.b16 %v331
        %v428 = vunpack.c.l.b16 %v332
        %v429 = vunpack.c.h.b16 %v332
        %v430 = vunpack.c.l.b16 %v333
        %v431 = vunpack.c.h.b16 %v333
        %v432 = vunpack.c.l.b16 %v334
        %v433 = vunpack.c.h.b16 %v334
        %v434 = vunpack.c.l.b16 %v335
        %v435 = vunpack.c.h.b16 %v335
        %v436 = vunpack.c.l.b16 %v336
        %v437 = vunpack.c.h.b16 %v336
        %v438 = vunpack.c.l.b16 %v337
        %v439 = vunpack.c.h.b16 %v337
        %v440 = vunpack.c.l.b16 %v338
        %v441 = vunpack.c.h.b16 %v338
        %v442 = vunpack.c.l.b16 %v339
        %v443 = vunpack.c.h.b16 %v339
        %v444 = vunpack.c.l.b16 %v340
        %v445 = vunpack.c.h.b16 %v340
        %v446 = vunpack.c.l.b16 %v341
        %v447 = vunpack.c.h.b16 %v341
        %v448 = vpack.c.b16 %v418, %v416
        %v449 = vpack.c.b16 %v419, %v417
        %v450 = vpack.c.b16 %v422, %v420
        %v451 = vpack.c.b16 %v423, %v421
        %v452 = vpack.c.b16 %v426, %v424
        %v453 = vpack.c.b16 %v427, %v425
        %v454 = vpack.c.b16 %v430, %v428
        %v455 = vpack.c.b16 %v431, %v429
        %v456 = vpack.c.b16 %v434, %v432
        %v457 = vpack.c.b16 %v435, %v433
        %v458 = vpack.c.b16 %v438, %v436
        %v459 = vpack.c.b16 %v439, %v437
        %v460 = vpack.c.b16 %v442, %v440
        %v461 = vpack.c.b16 %v443, %v441
        %v462 = vpack.c.b16 %v446, %v444
        %v463 = vpack.c.b16 %v447, %v445
        %480 = vmatprep.subr.bf16.mxu0 %v449
        %481 = vmatpush1.bf16.msra.mxu0 %v448
        %482 = vmatprep.subr.bf16.mxu0 %v451
        %483 = vmatpush1.bf16.msra.mxu0 %v450
        %484 = vmatprep.subr.bf16.mxu0 %v453
        %485 = vmatpush1.bf16.msra.mxu0 %v452
        %486 = vmatprep.subr.bf16.mxu0 %v455
        %487 = vmatpush1.bf16.msra.mxu0 %v454
        %488 = vmatprep.subr.bf16.mxu0 %v457
        %489 = vmatpush1.bf16.msra.mxu0 %v456
        %490 = vmatprep.subr.bf16.mxu0 %v459
        %491 = vmatpush1.bf16.msra.mxu0 %v458
        %492 = vmatprep.subr.bf16.mxu0 %v461
        %493 = vmatpush1.bf16.msra.mxu0 %v460
        %494 = vmatprep.subr.bf16.mxu0 %v463
        %495 = vmatpush1.bf16.msra.mxu0 %v462
        %496 = vmatprep.subr.bf16.mxu0 0
        %497 = vmatpush1.bf16.msra.mxu0 0
        %498 = vmatprep.subr.bf16.mxu0 0
        %499 = vmatpush1.bf16.msra.mxu0 0
        %500 = vmatprep.subr.bf16.mxu0 0
        %501 = vmatpush1.bf16.msra.mxu0 0
        %502 = vmatprep.subr.bf16.mxu0 0
        %503 = vmatpush1.bf16.msra.mxu0 0
        %504 = vmatprep.subr.bf16.mxu0 0
        %505 = vmatpush1.bf16.msra.mxu0 0
        %506 = vmatprep.subr.bf16.mxu0 0
        %507 = vmatpush1.bf16.msra.mxu0 0
        %508 = vmatprep.subr.bf16.mxu0 0
        %509 = vmatpush1.bf16.msra.mxu0 0
        %510 = vmatprep.subr.bf16.mxu0 0
        %511 = vmatpush1.bf16.msra.mxu0 0
        %512 = vmatprep.mubr.bf16.mxu0 0
        %513 = vmatmul.mubr.bf16.gmra.mrb[0].mxu0 %v392
        %v514 = vpop.f32.mrb[0].mxu0
        %v515 = vadd.f32 0.0, %v514
        %v516 = vpop.f32.mrb[0].mxu0
        %v517 = vadd.f32 0.0, %v516
        %v518 = vpop.f32.mrb[0].mxu0
        %v519 = vadd.f32 0.0, %v518
        %v520 = vpop.f32.mrb[0].mxu0
        %v521 = vadd.f32 0.0, %v520
        %522 = vmatprep.mubr.bf16.mxu0 0
        %523 = vmatmul.mubr.bf16.gmra.mrb[0].mxu0 %v393
        %v524 = vpop.f32.mrb[0].mxu0
        %v525 = vadd.f32 0.0, %v524
        %v526 = vpop.f32.mrb[0].mxu0
        %v527 = vadd.f32 0.0, %v526
        %v528 = vpop.f32.mrb[0].mxu0
        %v529 = vadd.f32 0.0, %v528
        %v530 = vpop.f32.mrb[0].mxu0
        %v531 = vadd.f32 0.0, %v530
        %532 = vmatprep.mubr.bf16.mxu0 0
        %533 = vmatmul.mubr.bf16.gmra.mrb[0].mxu0 %v394
        %v534 = vpop.f32.mrb[0].mxu0
        %v535 = vadd.f32 0.0, %v534
        %v536 = vpop.f32.mrb[0].mxu0
        %v537 = vadd.f32 0.0, %v536
        %v538 = vpop.f32.mrb[0].mxu0
        %v539 = vadd.f32 0.0, %v538
        %v540 = vpop.f32.mrb[0].mxu0
        %v541 = vadd.f32 0.0, %v540
        %542 = vmatprep.mubr.bf16.mxu0 0
        %543 = vmatmul.mubr.bf16.gmra.mrb[0].mxu0 %v395
        %v544 = vpop.f32.mrb[0].mxu0
        %v545 = vadd.f32 0.0, %v544
        %v546 = vpop.f32.mrb[0].mxu0
        %v547 = vadd.f32 0.0, %v546
        %v548 = vpop.f32.mrb[0].mxu0
        %v549 = vadd.f32 0.0, %v548
        %v550 = vpop.f32.mrb[0].mxu0
        %v551 = vadd.f32 0.0, %v550
        %552 = vmatprep.mubr.bf16.mxu0 0
        %553 = vmatmul.mubr.bf16.gmra.mrb[0].mxu0 %v396
        %v554 = vpop.f32.mrb[0].mxu0
        %v555 = vadd.f32 0.0, %v554
        %v556 = vpop.f32.mrb[0].mxu0
        %v557 = vadd.f32 0.0, %v556
        %v558 = vpop.f32.mrb[0].mxu0
        %v559 = vadd.f32 0.0, %v558
        %v560 = vpop.f32.mrb[0].mxu0
        %v561 = vadd.f32 0.0, %v560
        %562 = vmatprep.mubr.bf16.mxu0 0
        %563 = vmatmul.mubr.bf16.gmra.mrb[0].mxu0 %v397
        %v564 = vpop.f32.mrb[0].mxu0
        %v565 = vadd.f32 0.0, %v564
        %v566 = vpop.f32.mrb[0].mxu0
        %v567 = vadd.f32 0.0, %v566
        %v568 = vpop.f32.mrb[0].mxu0
        %v569 = vadd.f32 0.0, %v568
        %v570 = vpop.f32.mrb[0].mxu0
        %v571 = vadd.f32 0.0, %v570
        %572 = vmatprep.mubr.bf16.mxu0 0
        %573 = vmatmul.mubr.bf16.gmra.mrb[0].mxu0 %v398
        %v574 = vpop.f32.mrb[0].mxu0
        %v575 = vadd.f32 0.0, %v574
        %v576 = vpop.f32.mrb[0].mxu0
        %v577 = vadd.f32 0.0, %v576
        %v578 = vpop.f32.mrb[0].mxu0
        %v579 = vadd.f32 0.0, %v578
        %v580 = vpop.f32.mrb[0].mxu0
        %v581 = vadd.f32 0.0, %v580
        %582 = vmatprep.mubr.bf16.mxu0 0
        %583 = vmatmul.mubr.bf16.gmra.mrb[0].mxu0 %v399
        %v584 = vpop.f32.mrb[0].mxu0
        %v585 = vadd.f32 0.0, %v584
        %v586 = vpop.f32.mrb[0].mxu0
        %v587 = vadd.f32 0.0, %v586
        %v588 = vpop.f32.mrb[0].mxu0
        %v589 = vadd.f32 0.0, %v588
        %v590 = vpop.f32.mrb[0].mxu0
        %v591 = vadd.f32 0.0, %v590
        %592 = vdwg.mxu0
        %593 = vst [vmem:[%s308] sm:$0xff] %v515
        %594 = vst [vmem:[%s308 + $0x8] sm:$0xff] %v517
        %595 = vst [vmem:[%s308 + $0x10] sm:$0xff] %v519
        %596 = vst [vmem:[%s308 + $0x18] sm:$0xff] %v521
        %597 = vst [vmem:[%s308 + $0x20] sm:$0xff] %v525
        %598 = vst [vmem:[%s308 + $0x28] sm:$0xff] %v527
        %599 = vst [vmem:[%s308 + $0x30] sm:$0xff] %v529
        %600 = vst [vmem:[%s308 + $0x38] sm:$0xff] %v531
        %601 = vst [vmem:[%s308 + $0x40] sm:$0xff] %v535
        %602 = vst [vmem:[%s308 + $0x48] sm:$0xff] %v537
        %603 = vst [vmem:[%s308 + $0x50] sm:$0xff] %v539
        %604 = vst [vmem:[%s308 + $0x58] sm:$0xff] %v541
        %605 = vst [vmem:[%s308 + $0x60] sm:$0xff] %v545
        %606 = vst [vmem:[%s308 + $0x68] sm:$0xff] %v547
        %607 = vst [vmem:[%s308 + $0x70] sm:$0xff] %v549
        %608 = vst [vmem:[%s308 + $0x78] sm:$0xff] %v551
        %609 = vst [vmem:[%s308 + $0x80] sm:$0xff] %v555
        %610 = vst [vmem:[%s308 + $0x88] sm:$0xff] %v557
        %611 = vst [vmem:[%s308 + $0x90] sm:$0xff] %v559
        %612 = vst [vmem:[%s308 + $0x98] sm:$0xff] %v561
        %613 = vst [vmem:[%s308 + $0xa0] sm:$0xff] %v565
        %614 = vst [vmem:[%s308 + $0xa8] sm:$0xff] %v567
        %615 = vst [vmem:[%s308 + $0xb0] sm:$0xff] %v569
        %616 = vst [vmem:[%s308 + $0xb8] sm:$0xff] %v571
        %617 = vst [vmem:[%s308 + $0xc0] sm:$0xff] %v575
        %618 = vst [vmem:[%s308 + $0xc8] sm:$0xff] %v577
        %619 = vst [vmem:[%s308 + $0xd0] sm:$0xff] %v579
        %620 = vst [vmem:[%s308 + $0xd8] sm:$0xff] %v581
        %621 = vst [vmem:[%s308 + $0xe0] sm:$0xff] %v585
        %622 = vst [vmem:[%s308 + $0xe8] sm:$0xff] %v587
        %623 = vst [vmem:[%s308 + $0xf0] sm:$0xff] %v589
        %624 = vst [vmem:[%s308 + $0xf8] sm:$0xff] %v591
        %v641 = vunpack.c.l.b16 %v310
        %v642 = vunpack.c.l.b16 %v311
        %v643 = vunpack.c.l.b16 %v312
        %v644 = vunpack.c.l.b16 %v313
        %v645 = vunpack.c.l.b16 %v314
        %v646 = vunpack.c.l.b16 %v315
        %v647 = vunpack.c.l.b16 %v316
        %v648 = vunpack.c.l.b16 %v317
        %v649 = vunpack.c.l.b16 %v318
        %v650 = vunpack.c.l.b16 %v319
        %v651 = vunpack.c.l.b16 %v320
        %v652 = vunpack.c.l.b16 %v321
        %v653 = vunpack.c.l.b16 %v322
        %v654 = vunpack.c.l.b16 %v323
        %v655 = vunpack.c.l.b16 %v324
        %v656 = vunpack.c.l.b16 %v325
        %v657 = vpack.c.b16 %v642, %v641
        %v658 = vpack.c.b16 %v644, %v643
        %v659 = vpack.c.b16 %v646, %v645
        %v660 = vpack.c.b16 %v648, %v647
        %v661 = vpack.c.b16 %v650, %v649
        %v662 = vpack.c.b16 %v652, %v651
        %v663 = vpack.c.b16 %v654, %v653
        %v664 = vpack.c.b16 %v656, %v655
        %v689 = vunpack.c.l.b16 %v342
        %v690 = vunpack.c.l.b16 %v343
        %v691 = vunpack.c.l.b16 %v344
        %v692 = vunpack.c.l.b16 %v345
        %v693 = vunpack.c.l.b16 %v346
        %v694 = vunpack.c.l.b16 %v347
        %v695 = vunpack.c.l.b16 %v348
        %v696 = vunpack.c.l.b16 %v349
        %v697 = vunpack.c.l.b16 %v350
        %v698 = vunpack.c.l.b16 %v351
        %v699 = vunpack.c.l.b16 %v352
        %v700 = vunpack.c.l.b16 %v353
        %v701 = vunpack.c.l.b16 %v354
        %v702 = vunpack.c.l.b16 %v355
        %v703 = vunpack.c.l.b16 %v356
        %v704 = vunpack.c.l.b16 %v357
        %v705 = vpack.c.b16 %v690, %v689
        %v706 = vpack.c.b16 %v692, %v691
        %v707 = vpack.c.b16 %v694, %v693
        %v708 = vpack.c.b16 %v696, %v695
        %v709 = vpack.c.b16 %v698, %v697
        %v710 = vpack.c.b16 %v700, %v699
        %v711 = vpack.c.b16 %v702, %v701
        %v712 = vpack.c.b16 %v704, %v703
        %721 = vmatprep.subr.bf16.mxu0 0
        %722 = vmatpush1.bf16.msra.mxu0 %v705
        %723 = vmatprep.subr.bf16.mxu0 0
        %724 = vmatpush1.bf16.msra.mxu0 %v706
        %725 = vmatprep.subr.bf16.mxu0 0
        %726 = vmatpush1.bf16.msra.mxu0 %v707
        %727 = vmatprep.subr.bf16.mxu0 0
        %728 = vmatpush1.bf16.msra.mxu0 %v708
        %729 = vmatprep.subr.bf16.mxu0 0
        %730 = vmatpush1.bf16.msra.mxu0 %v709
        %731 = vmatprep.subr.bf16.mxu0 0
        %732 = vmatpush1.bf16.msra.mxu0 %v710
        %733 = vmatprep.subr.bf16.mxu0 0
        %734 = vmatpush1.bf16.msra.mxu0 %v711
        %735 = vmatprep.subr.bf16.mxu0 0
        %736 = vmatpush1.bf16.msra.mxu0 %v712
        %737 = vmatprep.subr.bf16.mxu0 0
        %738 = vmatpush1.bf16.msra.mxu0 0
        %739 = vmatprep.subr.bf16.mxu0 0
        %740 = vmatpush1.bf16.msra.mxu0 0
        %741 = vmatprep.subr.bf16.mxu0 0
        %742 = vmatpush1.bf16.msra.mxu0 0
        %743 = vmatprep.subr.bf16.mxu0 0
        %744 = vmatpush1.bf16.msra.mxu0 0
        %745 = vmatprep.subr.bf16.mxu0 0
        %746 = vmatpush1.bf16.msra.mxu0 0
        %747 = vmatprep.subr.bf16.mxu0 0
        %748 = vmatpush1.bf16.msra.mxu0 0
        %749 = vmatprep.subr.bf16.mxu0 0
        %750 = vmatpush1.bf16.msra.mxu0 0
        %751 = vmatprep.subr.bf16.mxu0 0
        %752 = vmatpush1.bf16.msra.mxu0 0
        %753 = vmatprep.mubr.bf16.mxu0 0
        %754 = vmatmul.mubr.bf16.gmra.mrb[0].mxu0 %v657
        %v755 = vpop.f32.mrb[0].mxu0
        %v756 = vadd.f32 0.0, %v755
        %v757 = vpop.f32.mrb[0].mxu0
        %v758 = vpop.f32.mrb[0].mxu0
        %v759 = vadd.f32 0.0, %v758
        %v760 = vpop.f32.mrb[0].mxu0
        %761 = vmatprep.mubr.bf16.mxu0 0
        %762 = vmatmul.mubr.bf16.gmra.mrb[0].mxu0 %v658
        %v763 = vpop.f32.mrb[0].mxu0
        %v764 = vadd.f32 0.0, %v763
        %v765 = vpop.f32.mrb[0].mxu0
        %v766 = vpop.f32.mrb[0].mxu0
        %v767 = vadd.f32 0.0, %v766
        %v768 = vpop.f32.mrb[0].mxu0
        %769 = vmatprep.mubr.bf16.mxu0 0
        %770 = vmatmul.mubr.bf16.gmra.mrb[0].mxu0 %v659
        %v771 = vpop.f32.mrb[0].mxu0
        %v772 = vadd.f32 0.0, %v771
        %v773 = vpop.f32.mrb[0].mxu0
        %v774 = vpop.f32.mrb[0].mxu0
        %v775 = vadd.f32 0.0, %v774
        %v776 = vpop.f32.mrb[0].mxu0
        %777 = vmatprep.mubr.bf16.mxu0 0
        %778 = vmatmul.mubr.bf16.gmra.mrb[0].mxu0 %v660
        %v779 = vpop.f32.mrb[0].mxu0
        %v780 = vadd.f32 0.0, %v779
        %v781 = vpop.f32.mrb[0].mxu0
        %v782 = vpop.f32.mrb[0].mxu0
        %v783 = vadd.f32 0.0, %v782
        %v784 = vpop.f32.mrb[0].mxu0
        %785 = vmatprep.mubr.bf16.mxu0 0
        %786 = vmatmul.mubr.bf16.gmra.mrb[0].mxu0 %v661
        %v787 = vpop.f32.mrb[0].mxu0
        %v788 = vadd.f32 0.0, %v787
        %v789 = vpop.f32.mrb[0].mxu0
        %v790 = vpop.f32.mrb[0].mxu0
        %v791 = vadd.f32 0.0, %v790
        %v792 = vpop.f32.mrb[0].mxu0
        %793 = vmatprep.mubr.bf16.mxu0 0
        %794 = vmatmul.mubr.bf16.gmra.mrb[0].mxu0 %v662
        %v795 = vpop.f32.mrb[0].mxu0
        %v796 = vadd.f32 0.0, %v795
        %v797 = vpop.f32.mrb[0].mxu0
        %v798 = vpop.f32.mrb[0].mxu0
        %v799 = vadd.f32 0.0, %v798
        %v800 = vpop.f32.mrb[0].mxu0
        %801 = vmatprep.mubr.bf16.mxu0 0
        %802 = vmatmul.mubr.bf16.gmra.mrb[0].mxu0 %v663
        %v803 = vpop.f32.mrb[0].mxu0
        %v804 = vadd.f32 0.0, %v803
        %v805 = vpop.f32.mrb[0].mxu0
        %v806 = vpop.f32.mrb[0].mxu0
        %v807 = vadd.f32 0.0, %v806
        %v808 = vpop.f32.mrb[0].mxu0
        %809 = vmatprep.mubr.bf16.mxu0 0
        %810 = vmatmul.mubr.bf16.gmra.mrb[0].mxu0 %v664
        %v811 = vpop.f32.mrb[0].mxu0
        %v812 = vadd.f32 0.0, %v811
        %v813 = vpop.f32.mrb[0].mxu0
        %v814 = vpop.f32.mrb[0].mxu0
        %v815 = vadd.f32 0.0, %v814
        %v816 = vpop.f32.mrb[0].mxu0
        %817 = vdwg.mxu0
        %v818 = vld [vmem:[%s308] sm:$0xff]
        %v819 = vld [vmem:[%s308 + $0x8] sm:$0xff]
        %v820 = vld [vmem:[%s308 + $0x10] sm:$0xff]
        %v821 = vld [vmem:[%s308 + $0x18] sm:$0xff]
        %v822 = vld [vmem:[%s308 + $0x20] sm:$0xff]
        %v823 = vld [vmem:[%s308 + $0x28] sm:$0xff]
        %v824 = vld [vmem:[%s308 + $0x30] sm:$0xff]
        %v825 = vld [vmem:[%s308 + $0x38] sm:$0xff]
        %v826 = vld [vmem:[%s308 + $0x40] sm:$0xff]
        %v827 = vld [vmem:[%s308 + $0x48] sm:$0xff]
        %v828 = vld [vmem:[%s308 + $0x50] sm:$0xff]
        %v829 = vld [vmem:[%s308 + $0x58] sm:$0xff]
        %v830 = vld [vmem:[%s308 + $0x60] sm:$0xff]
        %v831 = vld [vmem:[%s308 + $0x68] sm:$0xff]
        %v832 = vld [vmem:[%s308 + $0x70] sm:$0xff]
        %v833 = vld [vmem:[%s308 + $0x78] sm:$0xff]
        %v834 = vld [vmem:[%s308 + $0x80] sm:$0xff]
        %v835 = vld [vmem:[%s308 + $0x88] sm:$0xff]
        %v836 = vld [vmem:[%s308 + $0x90] sm:$0xff]
        %v837 = vld [vmem:[%s308 + $0x98] sm:$0xff]
        %v838 = vld [vmem:[%s308 + $0xa0] sm:$0xff]
        %v839 = vld [vmem:[%s308 + $0xa8] sm:$0xff]
        %v840 = vld [vmem:[%s308 + $0xb0] sm:$0xff]
        %v841 = vld [vmem:[%s308 + $0xb8] sm:$0xff]
        %v842 = vld [vmem:[%s308 + $0xc0] sm:$0xff]
        %v843 = vld [vmem:[%s308 + $0xc8] sm:$0xff]
        %v844 = vld [vmem:[%s308 + $0xd0] sm:$0xff]
        %v845 = vld [vmem:[%s308 + $0xd8] sm:$0xff]
        %v846 = vld [vmem:[%s308 + $0xe0] sm:$0xff]
        %v847 = vld [vmem:[%s308 + $0xe8] sm:$0xff]
        %v848 = vld [vmem:[%s308 + $0xf0] sm:$0xff]
        %v849 = vld [vmem:[%s308 + $0xf8] sm:$0xff]
        %s850 = sld [smem:[#allocation2 + $0x1]]
        %v851 = vstv %s850
        %v852 = vmul.f32 %v851, %v756
        %v853 = vmul.f32 %v851, %v759
        %v854 = vmul.f32 %v851, %v764
        %v855 = vmul.f32 %v851, %v767
        %v856 = vmul.f32 %v851, %v772
        %v857 = vmul.f32 %v851, %v775
        %v858 = vmul.f32 %v851, %v780
        %v859 = vmul.f32 %v851, %v783
        %v860 = vmul.f32 %v851, %v788
        %v861 = vmul.f32 %v851, %v791
        %v862 = vmul.f32 %v851, %v796
        %v863 = vmul.f32 %v851, %v799
        %v864 = vmul.f32 %v851, %v804
        %v865 = vmul.f32 %v851, %v807
        %v866 = vmul.f32 %v851, %v812
        %v867 = vmul.f32 %v851, %v815
        %v868 = vpack.c.bf16 %v853, %v852
        %v869 = vpack.c.bf16 %v855, %v854
        %v870 = vpack.c.bf16 %v857, %v856
        %v871 = vpack.c.bf16 %v859, %v858
        %v872 = vpack.c.bf16 %v861, %v860
        %v873 = vpack.c.bf16 %v863, %v862
        %v874 = vpack.c.bf16 %v865, %v864
        %v875 = vpack.c.bf16 %v867, %v866
        %876 = vmatprep.subr.bf16.mxu0 %v449
        %877 = vmatpush1.bf16.msra.mxu0 %v448
        %878 = vmatprep.subr.bf16.mxu0 %v451
        %879 = vmatpush1.bf16.msra.mxu0 %v450
        %880 = vmatprep.subr.bf16.mxu0 %v453
        %881 = vmatpush1.bf16.msra.mxu0 %v452
        %882 = vmatprep.subr.bf16.mxu0 %v455
        %883 = vmatpush1.bf16.msra.mxu0 %v454
        %884 = vmatprep.subr.bf16.mxu0 %v457
        %885 = vmatpush1.bf16.msra.mxu0 %v456
        %886 = vmatprep.subr.bf16.mxu0 %v459
        %887 = vmatpush1.bf16.msra.mxu0 %v458
        %888 = vmatprep.subr.bf16.mxu0 %v461
        %889 = vmatpush1.bf16.msra.mxu0 %v460
        %890 = vmatprep.subr.bf16.mxu0 %v463
        %891 = vmatpush1.bf16.msra.mxu0 %v462
        %892 = vmatprep.subr.bf16.mxu0 0
        %893 = vmatpush1.bf16.msra.mxu0 0
        %894 = vmatprep.subr.bf16.mxu0 0
        %895 = vmatpush1.bf16.msra.mxu0 0
        %896 = vmatprep.subr.bf16.mxu0 0
        %897 = vmatpush1.bf16.msra.mxu0 0
        %898 = vmatprep.subr.bf16.mxu0 0
        %899 = vmatpush1.bf16.msra.mxu0 0
        %900 = vmatprep.subr.bf16.mxu0 0
        %901 = vmatpush1.bf16.msra.mxu0 0
        %902 = vmatprep.subr.bf16.mxu0 0
        %903 = vmatpush1.bf16.msra.mxu0 0
        %904 = vmatprep.subr.bf16.mxu0 0
        %905 = vmatpush1.bf16.msra.mxu0 0
        %906 = vmatprep.subr.bf16.mxu0 0
        %907 = vmatpush1.bf16.msra.mxu0 0
        %908 = vmatprep.mubr.bf16.mxu0 0
        %909 = vmatmul.mubr.bf16.gmra.mrb[0].mxu0 %v868
        %v910 = vpop.f32.mrb[0].mxu0
        %v911 = vadd.f32 0.0, %v910
        %v912 = vpop.f32.mrb[0].mxu0
        %v913 = vadd.f32 0.0, %v912
        %v914 = vpop.f32.mrb[0].mxu0
        %v915 = vadd.f32 0.0, %v914
        %v916 = vpop.f32.mrb[0].mxu0
        %v917 = vadd.f32 0.0, %v916
        %918 = vmatprep.mubr.bf16.mxu0 0
        %919 = vmatmul.mubr.bf16.gmra.mrb[0].mxu0 %v869
        %v920 = vpop.f32.mrb[0].mxu0
        %v921 = vadd.f32 0.0, %v920
        %v922 = vpop.f32.mrb[0].mxu0
        %v923 = vadd.f32 0.0, %v922
        %v924 = vpop.f32.mrb[0].mxu0
        %v925 = vadd.f32 0.0, %v924
        %v926 = vpop.f32.mrb[0].mxu0
        %v927 = vadd.f32 0.0, %v926
        %928 = vmatprep.mubr.bf16.mxu0 0
        %929 = vmatmul.mubr.bf16.gmra.mrb[0].mxu0 %v870
        %v930 = vpop.f32.mrb[0].mxu0
        %v931 = vadd.f32 0.0, %v930
        %v932 = vpop.f32.mrb[0].mxu0
        %v933 = vadd.f32 0.0, %v932
        %v934 = vpop.f32.mrb[0].mxu0
        %v935 = vadd.f32 0.0, %v934
        %v936 = vpop.f32.mrb[0].mxu0
        %v937 = vadd.f32 0.0, %v936
        %938 = vmatprep.mubr.bf16.mxu0 0
        %939 = vmatmul.mubr.bf16.gmra.mrb[0].mxu0 %v871
        %v940 = vpop.f32.mrb[0].mxu0
        %v941 = vadd.f32 0.0, %v940
        %v942 = vpop.f32.mrb[0].mxu0
        %v943 = vadd.f32 0.0, %v942
        %v944 = vpop.f32.mrb[0].mxu0
        %v945 = vadd.f32 0.0, %v944
        %v946 = vpop.f32.mrb[0].mxu0
        %v947 = vadd.f32 0.0, %v946
        %948 = vmatprep.mubr.bf16.mxu0 0
        %949 = vmatmul.mubr.bf16.gmra.mrb[0].mxu0 %v872
        %v950 = vpop.f32.mrb[0].mxu0
        %v951 = vadd.f32 0.0, %v950
        %v952 = vpop.f32.mrb[0].mxu0
        %v953 = vadd.f32 0.0, %v952
        %v954 = vpop.f32.mrb[0].mxu0
        %v955 = vadd.f32 0.0, %v954
        %v956 = vpop.f32.mrb[0].mxu0
        %v957 = vadd.f32 0.0, %v956
        %958 = vmatprep.mubr.bf16.mxu0 0
        %959 = vmatmul.mubr.bf16.gmra.mrb[0].mxu0 %v873
        %v960 = vpop.f32.mrb[0].mxu0
        %v961 = vadd.f32 0.0, %v960
        %v962 = vpop.f32.mrb[0].mxu0
        %v963 = vadd.f32 0.0, %v962
        %v964 = vpop.f32.mrb[0].mxu0
        %v965 = vadd.f32 0.0, %v964
        %v966 = vpop.f32.mrb[0].mxu0
        %v967 = vadd.f32 0.0, %v966
        %968 = vmatprep.mubr.bf16.mxu0 0
        %969 = vmatmul.mubr.bf16.gmra.mrb[0].mxu0 %v874
        %v970 = vpop.f32.mrb[0].mxu0
        %v971 = vadd.f32 0.0, %v970
        %v972 = vpop.f32.mrb[0].mxu0
        %v973 = vadd.f32 0.0, %v972
        %v974 = vpop.f32.mrb[0].mxu0
        %v975 = vadd.f32 0.0, %v974
        %v976 = vpop.f32.mrb[0].mxu0
        %v977 = vadd.f32 0.0, %v976
        %978 = vmatprep.mubr.bf16.mxu0 0
        %979 = vmatmul.mubr.bf16.gmra.mrb[0].mxu0 %v875
        %v980 = vpop.f32.mrb[0].mxu0
        %v981 = vadd.f32 0.0, %v980
        %v982 = vpop.f32.mrb[0].mxu0
        %v983 = vadd.f32 0.0, %v982
        %v984 = vpop.f32.mrb[0].mxu0
        %v985 = vadd.f32 0.0, %v984
        %v986 = vpop.f32.mrb[0].mxu0
        %v987 = vadd.f32 0.0, %v986
        %988 = vdwg.mxu0
        %v989 = vadd.f32 %v818, %v911
        %v990 = vadd.f32 %v819, %v913
        %v991 = vadd.f32 %v820, %v915
        %v992 = vadd.f32 %v821, %v917
        %v993 = vadd.f32 %v822, %v921
        %v994 = vadd.f32 %v823, %v923
        %v995 = vadd.f32 %v824, %v925
        %v996 = vadd.f32 %v825, %v927
        %v997 = vadd.f32 %v826, %v931
        %v998 = vadd.f32 %v827, %v933
        %v999 = vadd.f32 %v828, %v935
        %v1000 = vadd.f32 %v829, %v937
        %v1001 = vadd.f32 %v830, %v941
        %v1002 = vadd.f32 %v831, %v943
        %v1003 = vadd.f32 %v832, %v945
        %v1004 = vadd.f32 %v833, %v947
        %v1005 = vadd.f32 %v834, %v951
        %v1006 = vadd.f32 %v835, %v953
        %v1007 = vadd.f32 %v836, %v955
        %v1008 = vadd.f32 %v837, %v957
        %v1009 = vadd.f32 %v838, %v961
        %v1010 = vadd.f32 %v839, %v963
        %v1011 = vadd.f32 %v840, %v965
        %v1012 = vadd.f32 %v841, %v967
        %v1013 = vadd.f32 %v842, %v971
        %v1014 = vadd.f32 %v843, %v973
        %v1015 = vadd.f32 %v844, %v975
        %v1016 = vadd.f32 %v845, %v977
        %v1017 = vadd.f32 %v846, %v981
        %v1018 = vadd.f32 %v847, %v983
        %v1019 = vadd.f32 %v848, %v985
        %v1020 = vadd.f32 %v849, %v987
        %1021 = vst [vmem:[%s308] sm:$0xff] %v989
        %1022 = vst [vmem:[%s308 + $0x8] sm:$0xff] %v990
        %1023 = vst [vmem:[%s308 + $0x10] sm:$0xff] %v991
        %1024 = vst [vmem:[%s308 + $0x18] sm:$0xff] %v992
        %1025 = vst [vmem:[%s308 + $0x20] sm:$0xff] %v993
        %1026 = vst [vmem:[%s308 + $0x28] sm:$0xff] %v994
        %1027 = vst [vmem:[%s308 + $0x30] sm:$0xff] %v995
        %1028 = vst [vmem:[%s308 + $0x38] sm:$0xff] %v996
        %1029 = vst [vmem:[%s308 + $0x40] sm:$0xff] %v997
        %1030 = vst [vmem:[%s308 + $0x48] sm:$0xff] %v998
        %1031 = vst [vmem:[%s308 + $0x50] sm:$0xff] %v999
        %1032 = vst [vmem:[%s308 + $0x58] sm:$0xff] %v1000
        %1033 = vst [vmem:[%s308 + $0x60] sm:$0xff] %v1001
        %1034 = vst [vmem:[%s308 + $0x68] sm:$0xff] %v1002
        %1035 = vst [vmem:[%s308 + $0x70] sm:$0xff] %v1003
        %1036 = vst [vmem:[%s308 + $0x78] sm:$0xff] %v1004
        %1037 = vst [vmem:[%s308 + $0x80] sm:$0xff] %v1005
        %1038 = vst [vmem:[%s308 + $0x88] sm:$0xff] %v1006
        %1039 = vst [vmem:[%s308 + $0x90] sm:$0xff] %v1007
        %1040 = vst [vmem:[%s308 + $0x98] sm:$0xff] %v1008
        %1041 = vst [vmem:[%s308 + $0xa0] sm:$0xff] %v1009
        %1042 = vst [vmem:[%s308 + $0xa8] sm:$0xff] %v1010
        %1043 = vst [vmem:[%s308 + $0xb0] sm:$0xff] %v1011
        %1044 = vst [vmem:[%s308 + $0xb8] sm:$0xff] %v1012
        %1045 = vst [vmem:[%s308 + $0xc0] sm:$0xff] %v1013
        %1046 = vst [vmem:[%s308 + $0xc8] sm:$0xff] %v1014
        %1047 = vst [vmem:[%s308 + $0xd0] sm:$0xff] %v1015
        %1048 = vst [vmem:[%s308 + $0xd8] sm:$0xff] %v1016
        %1049 = vst [vmem:[%s308 + $0xe0] sm:$0xff] %v1017
        %1050 = vst [vmem:[%s308 + $0xe8] sm:$0xff] %v1018
        %1051 = vst [vmem:[%s308 + $0xf0] sm:$0xff] %v1019
        %1052 = vst [vmem:[%s308 + $0xf8] sm:$0xff] %v1020
        %v1053 = vmul.f32 %v756, 2.0
        %v1054 = vmul.f32 %v759, 2.0
        %v1055 = vmul.f32 %v764, 2.0
        %v1056 = vmul.f32 %v767, 2.0
        %v1057 = vmul.f32 %v772, 2.0
        %v1058 = vmul.f32 %v775, 2.0
        %v1059 = vmul.f32 %v780, 2.0
        %v1060 = vmul.f32 %v783, 2.0
        %v1061 = vmul.f32 %v788, 2.0
        %v1062 = vmul.f32 %v791, 2.0
        %v1063 = vmul.f32 %v796, 2.0
        %v1064 = vmul.f32 %v799, 2.0
        %v1065 = vmul.f32 %v804, 2.0
        %v1066 = vmul.f32 %v807, 2.0
        %v1067 = vmul.f32 %v812, 2.0
        %v1068 = vmul.f32 %v815, 2.0
        %v1069 = vpack.c.bf16 %v1054, %v1053
        %v1070 = vpack.c.bf16 %v1056, %v1055
        %v1071 = vpack.c.bf16 %v1058, %v1057
        %v1072 = vpack.c.bf16 %v1060, %v1059
        %v1073 = vpack.c.bf16 %v1062, %v1061
        %v1074 = vpack.c.bf16 %v1064, %v1063
        %v1075 = vpack.c.bf16 %v1066, %v1065
        %v1076 = vpack.c.bf16 %v1068, %v1067
        %1077 = vmatprep.subr.bf16.mxu0 0
        %1078 = vmatpush1.bf16.msra.mxu0 %v1069
        %1079 = vmatprep.subr.bf16.mxu0 0
        %1080 = vmatpush1.bf16.msra.mxu0 %v1070
        %1081 = vmatprep.subr.bf16.mxu0 0
        %1082 = vmatpush1.bf16.msra.mxu0 %v1071
        %1083 = vmatprep.subr.bf16.mxu0 0
        %1084 = vmatpush1.bf16.msra.mxu0 %v1072
        %1085 = vmatprep.subr.bf16.mxu0 0
        %1086 = vmatpush1.bf16.msra.mxu0 %v1073
        %1087 = vmatprep.subr.bf16.mxu0 0
        %1088 = vmatpush1.bf16.msra.mxu0 %v1074
        %1089 = vmatprep.subr.bf16.mxu0 0
        %1090 = vmatpush1.bf16.msra.mxu0 %v1075
        %1091 = vmatprep.subr.bf16.mxu0 0
        %1092 = vmatpush1.bf16.msra.mxu0 %v1076
        %1093 = vmatprep.subr.bf16.mxu0 0
        %1094 = vmatpush1.bf16.msra.mxu0 0
        %1095 = vmatprep.subr.bf16.mxu0 0
        %1096 = vmatpush1.bf16.msra.mxu0 0
        %1097 = vmatprep.subr.bf16.mxu0 0
        %1098 = vmatpush1.bf16.msra.mxu0 0
        %1099 = vmatprep.subr.bf16.mxu0 0
        %1100 = vmatpush1.bf16.msra.mxu0 0
        %1101 = vmatprep.subr.bf16.mxu0 0
        %1102 = vmatpush1.bf16.msra.mxu0 0
        %1103 = vmatprep.subr.bf16.mxu0 0
        %1104 = vmatpush1.bf16.msra.mxu0 0
        %1105 = vmatprep.subr.bf16.mxu0 0
        %1106 = vmatpush1.bf16.msra.mxu0 0
        %1107 = vmatprep.subr.bf16.mxu0 0
        %1108 = vmatpush1.bf16.msra.mxu0 0
        %1109 = vmatprep.mubr.bf16.mxu0 0
        %1110 = vmatmul.mubr.bf16.gmra.mrb[0].mxu0 %v657
        %v1111 = vpop.f32.mrb[0].mxu0
        %v1112 = vadd.f32 0.0, %v1111
        %v1113 = vpop.f32.mrb[0].mxu0
        %v1114 = vpop.f32.mrb[0].mxu0
        %v1115 = vadd.f32 0.0, %v1114
        %v1116 = vpop.f32.mrb[0].mxu0
        %1117 = vmatprep.mubr.bf16.mxu0 0
        %1118 = vmatmul.mubr.bf16.gmra.mrb[0].mxu0 %v658
        %v1119 = vpop.f32.mrb[0].mxu0
        %v1120 = vadd.f32 0.0, %v1119
        %v1121 = vpop.f32.mrb[0].mxu0
        %v1122 = vpop.f32.mrb[0].mxu0
        %v1123 = vadd.f32 0.0, %v1122
        %v1124 = vpop.f32.mrb[0].mxu0
        %1125 = vmatprep.mubr.bf16.mxu0 0
        %1126 = vmatmul.mubr.bf16.gmra.mrb[0].mxu0 %v659
        %v1127 = vpop.f32.mrb[0].mxu0
        %v1128 = vadd.f32 0.0, %v1127
        %v1129 = vpop.f32.mrb[0].mxu0
        %v1130 = vpop.f32.mrb[0].mxu0
        %v1131 = vadd.f32 0.0, %v1130
        %v1132 = vpop.f32.mrb[0].mxu0
        %1133 = vmatprep.mubr.bf16.mxu0 0
        %1134 = vmatmul.mubr.bf16.gmra.mrb[0].mxu0 %v660
        %v1135 = vpop.f32.mrb[0].mxu0
        %v1136 = vadd.f32 0.0, %v1135
        %v1137 = vpop.f32.mrb[0].mxu0
        %v1138 = vpop.f32.mrb[0].mxu0
        %v1139 = vadd.f32 0.0, %v1138
        %v1140 = vpop.f32.mrb[0].mxu0
        %1141 = vmatprep.mubr.bf16.mxu0 0
        %1142 = vmatmul.mubr.bf16.gmra.mrb[0].mxu0 %v661
        %v1143 = vpop.f32.mrb[0].mxu0
        %v1144 = vadd.f32 0.0, %v1143
        %v1145 = vpop.f32.mrb[0].mxu0
        %v1146 = vpop.f32.mrb[0].mxu0
        %v1147 = vadd.f32 0.0, %v1146
        %v1148 = vpop.f32.mrb[0].mxu0
        %1149 = vmatprep.mubr.bf16.mxu0 0
        %1150 = vmatmul.mubr.bf16.gmra.mrb[0].mxu0 %v662
        %v1151 = vpop.f32.mrb[0].mxu0
        %v1152 = vadd.f32 0.0, %v1151
        %v1153 = vpop.f32.mrb[0].mxu0
        %v1154 = vpop.f32.mrb[0].mxu0
        %v1155 = vadd.f32 0.0, %v1154
        %v1156 = vpop.f32.mrb[0].mxu0
        %1157 = vmatprep.mubr.bf16.mxu0 0
        %1158 = vmatmul.mubr.bf16.gmra.mrb[0].mxu0 %v663
        %v1159 = vpop.f32.mrb[0].mxu0
        %v1160 = vadd.f32 0.0, %v1159
        %v1161 = vpop.f32.mrb[0].mxu0
        %v1162 = vpop.f32.mrb[0].mxu0
        %v1163 = vadd.f32 0.0, %v1162
        %v1164 = vpop.f32.mrb[0].mxu0
        %1165 = vmatprep.mubr.bf16.mxu0 0
        %1166 = vmatmul.mubr.bf16.gmra.mrb[0].mxu0 %v664
        %v1167 = vpop.f32.mrb[0].mxu0
        %v1168 = vadd.f32 0.0, %v1167
        %v1169 = vpop.f32.mrb[0].mxu0
        %v1170 = vpop.f32.mrb[0].mxu0
        %v1171 = vadd.f32 0.0, %v1170
        %v1172 = vpop.f32.mrb[0].mxu0
        %1173 = vdwg.mxu0
        %v1174 = vsub.f32 %v1112, %v358
        %v1175 = vsub.f32 %v1115, %v359
        %v1176 = vsub.f32 %v1120, %v360
        %v1177 = vsub.f32 %v1123, %v361
        %v1178 = vsub.f32 %v1128, %v362
        %v1179 = vsub.f32 %v1131, %v363
        %v1180 = vsub.f32 %v1136, %v364
        %v1181 = vsub.f32 %v1139, %v365
        %v1182 = vsub.f32 %v1144, %v366
        %v1183 = vsub.f32 %v1147, %v367
        %v1184 = vsub.f32 %v1152, %v368
        %v1185 = vsub.f32 %v1155, %v369
        %v1186 = vsub.f32 %v1160, %v370
        %v1187 = vsub.f32 %v1163, %v371
        %v1188 = vsub.f32 %v1168, %v372
        %v1189 = vsub.f32 %v1171, %v373
        %v1190 = vld [vmem:[%s308] sm:$0xff]
        %v1191 = vld [vmem:[%s308 + $0x8] sm:$0xff]
        %v1192 = vld [vmem:[%s308 + $0x10] sm:$0xff]
        %v1193 = vld [vmem:[%s308 + $0x18] sm:$0xff]
        %v1194 = vld [vmem:[%s308 + $0x20] sm:$0xff]
        %v1195 = vld [vmem:[%s308 + $0x28] sm:$0xff]
        %v1196 = vld [vmem:[%s308 + $0x30] sm:$0xff]
        %v1197 = vld [vmem:[%s308 + $0x38] sm:$0xff]
        %v1198 = vld [vmem:[%s308 + $0x40] sm:$0xff]
        %v1199 = vld [vmem:[%s308 + $0x48] sm:$0xff]
        %v1200 = vld [vmem:[%s308 + $0x50] sm:$0xff]
        %v1201 = vld [vmem:[%s308 + $0x58] sm:$0xff]
        %v1202 = vld [vmem:[%s308 + $0x60] sm:$0xff]
        %v1203 = vld [vmem:[%s308 + $0x68] sm:$0xff]
        %v1204 = vld [vmem:[%s308 + $0x70] sm:$0xff]
        %v1205 = vld [vmem:[%s308 + $0x78] sm:$0xff]
        %v1206 = vld [vmem:[%s308 + $0x80] sm:$0xff]
        %v1207 = vld [vmem:[%s308 + $0x88] sm:$0xff]
        %v1208 = vld [vmem:[%s308 + $0x90] sm:$0xff]
        %v1209 = vld [vmem:[%s308 + $0x98] sm:$0xff]
        %v1210 = vld [vmem:[%s308 + $0xa0] sm:$0xff]
        %v1211 = vld [vmem:[%s308 + $0xa8] sm:$0xff]
        %v1212 = vld [vmem:[%s308 + $0xb0] sm:$0xff]
        %v1213 = vld [vmem:[%s308 + $0xb8] sm:$0xff]
        %v1214 = vld [vmem:[%s308 + $0xc0] sm:$0xff]
        %v1215 = vld [vmem:[%s308 + $0xc8] sm:$0xff]
        %v1216 = vld [vmem:[%s308 + $0xd0] sm:$0xff]
        %v1217 = vld [vmem:[%s308 + $0xd8] sm:$0xff]
        %v1218 = vld [vmem:[%s308 + $0xe0] sm:$0xff]
        %v1219 = vld [vmem:[%s308 + $0xe8] sm:$0xff]
        %v1220 = vld [vmem:[%s308 + $0xf0] sm:$0xff]
        %v1221 = vld [vmem:[%s308 + $0xf8] sm:$0xff]
        %s1222 = sld [smem:[#allocation2 + $0x2]]
        %v1223 = vstv %s1222
        %v1224 = vmul.f32 %v1223, %v1174
        %v1225 = vmul.f32 %v1223, %v1175
        %v1226 = vmul.f32 %v1223, %v1176
        %v1227 = vmul.f32 %v1223, %v1177
        %v1228 = vmul.f32 %v1223, %v1178
        %v1229 = vmul.f32 %v1223, %v1179
        %v1230 = vmul.f32 %v1223, %v1180
        %v1231 = vmul.f32 %v1223, %v1181
        %v1232 = vmul.f32 %v1223, %v1182
        %v1233 = vmul.f32 %v1223, %v1183
        %v1234 = vmul.f32 %v1223, %v1184
        %v1235 = vmul.f32 %v1223, %v1185
        %v1236 = vmul.f32 %v1223, %v1186
        %v1237 = vmul.f32 %v1223, %v1187
        %v1238 = vmul.f32 %v1223, %v1188
        %v1239 = vmul.f32 %v1223, %v1189
        %v1240 = vpack.c.bf16 %v1225, %v1224
        %v1241 = vpack.c.bf16 %v1227, %v1226
        %v1242 = vpack.c.bf16 %v1229, %v1228
        %v1243 = vpack.c.bf16 %v1231, %v1230
        %v1244 = vpack.c.bf16 %v1233, %v1232
        %v1245 = vpack.c.bf16 %v1235, %v1234
        %v1246 = vpack.c.bf16 %v1237, %v1236
        %v1247 = vpack.c.bf16 %v1239, %v1238
        %1248 = vmatprep.subr.bf16.mxu0 %v449
        %1249 = vmatpush1.bf16.msra.mxu0 %v448
        %1250 = vmatprep.subr.bf16.mxu0 %v451
        %1251 = vmatpush1.bf16.msra.mxu0 %v450
        %1252 = vmatprep.subr.bf16.mxu0 %v453
        %1253 = vmatpush1.bf16.msra.mxu0 %v452
        %1254 = vmatprep.subr.bf16.mxu0 %v455
        %1255 = vmatpush1.bf16.msra.mxu0 %v454
        %1256 = vmatprep.subr.bf16.mxu0 %v457
        %1257 = vmatpush1.bf16.msra.mxu0 %v456
        %1258 = vmatprep.subr.bf16.mxu0 %v459
        %1259 = vmatpush1.bf16.msra.mxu0 %v458
        %1260 = vmatprep.subr.bf16.mxu0 %v461
        %1261 = vmatpush1.bf16.msra.mxu0 %v460
        %1262 = vmatprep.subr.bf16.mxu0 %v463
        %1263 = vmatpush1.bf16.msra.mxu0 %v462
        %1264 = vmatprep.subr.bf16.mxu0 0
        %1265 = vmatpush1.bf16.msra.mxu0 0
        %1266 = vmatprep.subr.bf16.mxu0 0
        %1267 = vmatpush1.bf16.msra.mxu0 0
        %1268 = vmatprep.subr.bf16.mxu0 0
        %1269 = vmatpush1.bf16.msra.mxu0 0
        %1270 = vmatprep.subr.bf16.mxu0 0
        %1271 = vmatpush1.bf16.msra.mxu0 0
        %1272 = vmatprep.subr.bf16.mxu0 0
        %1273 = vmatpush1.bf16.msra.mxu0 0
        %1274 = vmatprep.subr.bf16.mxu0 0
        %1275 = vmatpush1.bf16.msra.mxu0 0
        %1276 = vmatprep.subr.bf16.mxu0 0
        %1277 = vmatpush1.bf16.msra.mxu0 0
        %1278 = vmatprep.subr.bf16.mxu0 0
        %1279 = vmatpush1.bf16.msra.mxu0 0
        %1280 = vmatprep.mubr.bf16.mxu0 0
        %1281 = vmatmul.mubr.bf16.gmra.mrb[0].mxu0 %v1240
        %v1282 = vpop.f32.mrb[0].mxu0
        %v1283 = vadd.f32 0.0, %v1282
        %v1284 = vpop.f32.mrb[0].mxu0
        %v1285 = vadd.f32 0.0, %v1284
        %v1286 = vpop.f32.mrb[0].mxu0
        %v1287 = vadd.f32 0.0, %v1286
        %v1288 = vpop.f32.mrb[0].mxu0
        %v1289 = vadd.f32 0.0, %v1288
        %1290 = vmatprep.mubr.bf16.mxu0 0
        %1291 = vmatmul.mubr.bf16.gmra.mrb[0].mxu0 %v1241
        %v1292 = vpop.f32.mrb[0].mxu0
        %v1293 = vadd.f32 0.0, %v1292
        %v1294 = vpop.f32.mrb[0].mxu0
        %v1295 = vadd.f32 0.0, %v1294
        %v1296 = vpop.f32.mrb[0].mxu0
        %v1297 = vadd.f32 0.0, %v1296
        %v1298 = vpop.f32.mrb[0].mxu0
        %v1299 = vadd.f32 0.0, %v1298
        %1300 = vmatprep.mubr.bf16.mxu0 0
        %1301 = vmatmul.mubr.bf16.gmra.mrb[0].mxu0 %v1242
        %v1302 = vpop.f32.mrb[0].mxu0
        %v1303 = vadd.f32 0.0, %v1302
        %v1304 = vpop.f32.mrb[0].mxu0
        %v1305 = vadd.f32 0.0, %v1304
        %v1306 = vpop.f32.mrb[0].mxu0
        %v1307 = vadd.f32 0.0, %v1306
        %v1308 = vpop.f32.mrb[0].mxu0
        %v1309 = vadd.f32 0.0, %v1308
        %1310 = vmatprep.mubr.bf16.mxu0 0
        %1311 = vmatmul.mubr.bf16.gmra.mrb[0].mxu0 %v1243
        %v1312 = vpop.f32.mrb[0].mxu0
        %v1313 = vadd.f32 0.0, %v1312
        %v1314 = vpop.f32.mrb[0].mxu0
        %v1315 = vadd.f32 0.0, %v1314
        %v1316 = vpop.f32.mrb[0].mxu0
        %v1317 = vadd.f32 0.0, %v1316
        %v1318 = vpop.f32.mrb[0].mxu0
        %v1319 = vadd.f32 0.0, %v1318
        %1320 = vmatprep.mubr.bf16.mxu0 0
        %1321 = vmatmul.mubr.bf16.gmra.mrb[0].mxu0 %v1244
        %v1322 = vpop.f32.mrb[0].mxu0
        %v1323 = vadd.f32 0.0, %v1322
        %v1324 = vpop.f32.mrb[0].mxu0
        %v1325 = vadd.f32 0.0, %v1324
        %v1326 = vpop.f32.mrb[0].mxu0
        %v1327 = vadd.f32 0.0, %v1326
        %v1328 = vpop.f32.mrb[0].mxu0
        %v1329 = vadd.f32 0.0, %v1328
        %1330 = vmatprep.mubr.bf16.mxu0 0
        %1331 = vmatmul.mubr.bf16.gmra.mrb[0].mxu0 %v1245
        %v1332 = vpop.f32.mrb[0].mxu0
        %v1333 = vadd.f32 0.0, %v1332
        %v1334 = vpop.f32.mrb[0].mxu0
        %v1335 = vadd.f32 0.0, %v1334
        %v1336 = vpop.f32.mrb[0].mxu0
        %v1337 = vadd.f32 0.0, %v1336
        %v1338 = vpop.f32.mrb[0].mxu0
        %v1339 = vadd.f32 0.0, %v1338
        %1340 = vmatprep.mubr.bf16.mxu0 0
        %1341 = vmatmul.mubr.bf16.gmra.mrb[0].mxu0 %v1246
        %v1342 = vpop.f32.mrb[0].mxu0
        %v1343 = vadd.f32 0.0, %v1342
        %v1344 = vpop.f32.mrb[0].mxu0
        %v1345 = vadd.f32 0.0, %v1344
        %v1346 = vpop.f32.mrb[0].mxu0
        %v1347 = vadd.f32 0.0, %v1346
        %v1348 = vpop.f32.mrb[0].mxu0
        %v1349 = vadd.f32 0.0, %v1348
        %1350 = vmatprep.mubr.bf16.mxu0 0
        %1351 = vmatmul.mubr.bf16.gmra.mrb[0].mxu0 %v1247
        %v1352 = vpop.f32.mrb[0].mxu0
        %v1353 = vadd.f32 0.0, %v1352
        %v1354 = vpop.f32.mrb[0].mxu0
        %v1355 = vadd.f32 0.0, %v1354
        %v1356 = vpop.f32.mrb[0].mxu0
        %v1357 = vadd.f32 0.0, %v1356
        %v1358 = vpop.f32.mrb[0].mxu0
        %v1359 = vadd.f32 0.0, %v1358
        %1360 = vdwg.mxu0
        %v1361 = vadd.f32 %v1190, %v1283
        %v1362 = vadd.f32 %v1191, %v1285
        %v1363 = vadd.f32 %v1192, %v1287
        %v1364 = vadd.f32 %v1193, %v1289
        %v1365 = vadd.f32 %v1194, %v1293
        %v1366 = vadd.f32 %v1195, %v1295
        %v1367 = vadd.f32 %v1196, %v1297
        %v1368 = vadd.f32 %v1197, %v1299
        %v1369 = vadd.f32 %v1198, %v1303
        %v1370 = vadd.f32 %v1199, %v1305
        %v1371 = vadd.f32 %v1200, %v1307
        %v1372 = vadd.f32 %v1201, %v1309
        %v1373 = vadd.f32 %v1202, %v1313
        %v1374 = vadd.f32 %v1203, %v1315
        %v1375 = vadd.f32 %v1204, %v1317
        %v1376 = vadd.f32 %v1205, %v1319
        %v1377 = vadd.f32 %v1206, %v1323
        %v1378 = vadd.f32 %v1207, %v1325
        %v1379 = vadd.f32 %v1208, %v1327
        %v1380 = vadd.f32 %v1209, %v1329
        %v1381 = vadd.f32 %v1210, %v1333
        %v1382 = vadd.f32 %v1211, %v1335
        %v1383 = vadd.f32 %v1212, %v1337
        %v1384 = vadd.f32 %v1213, %v1339
        %v1385 = vadd.f32 %v1214, %v1343
        %v1386 = vadd.f32 %v1215, %v1345
        %v1387 = vadd.f32 %v1216, %v1347
        %v1388 = vadd.f32 %v1217, %v1349
        %v1389 = vadd.f32 %v1218, %v1353
        %v1390 = vadd.f32 %v1219, %v1355
        %v1391 = vadd.f32 %v1220, %v1357
        %v1392 = vadd.f32 %v1221, %v1359
        %1393 = vst [vmem:[%s308] sm:$0xff] %v1361
        %1394 = vst [vmem:[%s308 + $0x8] sm:$0xff] %v1362
        %1395 = vst [vmem:[%s308 + $0x10] sm:$0xff] %v1363
        %1396 = vst [vmem:[%s308 + $0x18] sm:$0xff] %v1364
        %1397 = vst [vmem:[%s308 + $0x20] sm:$0xff] %v1365
        %1398 = vst [vmem:[%s308 + $0x28] sm:$0xff] %v1366
        %1399 = vst [vmem:[%s308 + $0x30] sm:$0xff] %v1367
        %1400 = vst [vmem:[%s308 + $0x38] sm:$0xff] %v1368
        %1401 = vst [vmem:[%s308 + $0x40] sm:$0xff] %v1369
        %1402 = vst [vmem:[%s308 + $0x48] sm:$0xff] %v1370
        %1403 = vst [vmem:[%s308 + $0x50] sm:$0xff] %v1371
        %1404 = vst [vmem:[%s308 + $0x58] sm:$0xff] %v1372
        %1405 = vst [vmem:[%s308 + $0x60] sm:$0xff] %v1373
        %1406 = vst [vmem:[%s308 + $0x68] sm:$0xff] %v1374
        %1407 = vst [vmem:[%s308 + $0x70] sm:$0xff] %v1375
        %1408 = vst [vmem:[%s308 + $0x78] sm:$0xff] %v1376
        %1409 = vst [vmem:[%s308 + $0x80] sm:$0xff] %v1377
        %1410 = vst [vmem:[%s308 + $0x88] sm:$0xff] %v1378
        %1411 = vst [vmem:[%s308 + $0x90] sm:$0xff] %v1379
        %1412 = vst [vmem:[%s308 + $0x98] sm:$0xff] %v1380
        %1413 = vst [vmem:[%s308 + $0xa0] sm:$0xff] %v1381
        %1414 = vst [vmem:[%s308 + $0xa8] sm:$0xff] %v1382
        %1415 = vst [vmem:[%s308 + $0xb0] sm:$0xff] %v1383
        %1416 = vst [vmem:[%s308 + $0xb8] sm:$0xff] %v1384
        %1417 = vst [vmem:[%s308 + $0xc0] sm:$0xff] %v1385
        %1418 = vst [vmem:[%s308 + $0xc8] sm:$0xff] %v1386
        %1419 = vst [vmem:[%s308 + $0xd0] sm:$0xff] %v1387
        %1420 = vst [vmem:[%s308 + $0xd8] sm:$0xff] %v1388
        %1421 = vst [vmem:[%s308 + $0xe0] sm:$0xff] %v1389
        %1422 = vst [vmem:[%s308 + $0xe8] sm:$0xff] %v1390
        %1423 = vst [vmem:[%s308 + $0xf0] sm:$0xff] %v1391
        %1424 = vst [vmem:[%s308 + $0xf8] sm:$0xff] %v1392
        %v1425 = vmul.f32 %v1174, 2.0
        %v1426 = vmul.f32 %v1175, 2.0
        %v1427 = vmul.f32 %v1176, 2.0
        %v1428 = vmul.f32 %v1177, 2.0
        %v1429 = vmul.f32 %v1178, 2.0
        %v1430 = vmul.f32 %v1179, 2.0
        %v1431 = vmul.f32 %v1180, 2.0
        %v1432 = vmul.f32 %v1181, 2.0
        %v1433 = vmul.f32 %v1182, 2.0
        %v1434 = vmul.f32 %v1183, 2.0
        %v1435 = vmul.f32 %v1184, 2.0
        %v1436 = vmul.f32 %v1185, 2.0
        %v1437 = vmul.f32 %v1186, 2.0
        %v1438 = vmul.f32 %v1187, 2.0
        %v1439 = vmul.f32 %v1188, 2.0
        %v1440 = vmul.f32 %v1189, 2.0
        %v1441 = vpack.c.bf16 %v1426, %v1425
        %v1442 = vpack.c.bf16 %v1428, %v1427
        %v1443 = vpack.c.bf16 %v1430, %v1429
        %v1444 = vpack.c.bf16 %v1432, %v1431
        %v1445 = vpack.c.bf16 %v1434, %v1433
        %v1446 = vpack.c.bf16 %v1436, %v1435
        %v1447 = vpack.c.bf16 %v1438, %v1437
        %v1448 = vpack.c.bf16 %v1440, %v1439
        %1449 = vmatprep.subr.bf16.mxu0 0
        %1450 = vmatpush1.bf16.msra.mxu0 %v1441
        %1451 = vmatprep.subr.bf16.mxu0 0
        %1452 = vmatpush1.bf16.msra.mxu0 %v1442
        %1453 = vmatprep.subr.bf16.mxu0 0
        %1454 = vmatpush1.bf16.msra.mxu0 %v1443
        %1455 = vmatprep.subr.bf16.mxu0 0
        %1456 = vmatpush1.bf16.msra.mxu0 %v1444
        %1457 = vmatprep.subr.bf16.mxu0 0
        %1458 = vmatpush1.bf16.msra.mxu0 %v1445
        %1459 = vmatprep.subr.bf16.mxu0 0
        %1460 = vmatpush1.bf16.msra.mxu0 %v1446
        %1461 = vmatprep.subr.bf16.mxu0 0
        %1462 = vmatpush1.bf16.msra.mxu0 %v1447
        %1463 = vmatprep.subr.bf16.mxu0 0
        %1464 = vmatpush1.bf16.msra.mxu0 %v1448
        %1465 = vmatprep.subr.bf16.mxu0 0
        %1466 = vmatpush1.bf16.msra.mxu0 0
        %1467 = vmatprep.subr.bf16.mxu0 0
        %1468 = vmatpush1.bf16.msra.mxu0 0
        %1469 = vmatprep.subr.bf16.mxu0 0
        %1470 = vmatpush1.bf16.msra.mxu0 0
        %1471 = vmatprep.subr.bf16.mxu0 0
        %1472 = vmatpush1.bf16.msra.mxu0 0
        %1473 = vmatprep.subr.bf16.mxu0 0
        %1474 = vmatpush1.bf16.msra.mxu0 0
        %1475 = vmatprep.subr.bf16.mxu0 0
        %1476 = vmatpush1.bf16.msra.mxu0 0
        %1477 = vmatprep.subr.bf16.mxu0 0
        %1478 = vmatpush1.bf16.msra.mxu0 0
        %1479 = vmatprep.subr.bf16.mxu0 0
        %1480 = vmatpush1.bf16.msra.mxu0 0
        %1481 = vmatprep.mubr.bf16.mxu0 0
        %1482 = vmatmul.mubr.bf16.gmra.mrb[0].mxu0 %v657
        %v1483 = vpop.f32.mrb[0].mxu0
        %v1484 = vadd.f32 0.0, %v1483
        %v1485 = vpop.f32.mrb[0].mxu0
        %v1486 = vpop.f32.mrb[0].mxu0
        %v1487 = vadd.f32 0.0, %v1486
        %v1488 = vpop.f32.mrb[0].mxu0
        %1489 = vmatprep.mubr.bf16.mxu0 0
        %1490 = vmatmul.mubr.bf16.gmra.mrb[0].mxu0 %v658
        %v1491 = vpop.f32.mrb[0].mxu0
        %v1492 = vadd.f32 0.0, %v1491
        %v1493 = vpop.f32.mrb[0].mxu0
        %v1494 = vpop.f32.mrb[0].mxu0
        %v1495 = vadd.f32 0.0, %v1494
        %v1496 = vpop.f32.mrb[0].mxu0
        %1497 = vmatprep.mubr.bf16.mxu0 0
        %1498 = vmatmul.mubr.bf16.gmra.mrb[0].mxu0 %v659
        %v1499 = vpop.f32.mrb[0].mxu0
        %v1500 = vadd.f32 0.0, %v1499
        %v1501 = vpop.f32.mrb[0].mxu0
        %v1502 = vpop.f32.mrb[0].mxu0
        %v1503 = vadd.f32 0.0, %v1502
        %v1504 = vpop.f32.mrb[0].mxu0
        %1505 = vmatprep.mubr.bf16.mxu0 0
        %1506 = vmatmul.mubr.bf16.gmra.mrb[0].mxu0 %v660
        %v1507 = vpop.f32.mrb[0].mxu0
        %v1508 = vadd.f32 0.0, %v1507
        %v1509 = vpop.f32.mrb[0].mxu0
        %v1510 = vpop.f32.mrb[0].mxu0
        %v1511 = vadd.f32 0.0, %v1510
        %v1512 = vpop.f32.mrb[0].mxu0
        %1513 = vmatprep.mubr.bf16.mxu0 0
        %1514 = vmatmul.mubr.bf16.gmra.mrb[0].mxu0 %v661
        %v1515 = vpop.f32.mrb[0].mxu0
        %v1516 = vadd.f32 0.0, %v1515
        %v1517 = vpop.f32.mrb[0].mxu0
        %v1518 = vpop.f32.mrb[0].mxu0
        %v1519 = vadd.f32 0.0, %v1518
        %v1520 = vpop.f32.mrb[0].mxu0
        %1521 = vmatprep.mubr.bf16.mxu0 0
        %1522 = vmatmul.mubr.bf16.gmra.mrb[0].mxu0 %v662
        %v1523 = vpop.f32.mrb[0].mxu0
        %v1524 = vadd.f32 0.0, %v1523
        %v1525 = vpop.f32.mrb[0].mxu0
        %v1526 = vpop.f32.mrb[0].mxu0
        %v1527 = vadd.f32 0.0, %v1526
        %v1528 = vpop.f32.mrb[0].mxu0
        %1529 = vmatprep.mubr.bf16.mxu0 0
        %1530 = vmatmul.mubr.bf16.gmra.mrb[0].mxu0 %v663
        %v1531 = vpop.f32.mrb[0].mxu0
        %v1532 = vadd.f32 0.0, %v1531
        %v1533 = vpop.f32.mrb[0].mxu0
        %v1534 = vpop.f32.mrb[0].mxu0
        %v1535 = vadd.f32 0.0, %v1534
        %v1536 = vpop.f32.mrb[0].mxu0
        %1537 = vmatprep.mubr.bf16.mxu0 0
        %1538 = vmatmul.mubr.bf16.gmra.mrb[0].mxu0 %v664
        %v1539 = vpop.f32.mrb[0].mxu0
        %v1540 = vadd.f32 0.0, %v1539
        %v1541 = vpop.f32.mrb[0].mxu0
        %v1542 = vpop.f32.mrb[0].mxu0
        %v1543 = vadd.f32 0.0, %v1542
        %v1544 = vpop.f32.mrb[0].mxu0
        %1545 = vdwg.mxu0
        %v1546 = vsub.f32 %v1484, %v756
        %v1547 = vsub.f32 %v1487, %v759
        %v1548 = vsub.f32 %v1492, %v764
        %v1549 = vsub.f32 %v1495, %v767
        %v1550 = vsub.f32 %v1500, %v772
        %v1551 = vsub.f32 %v1503, %v775
        %v1552 = vsub.f32 %v1508, %v780
        %v1553 = vsub.f32 %v1511, %v783
        %v1554 = vsub.f32 %v1516, %v788
        %v1555 = vsub.f32 %v1519, %v791
        %v1556 = vsub.f32 %v1524, %v796
        %v1557 = vsub.f32 %v1527, %v799
        %v1558 = vsub.f32 %v1532, %v804
        %v1559 = vsub.f32 %v1535, %v807
        %v1560 = vsub.f32 %v1540, %v812
        %v1561 = vsub.f32 %v1543, %v815
        %v1562 = vld [vmem:[%s308] sm:$0xff]
        %v1563 = vld [vmem:[%s308 + $0x8] sm:$0xff]
        %v1564 = vld [vmem:[%s308 + $0x10] sm:$0xff]
        %v1565 = vld [vmem:[%s308 + $0x18] sm:$0xff]
        %v1566 = vld [vmem:[%s308 + $0x20] sm:$0xff]
        %v1567 = vld [vmem:[%s308 + $0x28] sm:$0xff]
        %v1568 = vld [vmem:[%s308 + $0x30] sm:$0xff]
        %v1569 = vld [vmem:[%s308 + $0x38] sm:$0xff]
        %v1570 = vld [vmem:[%s308 + $0x40] sm:$0xff]
        %v1571 = vld [vmem:[%s308 + $0x48] sm:$0xff]
        %v1572 = vld [vmem:[%s308 + $0x50] sm:$0xff]
        %v1573 = vld [vmem:[%s308 + $0x58] sm:$0xff]
        %v1574 = vld [vmem:[%s308 + $0x60] sm:$0xff]
        %v1575 = vld [vmem:[%s308 + $0x68] sm:$0xff]
        %v1576 = vld [vmem:[%s308 + $0x70] sm:$0xff]
        %v1577 = vld [vmem:[%s308 + $0x78] sm:$0xff]
        %v1578 = vld [vmem:[%s308 + $0x80] sm:$0xff]
        %v1579 = vld [vmem:[%s308 + $0x88] sm:$0xff]
        %v1580 = vld [vmem:[%s308 + $0x90] sm:$0xff]
        %v1581 = vld [vmem:[%s308 + $0x98] sm:$0xff]
        %v1582 = vld [vmem:[%s308 + $0xa0] sm:$0xff]
        %v1583 = vld [vmem:[%s308 + $0xa8] sm:$0xff]
        %v1584 = vld [vmem:[%s308 + $0xb0] sm:$0xff]
        %v1585 = vld [vmem:[%s308 + $0xb8] sm:$0xff]
        %v1586 = vld [vmem:[%s308 + $0xc0] sm:$0xff]
        %v1587 = vld [vmem:[%s308 + $0xc8] sm:$0xff]
        %v1588 = vld [vmem:[%s308 + $0xd0] sm:$0xff]
        %v1589 = vld [vmem:[%s308 + $0xd8] sm:$0xff]
        %v1590 = vld [vmem:[%s308 + $0xe0] sm:$0xff]
        %v1591 = vld [vmem:[%s308 + $0xe8] sm:$0xff]
        %v1592 = vld [vmem:[%s308 + $0xf0] sm:$0xff]
        %v1593 = vld [vmem:[%s308 + $0xf8] sm:$0xff]
        %s1594 = sld [smem:[#allocation2 + $0x3]]
        %v1595 = vstv %s1594
        %v1596 = vmul.f32 %v1595, %v1546
        %v1597 = vmul.f32 %v1595, %v1547
        %v1598 = vmul.f32 %v1595, %v1548
        %v1599 = vmul.f32 %v1595, %v1549
        %v1600 = vmul.f32 %v1595, %v1550
        %v1601 = vmul.f32 %v1595, %v1551
        %v1602 = vmul.f32 %v1595, %v1552
        %v1603 = vmul.f32 %v1595, %v1553
        %v1604 = vmul.f32 %v1595, %v1554
        %v1605 = vmul.f32 %v1595, %v1555
        %v1606 = vmul.f32 %v1595, %v1556
        %v1607 = vmul.f32 %v1595, %v1557
        %v1608 = vmul.f32 %v1595, %v1558
        %v1609 = vmul.f32 %v1595, %v1559
        %v1610 = vmul.f32 %v1595, %v1560
        %v1611 = vmul.f32 %v1595, %v1561
        %v1612 = vpack.c.bf16 %v1597, %v1596
        %v1613 = vpack.c.bf16 %v1599, %v1598
        %v1614 = vpack.c.bf16 %v1601, %v1600
        %v1615 = vpack.c.bf16 %v1603, %v1602
        %v1616 = vpack.c.bf16 %v1605, %v1604
        %v1617 = vpack.c.bf16 %v1607, %v1606
        %v1618 = vpack.c.bf16 %v1609, %v1608
        %v1619 = vpack.c.bf16 %v1611, %v1610
        %1620 = vmatprep.subr.bf16.mxu0 %v449
        %1621 = vmatpush1.bf16.msra.mxu0 %v448
        %1622 = vmatprep.subr.bf16.mxu0 %v451
        %1623 = vmatpush1.bf16.msra.mxu0 %v450
        %1624 = vmatprep.subr.bf16.mxu0 %v453
        %1625 = vmatpush1.bf16.msra.mxu0 %v452
        %1626 = vmatprep.subr.bf16.mxu0 %v455
        %1627 = vmatpush1.bf16.msra.mxu0 %v454
        %1628 = vmatprep.subr.bf16.mxu0 %v457
        %1629 = vmatpush1.bf16.msra.mxu0 %v456
        %1630 = vmatprep.subr.bf16.mxu0 %v459
        %1631 = vmatpush1.bf16.msra.mxu0 %v458
        %1632 = vmatprep.subr.bf16.mxu0 %v461
        %1633 = vmatpush1.bf16.msra.mxu0 %v460
        %1634 = vmatprep.subr.bf16.mxu0 %v463
        %1635 = vmatpush1.bf16.msra.mxu0 %v462
        %1636 = vmatprep.subr.bf16.mxu0 0
        %1637 = vmatpush1.bf16.msra.mxu0 0
        %1638 = vmatprep.subr.bf16.mxu0 0
        %1639 = vmatpush1.bf16.msra.mxu0 0
        %1640 = vmatprep.subr.bf16.mxu0 0
        %1641 = vmatpush1.bf16.msra.mxu0 0
        %1642 = vmatprep.subr.bf16.mxu0 0
        %1643 = vmatpush1.bf16.msra.mxu0 0
        %1644 = vmatprep.subr.bf16.mxu0 0
        %1645 = vmatpush1.bf16.msra.mxu0 0
        %1646 = vmatprep.subr.bf16.mxu0 0
        %1647 = vmatpush1.bf16.msra.mxu0 0
        %1648 = vmatprep.subr.bf16.mxu0 0
        %1649 = vmatpush1.bf16.msra.mxu0 0
        %1650 = vmatprep.subr.bf16.mxu0 0
        %1651 = vmatpush1.bf16.msra.mxu0 0
        %1652 = vmatprep.mubr.bf16.mxu0 0
        %1653 = vmatmul.mubr.bf16.gmra.mrb[0].mxu0 %v1612
        %v1654 = vpop.f32.mrb[0].mxu0
        %v1655 = vadd.f32 0.0, %v1654
        %v1656 = vpop.f32.mrb[0].mxu0
        %v1657 = vadd.f32 0.0, %v1656
        %v1658 = vpop.f32.mrb[0].mxu0
        %v1659 = vadd.f32 0.0, %v1658
        %v1660 = vpop.f32.mrb[0].mxu0
        %v1661 = vadd.f32 0.0, %v1660
        %1662 = vmatprep.mubr.bf16.mxu0 0
        %1663 = vmatmul.mubr.bf16.gmra.mrb[0].mxu0 %v1613
        %v1664 = vpop.f32.mrb[0].mxu0
        %v1665 = vadd.f32 0.0, %v1664
        %v1666 = vpop.f32.mrb[0].mxu0
        %v1667 = vadd.f32 0.0, %v1666
        %v1668 = vpop.f32.mrb[0].mxu0
        %v1669 = vadd.f32 0.0, %v1668
        %v1670 = vpop.f32.mrb[0].mxu0
        %v1671 = vadd.f32 0.0, %v1670
        %1672 = vmatprep.mubr.bf16.mxu0 0
        %1673 = vmatmul.mubr.bf16.gmra.mrb[0].mxu0 %v1614
        %v1674 = vpop.f32.mrb[0].mxu0
        %v1675 = vadd.f32 0.0, %v1674
        %v1676 = vpop.f32.mrb[0].mxu0
        %v1677 = vadd.f32 0.0, %v1676
        %v1678 = vpop.f32.mrb[0].mxu0
        %v1679 = vadd.f32 0.0, %v1678
        %v1680 = vpop.f32.mrb[0].mxu0
        %v1681 = vadd.f32 0.0, %v1680
        %1682 = vmatprep.mubr.bf16.mxu0 0
        %1683 = vmatmul.mubr.bf16.gmra.mrb[0].mxu0 %v1615
        %v1684 = vpop.f32.mrb[0].mxu0
        %v1685 = vadd.f32 0.0, %v1684
        %v1686 = vpop.f32.mrb[0].mxu0
        %v1687 = vadd.f32 0.0, %v1686
        %v1688 = vpop.f32.mrb[0].mxu0
        %v1689 = vadd.f32 0.0, %v1688
        %v1690 = vpop.f32.mrb[0].mxu0
        %v1691 = vadd.f32 0.0, %v1690
        %1692 = vmatprep.mubr.bf16.mxu0 0
        %1693 = vmatmul.mubr.bf16.gmra.mrb[0].mxu0 %v1616
        %v1694 = vpop.f32.mrb[0].mxu0
        %v1695 = vadd.f32 0.0, %v1694
        %v1696 = vpop.f32.mrb[0].mxu0
        %v1697 = vadd.f32 0.0, %v1696
        %v1698 = vpop.f32.mrb[0].mxu0
        %v1699 = vadd.f32 0.0, %v1698
        %v1700 = vpop.f32.mrb[0].mxu0
        %v1701 = vadd.f32 0.0, %v1700
        %1702 = vmatprep.mubr.bf16.mxu0 0
        %1703 = vmatmul.mubr.bf16.gmra.mrb[0].mxu0 %v1617
        %v1704 = vpop.f32.mrb[0].mxu0
        %v1705 = vadd.f32 0.0, %v1704
        %v1706 = vpop.f32.mrb[0].mxu0
        %v1707 = vadd.f32 0.0, %v1706
        %v1708 = vpop.f32.mrb[0].mxu0
        %v1709 = vadd.f32 0.0, %v1708
        %v1710 = vpop.f32.mrb[0].mxu0
        %v1711 = vadd.f32 0.0, %v1710
        %1712 = vmatprep.mubr.bf16.mxu0 0
        %1713 = vmatmul.mubr.bf16.gmra.mrb[0].mxu0 %v1618
        %v1714 = vpop.f32.mrb[0].mxu0
        %v1715 = vadd.f32 0.0, %v1714
        %v1716 = vpop.f32.mrb[0].mxu0
        %v1717 = vadd.f32 0.0, %v1716
        %v1718 = vpop.f32.mrb[0].mxu0
        %v1719 = vadd.f32 0.0, %v1718
        %v1720 = vpop.f32.mrb[0].mxu0
        %v1721 = vadd.f32 0.0, %v1720
        %1722 = vmatprep.mubr.bf16.mxu0 0
        %1723 = vmatmul.mubr.bf16.gmra.mrb[0].mxu0 %v1619
        %v1724 = vpop.f32.mrb[0].mxu0
        %v1725 = vadd.f32 0.0, %v1724
        %v1726 = vpop.f32.mrb[0].mxu0
        %v1727 = vadd.f32 0.0, %v1726
        %v1728 = vpop.f32.mrb[0].mxu0
        %v1729 = vadd.f32 0.0, %v1728
        %v1730 = vpop.f32.mrb[0].mxu0
        %v1731 = vadd.f32 0.0, %v1730
        %1732 = vdwg.mxu0
        %v1733 = vadd.f32 %v1562, %v1655
        %v1734 = vadd.f32 %v1563, %v1657
        %v1735 = vadd.f32 %v1564, %v1659
        %v1736 = vadd.f32 %v1565, %v1661
        %v1737 = vadd.f32 %v1566, %v1665
        %v1738 = vadd.f32 %v1567, %v1667
        %v1739 = vadd.f32 %v1568, %v1669
        %v1740 = vadd.f32 %v1569, %v1671
        %v1741 = vadd.f32 %v1570, %v1675
        %v1742 = vadd.f32 %v1571, %v1677
        %v1743 = vadd.f32 %v1572, %v1679
        %v1744 = vadd.f32 %v1573, %v1681
        %v1745 = vadd.f32 %v1574, %v1685
        %v1746 = vadd.f32 %v1575, %v1687
        %v1747 = vadd.f32 %v1576, %v1689
        %v1748 = vadd.f32 %v1577, %v1691
        %v1749 = vadd.f32 %v1578, %v1695
        %v1750 = vadd.f32 %v1579, %v1697
        %v1751 = vadd.f32 %v1580, %v1699
        %v1752 = vadd.f32 %v1581, %v1701
        %v1753 = vadd.f32 %v1582, %v1705
        %v1754 = vadd.f32 %v1583, %v1707
        %v1755 = vadd.f32 %v1584, %v1709
        %v1756 = vadd.f32 %v1585, %v1711
        %v1757 = vadd.f32 %v1586, %v1715
        %v1758 = vadd.f32 %v1587, %v1717
        %v1759 = vadd.f32 %v1588, %v1719
        %v1760 = vadd.f32 %v1589, %v1721
        %v1761 = vadd.f32 %v1590, %v1725
        %v1762 = vadd.f32 %v1591, %v1727
        %v1763 = vadd.f32 %v1592, %v1729
        %v1764 = vadd.f32 %v1593, %v1731
        %1765 = vst [vmem:[%s308] sm:$0xff] %v1733
        %1766 = vst [vmem:[%s308 + $0x8] sm:$0xff] %v1734
        %1767 = vst [vmem:[%s308 + $0x10] sm:$0xff] %v1735
        %1768 = vst [vmem:[%s308 + $0x18] sm:$0xff] %v1736
        %1769 = vst [vmem:[%s308 + $0x20] sm:$0xff] %v1737
        %1770 = vst [vmem:[%s308 + $0x28] sm:$0xff] %v1738
        %1771 = vst [vmem:[%s308 + $0x30] sm:$0xff] %v1739
        %1772 = vst [vmem:[%s308 + $0x38] sm:$0xff] %v1740
        %1773 = vst [vmem:[%s308 + $0x40] sm:$0xff] %v1741
        %1774 = vst [vmem:[%s308 + $0x48] sm:$0xff] %v1742
        %1775 = vst [vmem:[%s308 + $0x50] sm:$0xff] %v1743
        %1776 = vst [vmem:[%s308 + $0x58] sm:$0xff] %v1744
        %1777 = vst [vmem:[%s308 + $0x60] sm:$0xff] %v1745
        %1778 = vst [vmem:[%s308 + $0x68] sm:$0xff] %v1746
        %1779 = vst [vmem:[%s308 + $0x70] sm:$0xff] %v1747
        %1780 = vst [vmem:[%s308 + $0x78] sm:$0xff] %v1748
        %1781 = vst [vmem:[%s308 + $0x80] sm:$0xff] %v1749
        %1782 = vst [vmem:[%s308 + $0x88] sm:$0xff] %v1750
        %1783 = vst [vmem:[%s308 + $0x90] sm:$0xff] %v1751
        %1784 = vst [vmem:[%s308 + $0x98] sm:$0xff] %v1752
        %1785 = vst [vmem:[%s308 + $0xa0] sm:$0xff] %v1753
        %1786 = vst [vmem:[%s308 + $0xa8] sm:$0xff] %v1754
        %1787 = vst [vmem:[%s308 + $0xb0] sm:$0xff] %v1755
        %1788 = vst [vmem:[%s308 + $0xb8] sm:$0xff] %v1756
        %1789 = vst [vmem:[%s308 + $0xc0] sm:$0xff] %v1757
        %1790 = vst [vmem:[%s308 + $0xc8] sm:$0xff] %v1758
        %1791 = vst [vmem:[%s308 + $0xd0] sm:$0xff] %v1759
        %1792 = vst [vmem:[%s308 + $0xd8] sm:$0xff] %v1760
        %1793 = vst [vmem:[%s308 + $0xe0] sm:$0xff] %v1761
        %1794 = vst [vmem:[%s308 + $0xe8] sm:$0xff] %v1762
        %1795 = vst [vmem:[%s308 + $0xf0] sm:$0xff] %v1763
        %1796 = vst [vmem:[%s308 + $0xf8] sm:$0xff] %v1764
        %v1797 = vmul.f32 %v1546, 2.0
        %v1798 = vmul.f32 %v1547, 2.0
        %v1799 = vmul.f32 %v1548, 2.0
        %v1800 = vmul.f32 %v1549, 2.0
        %v1801 = vmul.f32 %v1550, 2.0
        %v1802 = vmul.f32 %v1551, 2.0
        %v1803 = vmul.f32 %v1552, 2.0
        %v1804 = vmul.f32 %v1553, 2.0
        %v1805 = vmul.f32 %v1554, 2.0
        %v1806 = vmul.f32 %v1555, 2.0
        %v1807 = vmul.f32 %v1556, 2.0
        %v1808 = vmul.f32 %v1557, 2.0
        %v1809 = vmul.f32 %v1558, 2.0
        %v1810 = vmul.f32 %v1559, 2.0
        %v1811 = vmul.f32 %v1560, 2.0
        %v1812 = vmul.f32 %v1561, 2.0
        %v1813 = vpack.c.bf16 %v1798, %v1797
        %v1814 = vpack.c.bf16 %v1800, %v1799
        %v1815 = vpack.c.bf16 %v1802, %v1801
        %v1816 = vpack.c.bf16 %v1804, %v1803
        %v1817 = vpack.c.bf16 %v1806, %v1805
        %v1818 = vpack.c.bf16 %v1808, %v1807
        %v1819 = vpack.c.bf16 %v1810, %v1809
        %v1820 = vpack.c.bf16 %v1812, %v1811
        %1821 = vmatprep.subr.bf16.mxu0 0
        %1822 = vmatpush1.bf16.msra.mxu0 %v1813
        %1823 = vmatprep.subr.bf16.mxu0 0
        %1824 = vmatpush1.bf16.msra.mxu0 %v1814
        %1825 = vmatprep.subr.bf16.mxu0 0
        %1826 = vmatpush1.bf16.msra.mxu0 %v1815
        %1827 = vmatprep.subr.bf16.mxu0 0
        %1828 = vmatpush1.bf16.msra.mxu0 %v1816
        %1829 = vmatprep.subr.bf16.mxu0 0
        %1830 = vmatpush1.bf16.msra.mxu0 %v1817
        %1831 = vmatprep.subr.bf16.mxu0 0
        %1832 = vmatpush1.bf16.msra.mxu0 %v1818
        %1833 = vmatprep.subr.bf16.mxu0 0
        %1834 = vmatpush1.bf16.msra.mxu0 %v1819
        %1835 = vmatprep.subr.bf16.mxu0 0
        %1836 = vmatpush1.bf16.msra.mxu0 %v1820
        %1837 = vmatprep.subr.bf16.mxu0 0
        %1838 = vmatpush1.bf16.msra.mxu0 0
        %1839 = vmatprep.subr.bf16.mxu0 0
        %1840 = vmatpush1.bf16.msra.mxu0 0
        %1841 = vmatprep.subr.bf16.mxu0 0
        %1842 = vmatpush1.bf16.msra.mxu0 0
        %1843 = vmatprep.subr.bf16.mxu0 0
        %1844 = vmatpush1.bf16.msra.mxu0 0
        %1845 = vmatprep.subr.bf16.mxu0 0
        %1846 = vmatpush1.bf16.msra.mxu0 0
        %1847 = vmatprep.subr.bf16.mxu0 0
        %1848 = vmatpush1.bf16.msra.mxu0 0
        %1849 = vmatprep.subr.bf16.mxu0 0
        %1850 = vmatpush1.bf16.msra.mxu0 0
        %1851 = vmatprep.subr.bf16.mxu0 0
        %1852 = vmatpush1.bf16.msra.mxu0 0
        %1853 = vmatprep.mubr.bf16.mxu0 0
        %1854 = vmatmul.mubr.bf16.gmra.mrb[0].mxu0 %v657
        %v1855 = vpop.f32.mrb[0].mxu0
        %v1856 = vadd.f32 0.0, %v1855
        %v1857 = vpop.f32.mrb[0].mxu0
        %v1858 = vpop.f32.mrb[0].mxu0
        %v1859 = vadd.f32 0.0, %v1858
        %v1860 = vpop.f32.mrb[0].mxu0
        %1861 = vmatprep.mubr.bf16.mxu0 0
        %1862 = vmatmul.mubr.bf16.gmra.mrb[0].mxu0 %v658
        %v1863 = vpop.f32.mrb[0].mxu0
        %v1864 = vadd.f32 0.0, %v1863
        %v1865 = vpop.f32.mrb[0].mxu0
        %v1866 = vpop.f32.mrb[0].mxu0
        %v1867 = vadd.f32 0.0, %v1866
        %v1868 = vpop.f32.mrb[0].mxu0
        %1869 = vmatprep.mubr.bf16.mxu0 0
        %1870 = vmatmul.mubr.bf16.gmra.mrb[0].mxu0 %v659
        %v1871 = vpop.f32.mrb[0].mxu0
        %v1872 = vadd.f32 0.0, %v1871
        %v1873 = vpop.f32.mrb[0].mxu0
        %v1874 = vpop.f32.mrb[0].mxu0
        %v1875 = vadd.f32 0.0, %v1874
        %v1876 = vpop.f32.mrb[0].mxu0
        %1877 = vmatprep.mubr.bf16.mxu0 0
        %1878 = vmatmul.mubr.bf16.gmra.mrb[0].mxu0 %v660
        %v1879 = vpop.f32.mrb[0].mxu0
        %v1880 = vadd.f32 0.0, %v1879
        %v1881 = vpop.f32.mrb[0].mxu0
        %v1882 = vpop.f32.mrb[0].mxu0
        %v1883 = vadd.f32 0.0, %v1882
        %v1884 = vpop.f32.mrb[0].mxu0
        %1885 = vmatprep.mubr.bf16.mxu0 0
        %1886 = vmatmul.mubr.bf16.gmra.mrb[0].mxu0 %v661
        %v1887 = vpop.f32.mrb[0].mxu0
        %v1888 = vadd.f32 0.0, %v1887
        %v1889 = vpop.f32.mrb[0].mxu0
        %v1890 = vpop.f32.mrb[0].mxu0
        %v1891 = vadd.f32 0.0, %v1890
        %v1892 = vpop.f32.mrb[0].mxu0
        %1893 = vmatprep.mubr.bf16.mxu0 0
        %1894 = vmatmul.mubr.bf16.gmra.mrb[0].mxu0 %v662
        %v1895 = vpop.f32.mrb[0].mxu0
        %v1896 = vadd.f32 0.0, %v1895
        %v1897 = vpop.f32.mrb[0].mxu0
        %v1898 = vpop.f32.mrb[0].mxu0
        %v1899 = vadd.f32 0.0, %v1898
        %v1900 = vpop.f32.mrb[0].mxu0
        %1901 = vmatprep.mubr.bf16.mxu0 0
        %1902 = vmatmul.mubr.bf16.gmra.mrb[0].mxu0 %v663
        %v1903 = vpop.f32.mrb[0].mxu0
        %v1904 = vadd.f32 0.0, %v1903
        %v1905 = vpop.f32.mrb[0].mxu0
        %v1906 = vpop.f32.mrb[0].mxu0
        %v1907 = vadd.f32 0.0, %v1906
        %v1908 = vpop.f32.mrb[0].mxu0
        %1909 = vmatprep.mubr.bf16.mxu0 0
        %1910 = vmatmul.mubr.bf16.gmra.mrb[0].mxu0 %v664
        %v1911 = vpop.f32.mrb[0].mxu0
        %v1912 = vadd.f32 0.0, %v1911
        %v1913 = vpop.f32.mrb[0].mxu0
        %v1914 = vpop.f32.mrb[0].mxu0
        %v1915 = vadd.f32 0.0, %v1914
        %v1916 = vpop.f32.mrb[0].mxu0
        %1917 = vdwg.mxu0
        %v1918 = vsub.f32 %v1856, %v1174
        %v1919 = vsub.f32 %v1859, %v1175
        %v1920 = vsub.f32 %v1864, %v1176
        %v1921 = vsub.f32 %v1867, %v1177
        %v1922 = vsub.f32 %v1872, %v1178
        %v1923 = vsub.f32 %v1875, %v1179
        %v1924 = vsub.f32 %v1880, %v1180
        %v1925 = vsub.f32 %v1883, %v1181
        %v1926 = vsub.f32 %v1888, %v1182
        %v1927 = vsub.f32 %v1891, %v1183
        %v1928 = vsub.f32 %v1896, %v1184
        %v1929 = vsub.f32 %v1899, %v1185
        %v1930 = vsub.f32 %v1904, %v1186
        %v1931 = vsub.f32 %v1907, %v1187
        %v1932 = vsub.f32 %v1912, %v1188
        %v1933 = vsub.f32 %v1915, %v1189
        %v1934 = vld [vmem:[%s308] sm:$0xff]
        %v1935 = vld [vmem:[%s308 + $0x8] sm:$0xff]
        %v1936 = vld [vmem:[%s308 + $0x10] sm:$0xff]
        %v1937 = vld [vmem:[%s308 + $0x18] sm:$0xff]
        %v1938 = vld [vmem:[%s308 + $0x20] sm:$0xff]
        %v1939 = vld [vmem:[%s308 + $0x28] sm:$0xff]
        %v1940 = vld [vmem:[%s308 + $0x30] sm:$0xff]
        %v1941 = vld [vmem:[%s308 + $0x38] sm:$0xff]
        %v1942 = vld [vmem:[%s308 + $0x40] sm:$0xff]
        %v1943 = vld [vmem:[%s308 + $0x48] sm:$0xff]
        %v1944 = vld [vmem:[%s308 + $0x50] sm:$0xff]
        %v1945 = vld [vmem:[%s308 + $0x58] sm:$0xff]
        %v1946 = vld [vmem:[%s308 + $0x60] sm:$0xff]
        %v1947 = vld [vmem:[%s308 + $0x68] sm:$0xff]
        %v1948 = vld [vmem:[%s308 + $0x70] sm:$0xff]
        %v1949 = vld [vmem:[%s308 + $0x78] sm:$0xff]
        %v1950 = vld [vmem:[%s308 + $0x80] sm:$0xff]
        %v1951 = vld [vmem:[%s308 + $0x88] sm:$0xff]
        %v1952 = vld [vmem:[%s308 + $0x90] sm:$0xff]
        %v1953 = vld [vmem:[%s308 + $0x98] sm:$0xff]
        %v1954 = vld [vmem:[%s308 + $0xa0] sm:$0xff]
        %v1955 = vld [vmem:[%s308 + $0xa8] sm:$0xff]
        %v1956 = vld [vmem:[%s308 + $0xb0] sm:$0xff]
        %v1957 = vld [vmem:[%s308 + $0xb8] sm:$0xff]
        %v1958 = vld [vmem:[%s308 + $0xc0] sm:$0xff]
        %v1959 = vld [vmem:[%s308 + $0xc8] sm:$0xff]
        %v1960 = vld [vmem:[%s308 + $0xd0] sm:$0xff]
        %v1961 = vld [vmem:[%s308 + $0xd8] sm:$0xff]
        %v1962 = vld [vmem:[%s308 + $0xe0] sm:$0xff]
        %v1963 = vld [vmem:[%s308 + $0xe8] sm:$0xff]
        %v1964 = vld [vmem:[%s308 + $0xf0] sm:$0xff]
        %v1965 = vld [vmem:[%s308 + $0xf8] sm:$0xff]
        %s1966 = sld [smem:[#allocation2 + $0x4]]
        %v1967 = vstv %s1966
        %v1968 = vmul.f32 %v1967, %v1918
        %v1969 = vmul.f32 %v1967, %v1919
        %v1970 = vmul.f32 %v1967, %v1920
        %v1971 = vmul.f32 %v1967, %v1921
        %v1972 = vmul.f32 %v1967, %v1922
        %v1973 = vmul.f32 %v1967, %v1923
        %v1974 = vmul.f32 %v1967, %v1924
        %v1975 = vmul.f32 %v1967, %v1925
        %v1976 = vmul.f32 %v1967, %v1926
        %v1977 = vmul.f32 %v1967, %v1927
        %v1978 = vmul.f32 %v1967, %v1928
        %v1979 = vmul.f32 %v1967, %v1929
        %v1980 = vmul.f32 %v1967, %v1930
        %v1981 = vmul.f32 %v1967, %v1931
        %v1982 = vmul.f32 %v1967, %v1932
        %v1983 = vmul.f32 %v1967, %v1933
        %v1984 = vpack.c.bf16 %v1969, %v1968
        %v1985 = vpack.c.bf16 %v1971, %v1970
        %v1986 = vpack.c.bf16 %v1973, %v1972
        %v1987 = vpack.c.bf16 %v1975, %v1974
        %v1988 = vpack.c.bf16 %v1977, %v1976
        %v1989 = vpack.c.bf16 %v1979, %v1978
        %v1990 = vpack.c.bf16 %v1981, %v1980
        %v1991 = vpack.c.bf16 %v1983, %v1982
        %1992 = vmatprep.subr.bf16.mxu0 %v449
        %1993 = vmatpush1.bf16.msra.mxu0 %v448
        %1994 = vmatprep.subr.bf16.mxu0 %v451
        %1995 = vmatpush1.bf16.msra.mxu0 %v450
        %1996 = vmatprep.subr.bf16.mxu0 %v453
        %1997 = vmatpush1.bf16.msra.mxu0 %v452
        %1998 = vmatprep.subr.bf16.mxu0 %v455
        %1999 = vmatpush1.bf16.msra.mxu0 %v454
        %2000 = vmatprep.subr.bf16.mxu0 %v457
        %2001 = vmatpush1.bf16.msra.mxu0 %v456
        %2002 = vmatprep.subr.bf16.mxu0 %v459
        %2003 = vmatpush1.bf16.msra.mxu0 %v458
        %2004 = vmatprep.subr.bf16.mxu0 %v461
        %2005 = vmatpush1.bf16.msra.mxu0 %v460
        %2006 = vmatprep.subr.bf16.mxu0 %v463
        %2007 = vmatpush1.bf16.msra.mxu0 %v462
        %2008 = vmatprep.subr.bf16.mxu0 0
        %2009 = vmatpush1.bf16.msra.mxu0 0
        %2010 = vmatprep.subr.bf16.mxu0 0
        %2011 = vmatpush1.bf16.msra.mxu0 0
        %2012 = vmatprep.subr.bf16.mxu0 0
        %2013 = vmatpush1.bf16.msra.mxu0 0
        %2014 = vmatprep.subr.bf16.mxu0 0
        %2015 = vmatpush1.bf16.msra.mxu0 0
        %2016 = vmatprep.subr.bf16.mxu0 0
        %2017 = vmatpush1.bf16.msra.mxu0 0
        %2018 = vmatprep.subr.bf16.mxu0 0
        %2019 = vmatpush1.bf16.msra.mxu0 0
        %2020 = vmatprep.subr.bf16.mxu0 0
        %2021 = vmatpush1.bf16.msra.mxu0 0
        %2022 = vmatprep.subr.bf16.mxu0 0
        %2023 = vmatpush1.bf16.msra.mxu0 0
        %2024 = vmatprep.mubr.bf16.mxu0 0
        %2025 = vmatmul.mubr.bf16.gmra.mrb[0].mxu0 %v1984
        %v2026 = vpop.f32.mrb[0].mxu0
        %v2027 = vadd.f32 0.0, %v2026
        %v2028 = vpop.f32.mrb[0].mxu0
        %v2029 = vadd.f32 0.0, %v2028
        %v2030 = vpop.f32.mrb[0].mxu0
        %v2031 = vadd.f32 0.0, %v2030
        %v2032 = vpop.f32.mrb[0].mxu0
        %v2033 = vadd.f32 0.0, %v2032
        %2034 = vmatprep.mubr.bf16.mxu0 0
        %2035 = vmatmul.mubr.bf16.gmra.mrb[0].mxu0 %v1985
        %v2036 = vpop.f32.mrb[0].mxu0
        %v2037 = vadd.f32 0.0, %v2036
        %v2038 = vpop.f32.mrb[0].mxu0
        %v2039 = vadd.f32 0.0, %v2038
        %v2040 = vpop.f32.mrb[0].mxu0
        %v2041 = vadd.f32 0.0, %v2040
        %v2042 = vpop.f32.mrb[0].mxu0
        %v2043 = vadd.f32 0.0, %v2042
        %2044 = vmatprep.mubr.bf16.mxu0 0
        %2045 = vmatmul.mubr.bf16.gmra.mrb[0].mxu0 %v1986
        %v2046 = vpop.f32.mrb[0].mxu0
        %v2047 = vadd.f32 0.0, %v2046
        %v2048 = vpop.f32.mrb[0].mxu0
        %v2049 = vadd.f32 0.0, %v2048
        %v2050 = vpop.f32.mrb[0].mxu0
        %v2051 = vadd.f32 0.0, %v2050
        %v2052 = vpop.f32.mrb[0].mxu0
        %v2053 = vadd.f32 0.0, %v2052
        %2054 = vmatprep.mubr.bf16.mxu0 0
        %2055 = vmatmul.mubr.bf16.gmra.mrb[0].mxu0 %v1987
        %v2056 = vpop.f32.mrb[0].mxu0
        %v2057 = vadd.f32 0.0, %v2056
        %v2058 = vpop.f32.mrb[0].mxu0
        %v2059 = vadd.f32 0.0, %v2058
        %v2060 = vpop.f32.mrb[0].mxu0
        %v2061 = vadd.f32 0.0, %v2060
        %v2062 = vpop.f32.mrb[0].mxu0
        %v2063 = vadd.f32 0.0, %v2062
        %2064 = vmatprep.mubr.bf16.mxu0 0
        %2065 = vmatmul.mubr.bf16.gmra.mrb[0].mxu0 %v1988
        %v2066 = vpop.f32.mrb[0].mxu0
        %v2067 = vadd.f32 0.0, %v2066
        %v2068 = vpop.f32.mrb[0].mxu0
        %v2069 = vadd.f32 0.0, %v2068
        %v2070 = vpop.f32.mrb[0].mxu0
        %v2071 = vadd.f32 0.0, %v2070
        %v2072 = vpop.f32.mrb[0].mxu0
        %v2073 = vadd.f32 0.0, %v2072
        %2074 = vmatprep.mubr.bf16.mxu0 0
        %2075 = vmatmul.mubr.bf16.gmra.mrb[0].mxu0 %v1989
        %v2076 = vpop.f32.mrb[0].mxu0
        %v2077 = vadd.f32 0.0, %v2076
        %v2078 = vpop.f32.mrb[0].mxu0
        %v2079 = vadd.f32 0.0, %v2078
        %v2080 = vpop.f32.mrb[0].mxu0
        %v2081 = vadd.f32 0.0, %v2080
        %v2082 = vpop.f32.mrb[0].mxu0
        %v2083 = vadd.f32 0.0, %v2082
        %2084 = vmatprep.mubr.bf16.mxu0 0
        %2085 = vmatmul.mubr.bf16.gmra.mrb[0].mxu0 %v1990
        %v2086 = vpop.f32.mrb[0].mxu0
        %v2087 = vadd.f32 0.0, %v2086
        %v2088 = vpop.f32.mrb[0].mxu0
        %v2089 = vadd.f32 0.0, %v2088
        %v2090 = vpop.f32.mrb[0].mxu0
        %v2091 = vadd.f32 0.0, %v2090
        %v2092 = vpop.f32.mrb[0].mxu0
        %v2093 = vadd.f32 0.0, %v2092
        %2094 = vmatprep.mubr.bf16.mxu0 0
        %2095 = vmatmul.mubr.bf16.gmra.mrb[0].mxu0 %v1991
        %v2096 = vpop.f32.mrb[0].mxu0
        %v2097 = vadd.f32 0.0, %v2096
        %v2098 = vpop.f32.mrb[0].mxu0
        %v2099 = vadd.f32 0.0, %v2098
        %v2100 = vpop.f32.mrb[0].mxu0
        %v2101 = vadd.f32 0.0, %v2100
        %v2102 = vpop.f32.mrb[0].mxu0
        %v2103 = vadd.f32 0.0, %v2102
        %2104 = vdwg.mxu0
        %v2105 = vadd.f32 %v1934, %v2027
        %v2106 = vadd.f32 %v1935, %v2029
        %v2107 = vadd.f32 %v1936, %v2031
        %v2108 = vadd.f32 %v1937, %v2033
        %v2109 = vadd.f32 %v1938, %v2037
        %v2110 = vadd.f32 %v1939, %v2039
        %v2111 = vadd.f32 %v1940, %v2041
        %v2112 = vadd.f32 %v1941, %v2043
        %v2113 = vadd.f32 %v1942, %v2047
        %v2114 = vadd.f32 %v1943, %v2049
        %v2115 = vadd.f32 %v1944, %v2051
        %v2116 = vadd.f32 %v1945, %v2053
        %v2117 = vadd.f32 %v1946, %v2057
        %v2118 = vadd.f32 %v1947, %v2059
        %v2119 = vadd.f32 %v1948, %v2061
        %v2120 = vadd.f32 %v1949, %v2063
        %v2121 = vadd.f32 %v1950, %v2067
        %v2122 = vadd.f32 %v1951, %v2069
        %v2123 = vadd.f32 %v1952, %v2071
        %v2124 = vadd.f32 %v1953, %v2073
        %v2125 = vadd.f32 %v1954, %v2077
        %v2126 = vadd.f32 %v1955, %v2079
        %v2127 = vadd.f32 %v1956, %v2081
        %v2128 = vadd.f32 %v1957, %v2083
        %v2129 = vadd.f32 %v1958, %v2087
        %v2130 = vadd.f32 %v1959, %v2089
        %v2131 = vadd.f32 %v1960, %v2091
        %v2132 = vadd.f32 %v1961, %v2093
        %v2133 = vadd.f32 %v1962, %v2097
        %v2134 = vadd.f32 %v1963, %v2099
        %v2135 = vadd.f32 %v1964, %v2101
        %v2136 = vadd.f32 %v1965, %v2103
        %2137 = vst [vmem:[%s308] sm:$0xff] %v2105
        %2138 = vst [vmem:[%s308 + $0x8] sm:$0xff] %v2106
        %2139 = vst [vmem:[%s308 + $0x10] sm:$0xff] %v2107
        %2140 = vst [vmem:[%s308 + $0x18] sm:$0xff] %v2108
        %2141 = vst [vmem:[%s308 + $0x20] sm:$0xff] %v2109
        %2142 = vst [vmem:[%s308 + $0x28] sm:$0xff] %v2110
        %2143 = vst [vmem:[%s308 + $0x30] sm:$0xff] %v2111
        %2144 = vst [vmem:[%s308 + $0x38] sm:$0xff] %v2112
        %2145 = vst [vmem:[%s308 + $0x40] sm:$0xff] %v2113
        %2146 = vst [vmem:[%s308 + $0x48] sm:$0xff] %v2114
        %2147 = vst [vmem:[%s308 + $0x50] sm:$0xff] %v2115
        %2148 = vst [vmem:[%s308 + $0x58] sm:$0xff] %v2116
        %2149 = vst [vmem:[%s308 + $0x60] sm:$0xff] %v2117
        %2150 = vst [vmem:[%s308 + $0x68] sm:$0xff] %v2118
        %2151 = vst [vmem:[%s308 + $0x70] sm:$0xff] %v2119
        %2152 = vst [vmem:[%s308 + $0x78] sm:$0xff] %v2120
        %2153 = vst [vmem:[%s308 + $0x80] sm:$0xff] %v2121
        %2154 = vst [vmem:[%s308 + $0x88] sm:$0xff] %v2122
        %2155 = vst [vmem:[%s308 + $0x90] sm:$0xff] %v2123
        %2156 = vst [vmem:[%s308 + $0x98] sm:$0xff] %v2124
        %2157 = vst [vmem:[%s308 + $0xa0] sm:$0xff] %v2125
        %2158 = vst [vmem:[%s308 + $0xa8] sm:$0xff] %v2126
        %2159 = vst [vmem:[%s308 + $0xb0] sm:$0xff] %v2127
        %2160 = vst [vmem:[%s308 + $0xb8] sm:$0xff] %v2128
        %2161 = vst [vmem:[%s308 + $0xc0] sm:$0xff] %v2129
        %2162 = vst [vmem:[%s308 + $0xc8] sm:$0xff] %v2130
        %2163 = vst [vmem:[%s308 + $0xd0] sm:$0xff] %v2131
        %2164 = vst [vmem:[%s308 + $0xd8] sm:$0xff] %v2132
        %2165 = vst [vmem:[%s308 + $0xe0] sm:$0xff] %v2133
        %2166 = vst [vmem:[%s308 + $0xe8] sm:$0xff] %v2134
        %2167 = vst [vmem:[%s308 + $0xf0] sm:$0xff] %v2135
        %2168 = vst [vmem:[%s308 + $0xf8] sm:$0xff] %v2136
        %v2169 = vmul.f32 %v1918, 2.0
        %v2170 = vmul.f32 %v1919, 2.0
        %v2171 = vmul.f32 %v1920, 2.0
        %v2172 = vmul.f32 %v1921, 2.0
        %v2173 = vmul.f32 %v1922, 2.0
        %v2174 = vmul.f32 %v1923, 2.0
        %v2175 = vmul.f32 %v1924, 2.0
        %v2176 = vmul.f32 %v1925, 2.0
        %v2177 = vmul.f32 %v1926, 2.0
        %v2178 = vmul.f32 %v1927, 2.0
        %v2179 = vmul.f32 %v1928, 2.0
        %v2180 = vmul.f32 %v1929, 2.0
        %v2181 = vmul.f32 %v1930, 2.0
        %v2182 = vmul.f32 %v1931, 2.0
        %v2183 = vmul.f32 %v1932, 2.0
        %v2184 = vmul.f32 %v1933, 2.0
        %v2185 = vpack.c.bf16 %v2170, %v2169
        %v2186 = vpack.c.bf16 %v2172, %v2171
        %v2187 = vpack.c.bf16 %v2174, %v2173
        %v2188 = vpack.c.bf16 %v2176, %v2175
        %v2189 = vpack.c.bf16 %v2178, %v2177
        %v2190 = vpack.c.bf16 %v2180, %v2179
        %v2191 = vpack.c.bf16 %v2182, %v2181
        %v2192 = vpack.c.bf16 %v2184, %v2183
        %2193 = vmatprep.subr.bf16.mxu0 0
        %2194 = vmatpush1.bf16.msra.mxu0 %v2185
        %2195 = vmatprep.subr.bf16.mxu0 0
        %2196 = vmatpush1.bf16.msra.mxu0 %v2186
        %2197 = vmatprep.subr.bf16.mxu0 0
        %2198 = vmatpush1.bf16.msra.mxu0 %v2187
        %2199 = vmatprep.subr.bf16.mxu0 0
        %2200 = vmatpush1.bf16.msra.mxu0 %v2188
        %2201 = vmatprep.subr.bf16.mxu0 0
        %2202 = vmatpush1.bf16.msra.mxu0 %v2189
        %2203 = vmatprep.subr.bf16.mxu0 0
        %2204 = vmatpush1.bf16.msra.mxu0 %v2190
        %2205 = vmatprep.subr.bf16.mxu0 0
        %2206 = vmatpush1.bf16.msra.mxu0 %v2191
        %2207 = vmatprep.subr.bf16.mxu0 0
        %2208 = vmatpush1.bf16.msra.mxu0 %v2192
        %2209 = vmatprep.subr.bf16.mxu0 0
        %2210 = vmatpush1.bf16.msra.mxu0 0
        %2211 = vmatprep.subr.bf16.mxu0 0
        %2212 = vmatpush1.bf16.msra.mxu0 0
        %2213 = vmatprep.subr.bf16.mxu0 0
        %2214 = vmatpush1.bf16.msra.mxu0 0
        %2215 = vmatprep.subr.bf16.mxu0 0
        %2216 = vmatpush1.bf16.msra.mxu0 0
        %2217 = vmatprep.subr.bf16.mxu0 0
        %2218 = vmatpush1.bf16.msra.mxu0 0
        %2219 = vmatprep.subr.bf16.mxu0 0
        %2220 = vmatpush1.bf16.msra.mxu0 0
        %2221 = vmatprep.subr.bf16.mxu0 0
        %2222 = vmatpush1.bf16.msra.mxu0 0
        %2223 = vmatprep.subr.bf16.mxu0 0
        %2224 = vmatpush1.bf16.msra.mxu0 0
        %2225 = vmatprep.mubr.bf16.mxu0 0
        %2226 = vmatmul.mubr.bf16.gmra.mrb[0].mxu0 %v657
        %v2227 = vpop.f32.mrb[0].mxu0
        %v2228 = vadd.f32 0.0, %v2227
        %v2229 = vpop.f32.mrb[0].mxu0
        %v2230 = vpop.f32.mrb[0].mxu0
        %v2231 = vadd.f32 0.0, %v2230
        %v2232 = vpop.f32.mrb[0].mxu0
        %2233 = vmatprep.mubr.bf16.mxu0 0
        %2234 = vmatmul.mubr.bf16.gmra.mrb[0].mxu0 %v658
        %v2235 = vpop.f32.mrb[0].mxu0
        %v2236 = vadd.f32 0.0, %v2235
        %v2237 = vpop.f32.mrb[0].mxu0
        %v2238 = vpop.f32.mrb[0].mxu0
        %v2239 = vadd.f32 0.0, %v2238
        %v2240 = vpop.f32.mrb[0].mxu0
        %2241 = vmatprep.mubr.bf16.mxu0 0
        %2242 = vmatmul.mubr.bf16.gmra.mrb[0].mxu0 %v659
        %v2243 = vpop.f32.mrb[0].mxu0
        %v2244 = vadd.f32 0.0, %v2243
        %v2245 = vpop.f32.mrb[0].mxu0
        %v2246 = vpop.f32.mrb[0].mxu0
        %v2247 = vadd.f32 0.0, %v2246
        %v2248 = vpop.f32.mrb[0].mxu0
        %2249 = vmatprep.mubr.bf16.mxu0 0
        %2250 = vmatmul.mubr.bf16.gmra.mrb[0].mxu0 %v660
        %v2251 = vpop.f32.mrb[0].mxu0
        %v2252 = vadd.f32 0.0, %v2251
        %v2253 = vpop.f32.mrb[0].mxu0
        %v2254 = vpop.f32.mrb[0].mxu0
        %v2255 = vadd.f32 0.0, %v2254
        %v2256 = vpop.f32.mrb[0].mxu0
        %2257 = vmatprep.mubr.bf16.mxu0 0
        %2258 = vmatmul.mubr.bf16.gmra.mrb[0].mxu0 %v661
        %v2259 = vpop.f32.mrb[0].mxu0
        %v2260 = vadd.f32 0.0, %v2259
        %v2261 = vpop.f32.mrb[0].mxu0
        %v2262 = vpop.f32.mrb[0].mxu0
        %v2263 = vadd.f32 0.0, %v2262
        %v2264 = vpop.f32.mrb[0].mxu0
        %2265 = vmatprep.mubr.bf16.mxu0 0
        %2266 = vmatmul.mubr.bf16.gmra.mrb[0].mxu0 %v662
        %v2267 = vpop.f32.mrb[0].mxu0
        %v2268 = vadd.f32 0.0, %v2267
        %v2269 = vpop.f32.mrb[0].mxu0
        %v2270 = vpop.f32.mrb[0].mxu0
        %v2271 = vadd.f32 0.0, %v2270
        %v2272 = vpop.f32.mrb[0].mxu0
        %2273 = vmatprep.mubr.bf16.mxu0 0
        %2274 = vmatmul.mubr.bf16.gmra.mrb[0].mxu0 %v663
        %v2275 = vpop.f32.mrb[0].mxu0
        %v2276 = vadd.f32 0.0, %v2275
        %v2277 = vpop.f32.mrb[0].mxu0
        %v2278 = vpop.f32.mrb[0].mxu0
        %v2279 = vadd.f32 0.0, %v2278
        %v2280 = vpop.f32.mrb[0].mxu0
        %2281 = vmatprep.mubr.bf16.mxu0 0
        %2282 = vmatmul.mubr.bf16.gmra.mrb[0].mxu0 %v664
        %v2283 = vpop.f32.mrb[0].mxu0
        %v2284 = vadd.f32 0.0, %v2283
        %v2285 = vpop.f32.mrb[0].mxu0
        %v2286 = vpop.f32.mrb[0].mxu0
        %v2287 = vadd.f32 0.0, %v2286
        %v2288 = vpop.f32.mrb[0].mxu0
        %2289 = vdwg.mxu0
        %v2290 = vsub.f32 %v2228, %v1546
        %v2291 = vsub.f32 %v2231, %v1547
        %v2292 = vsub.f32 %v2236, %v1548
        %v2293 = vsub.f32 %v2239, %v1549
        %v2294 = vsub.f32 %v2244, %v1550
        %v2295 = vsub.f32 %v2247, %v1551
        %v2296 = vsub.f32 %v2252, %v1552
        %v2297 = vsub.f32 %v2255, %v1553
        %v2298 = vsub.f32 %v2260, %v1554
        %v2299 = vsub.f32 %v2263, %v1555
        %v2300 = vsub.f32 %v2268, %v1556
        %v2301 = vsub.f32 %v2271, %v1557
        %v2302 = vsub.f32 %v2276, %v1558
        %v2303 = vsub.f32 %v2279, %v1559
        %v2304 = vsub.f32 %v2284, %v1560
        %v2305 = vsub.f32 %v2287, %v1561
        %v2306 = vld [vmem:[%s308] sm:$0xff]
        %v2307 = vld [vmem:[%s308 + $0x8] sm:$0xff]
        %v2308 = vld [vmem:[%s308 + $0x10] sm:$0xff]
        %v2309 = vld [vmem:[%s308 + $0x18] sm:$0xff]
        %v2310 = vld [vmem:[%s308 + $0x20] sm:$0xff]
        %v2311 = vld [vmem:[%s308 + $0x28] sm:$0xff]
        %v2312 = vld [vmem:[%s308 + $0x30] sm:$0xff]
        %v2313 = vld [vmem:[%s308 + $0x38] sm:$0xff]
        %v2314 = vld [vmem:[%s308 + $0x40] sm:$0xff]
        %v2315 = vld [vmem:[%s308 + $0x48] sm:$0xff]
        %v2316 = vld [vmem:[%s308 + $0x50] sm:$0xff]
        %v2317 = vld [vmem:[%s308 + $0x58] sm:$0xff]
        %v2318 = vld [vmem:[%s308 + $0x60] sm:$0xff]
        %v2319 = vld [vmem:[%s308 + $0x68] sm:$0xff]
        %v2320 = vld [vmem:[%s308 + $0x70] sm:$0xff]
        %v2321 = vld [vmem:[%s308 + $0x78] sm:$0xff]
        %v2322 = vld [vmem:[%s308 + $0x80] sm:$0xff]
        %v2323 = vld [vmem:[%s308 + $0x88] sm:$0xff]
        %v2324 = vld [vmem:[%s308 + $0x90] sm:$0xff]
        %v2325 = vld [vmem:[%s308 + $0x98] sm:$0xff]
        %v2326 = vld [vmem:[%s308 + $0xa0] sm:$0xff]
        %v2327 = vld [vmem:[%s308 + $0xa8] sm:$0xff]
        %v2328 = vld [vmem:[%s308 + $0xb0] sm:$0xff]
        %v2329 = vld [vmem:[%s308 + $0xb8] sm:$0xff]
        %v2330 = vld [vmem:[%s308 + $0xc0] sm:$0xff]
        %v2331 = vld [vmem:[%s308 + $0xc8] sm:$0xff]
        %v2332 = vld [vmem:[%s308 + $0xd0] sm:$0xff]
        %v2333 = vld [vmem:[%s308 + $0xd8] sm:$0xff]
        %v2334 = vld [vmem:[%s308 + $0xe0] sm:$0xff]
        %v2335 = vld [vmem:[%s308 + $0xe8] sm:$0xff]
        %v2336 = vld [vmem:[%s308 + $0xf0] sm:$0xff]
        %v2337 = vld [vmem:[%s308 + $0xf8] sm:$0xff]
        %s2338 = sld [smem:[#allocation2 + $0x5]]
        %v2339 = vstv %s2338
        %v2340 = vmul.f32 %v2339, %v2290
        %v2341 = vmul.f32 %v2339, %v2291
        %v2342 = vmul.f32 %v2339, %v2292
        %v2343 = vmul.f32 %v2339, %v2293
        %v2344 = vmul.f32 %v2339, %v2294
        %v2345 = vmul.f32 %v2339, %v2295
        %v2346 = vmul.f32 %v2339, %v2296
        %v2347 = vmul.f32 %v2339, %v2297
        %v2348 = vmul.f32 %v2339, %v2298
        %v2349 = vmul.f32 %v2339, %v2299
        %v2350 = vmul.f32 %v2339, %v2300
        %v2351 = vmul.f32 %v2339, %v2301
        %v2352 = vmul.f32 %v2339, %v2302
        %v2353 = vmul.f32 %v2339, %v2303
        %v2354 = vmul.f32 %v2339, %v2304
        %v2355 = vmul.f32 %v2339, %v2305
        %v2356 = vpack.c.bf16 %v2341, %v2340
        %v2357 = vpack.c.bf16 %v2343, %v2342
        %v2358 = vpack.c.bf16 %v2345, %v2344
        %v2359 = vpack.c.bf16 %v2347, %v2346
        %v2360 = vpack.c.bf16 %v2349, %v2348
        %v2361 = vpack.c.bf16 %v2351, %v2350
        %v2362 = vpack.c.bf16 %v2353, %v2352
        %v2363 = vpack.c.bf16 %v2355, %v2354
        %2364 = vmatprep.subr.bf16.mxu0 %v449
        %2365 = vmatpush1.bf16.msra.mxu0 %v448
        %2366 = vmatprep.subr.bf16.mxu0 %v451
        %2367 = vmatpush1.bf16.msra.mxu0 %v450
        %2368 = vmatprep.subr.bf16.mxu0 %v453
        %2369 = vmatpush1.bf16.msra.mxu0 %v452
        %2370 = vmatprep.subr.bf16.mxu0 %v455
        %2371 = vmatpush1.bf16.msra.mxu0 %v454
        %2372 = vmatprep.subr.bf16.mxu0 %v457
        %2373 = vmatpush1.bf16.msra.mxu0 %v456
        %2374 = vmatprep.subr.bf16.mxu0 %v459
        %2375 = vmatpush1.bf16.msra.mxu0 %v458
        %2376 = vmatprep.subr.bf16.mxu0 %v461
        %2377 = vmatpush1.bf16.msra.mxu0 %v460
        %2378 = vmatprep.subr.bf16.mxu0 %v463
        %2379 = vmatpush1.bf16.msra.mxu0 %v462
        %2380 = vmatprep.subr.bf16.mxu0 0
        %2381 = vmatpush1.bf16.msra.mxu0 0
        %2382 = vmatprep.subr.bf16.mxu0 0
        %2383 = vmatpush1.bf16.msra.mxu0 0
        %2384 = vmatprep.subr.bf16.mxu0 0
        %2385 = vmatpush1.bf16.msra.mxu0 0
        %2386 = vmatprep.subr.bf16.mxu0 0
        %2387 = vmatpush1.bf16.msra.mxu0 0
        %2388 = vmatprep.subr.bf16.mxu0 0
        %2389 = vmatpush1.bf16.msra.mxu0 0
        %2390 = vmatprep.subr.bf16.mxu0 0
        %2391 = vmatpush1.bf16.msra.mxu0 0
        %2392 = vmatprep.subr.bf16.mxu0 0
        %2393 = vmatpush1.bf16.msra.mxu0 0
        %2394 = vmatprep.subr.bf16.mxu0 0
        %2395 = vmatpush1.bf16.msra.mxu0 0
        %2396 = vmatprep.mubr.bf16.mxu0 0
        %2397 = vmatmul.mubr.bf16.gmra.mrb[0].mxu0 %v2356
        %v2398 = vpop.f32.mrb[0].mxu0
        %v2399 = vadd.f32 0.0, %v2398
        %v2400 = vpop.f32.mrb[0].mxu0
        %v2401 = vadd.f32 0.0, %v2400
        %v2402 = vpop.f32.mrb[0].mxu0
        %v2403 = vadd.f32 0.0, %v2402
        %v2404 = vpop.f32.mrb[0].mxu0
        %v2405 = vadd.f32 0.0, %v2404
        %2406 = vmatprep.mubr.bf16.mxu0 0
        %2407 = vmatmul.mubr.bf16.gmra.mrb[0].mxu0 %v2357
        %v2408 = vpop.f32.mrb[0].mxu0
        %v2409 = vadd.f32 0.0, %v2408
        %v2410 = vpop.f32.mrb[0].mxu0
        %v2411 = vadd.f32 0.0, %v2410
        %v2412 = vpop.f32.mrb[0].mxu0
        %v2413 = vadd.f32 0.0, %v2412
        %v2414 = vpop.f32.mrb[0].mxu0
        %v2415 = vadd.f32 0.0, %v2414
        %2416 = vmatprep.mubr.bf16.mxu0 0
        %2417 = vmatmul.mubr.bf16.gmra.mrb[0].mxu0 %v2358
        %v2418 = vpop.f32.mrb[0].mxu0
        %v2419 = vadd.f32 0.0, %v2418
        %v2420 = vpop.f32.mrb[0].mxu0
        %v2421 = vadd.f32 0.0, %v2420
        %v2422 = vpop.f32.mrb[0].mxu0
        %v2423 = vadd.f32 0.0, %v2422
        %v2424 = vpop.f32.mrb[0].mxu0
        %v2425 = vadd.f32 0.0, %v2424
        %2426 = vmatprep.mubr.bf16.mxu0 0
        %2427 = vmatmul.mubr.bf16.gmra.mrb[0].mxu0 %v2359
        %v2428 = vpop.f32.mrb[0].mxu0
        %v2429 = vadd.f32 0.0, %v2428
        %v2430 = vpop.f32.mrb[0].mxu0
        %v2431 = vadd.f32 0.0, %v2430
        %v2432 = vpop.f32.mrb[0].mxu0
        %v2433 = vadd.f32 0.0, %v2432
        %v2434 = vpop.f32.mrb[0].mxu0
        %v2435 = vadd.f32 0.0, %v2434
        %2436 = vmatprep.mubr.bf16.mxu0 0
        %2437 = vmatmul.mubr.bf16.gmra.mrb[0].mxu0 %v2360
        %v2438 = vpop.f32.mrb[0].mxu0
        %v2439 = vadd.f32 0.0, %v2438
        %v2440 = vpop.f32.mrb[0].mxu0
        %v2441 = vadd.f32 0.0, %v2440
        %v2442 = vpop.f32.mrb[0].mxu0
        %v2443 = vadd.f32 0.0, %v2442
        %v2444 = vpop.f32.mrb[0].mxu0
        %v2445 = vadd.f32 0.0, %v2444
        %2446 = vmatprep.mubr.bf16.mxu0 0
        %2447 = vmatmul.mubr.bf16.gmra.mrb[0].mxu0 %v2361
        %v2448 = vpop.f32.mrb[0].mxu0
        %v2449 = vadd.f32 0.0, %v2448
        %v2450 = vpop.f32.mrb[0].mxu0
        %v2451 = vadd.f32 0.0, %v2450
        %v2452 = vpop.f32.mrb[0].mxu0
        %v2453 = vadd.f32 0.0, %v2452
        %v2454 = vpop.f32.mrb[0].mxu0
        %v2455 = vadd.f32 0.0, %v2454
        %2456 = vmatprep.mubr.bf16.mxu0 0
        %2457 = vmatmul.mubr.bf16.gmra.mrb[0].mxu0 %v2362
        %v2458 = vpop.f32.mrb[0].mxu0
        %v2459 = vadd.f32 0.0, %v2458
        %v2460 = vpop.f32.mrb[0].mxu0
        %v2461 = vadd.f32 0.0, %v2460
        %v2462 = vpop.f32.mrb[0].mxu0
        %v2463 = vadd.f32 0.0, %v2462
        %v2464 = vpop.f32.mrb[0].mxu0
        %v2465 = vadd.f32 0.0, %v2464
        %2466 = vmatprep.mubr.bf16.mxu0 0
        %2467 = vmatmul.mubr.bf16.gmra.mrb[0].mxu0 %v2363
        %v2468 = vpop.f32.mrb[0].mxu0
        %v2469 = vadd.f32 0.0, %v2468
        %v2470 = vpop.f32.mrb[0].mxu0
        %v2471 = vadd.f32 0.0, %v2470
        %v2472 = vpop.f32.mrb[0].mxu0
        %v2473 = vadd.f32 0.0, %v2472
        %v2474 = vpop.f32.mrb[0].mxu0
        %v2475 = vadd.f32 0.0, %v2474
        %2476 = vdwg.mxu0
        %v2477 = vadd.f32 %v2306, %v2399
        %v2478 = vadd.f32 %v2307, %v2401
        %v2479 = vadd.f32 %v2308, %v2403
        %v2480 = vadd.f32 %v2309, %v2405
        %v2481 = vadd.f32 %v2310, %v2409
        %v2482 = vadd.f32 %v2311, %v2411
        %v2483 = vadd.f32 %v2312, %v2413
        %v2484 = vadd.f32 %v2313, %v2415
        %v2485 = vadd.f32 %v2314, %v2419
        %v2486 = vadd.f32 %v2315, %v2421
        %v2487 = vadd.f32 %v2316, %v2423
        %v2488 = vadd.f32 %v2317, %v2425
        %v2489 = vadd.f32 %v2318, %v2429
        %v2490 = vadd.f32 %v2319, %v2431
        %v2491 = vadd.f32 %v2320, %v2433
        %v2492 = vadd.f32 %v2321, %v2435
        %v2493 = vadd.f32 %v2322, %v2439
        %v2494 = vadd.f32 %v2323, %v2441
        %v2495 = vadd.f32 %v2324, %v2443
        %v2496 = vadd.f32 %v2325, %v2445
        %v2497 = vadd.f32 %v2326, %v2449
        %v2498 = vadd.f32 %v2327, %v2451
        %v2499 = vadd.f32 %v2328, %v2453
        %v2500 = vadd.f32 %v2329, %v2455
        %v2501 = vadd.f32 %v2330, %v2459
        %v2502 = vadd.f32 %v2331, %v2461
        %v2503 = vadd.f32 %v2332, %v2463
        %v2504 = vadd.f32 %v2333, %v2465
        %v2505 = vadd.f32 %v2334, %v2469
        %v2506 = vadd.f32 %v2335, %v2471
        %v2507 = vadd.f32 %v2336, %v2473
        %v2508 = vadd.f32 %v2337, %v2475
        %2509 = vst [vmem:[%s308] sm:$0xff] %v2477
        %2510 = vst [vmem:[%s308 + $0x8] sm:$0xff] %v2478
        %2511 = vst [vmem:[%s308 + $0x10] sm:$0xff] %v2479
        %2512 = vst [vmem:[%s308 + $0x18] sm:$0xff] %v2480
        %2513 = vst [vmem:[%s308 + $0x20] sm:$0xff] %v2481
        %2514 = vst [vmem:[%s308 + $0x28] sm:$0xff] %v2482
        %2515 = vst [vmem:[%s308 + $0x30] sm:$0xff] %v2483
        %2516 = vst [vmem:[%s308 + $0x38] sm:$0xff] %v2484
        %2517 = vst [vmem:[%s308 + $0x40] sm:$0xff] %v2485
        %2518 = vst [vmem:[%s308 + $0x48] sm:$0xff] %v2486
        %2519 = vst [vmem:[%s308 + $0x50] sm:$0xff] %v2487
        %2520 = vst [vmem:[%s308 + $0x58] sm:$0xff] %v2488
        %2521 = vst [vmem:[%s308 + $0x60] sm:$0xff] %v2489
        %2522 = vst [vmem:[%s308 + $0x68] sm:$0xff] %v2490
        %2523 = vst [vmem:[%s308 + $0x70] sm:$0xff] %v2491
        %2524 = vst [vmem:[%s308 + $0x78] sm:$0xff] %v2492
        %2525 = vst [vmem:[%s308 + $0x80] sm:$0xff] %v2493
        %2526 = vst [vmem:[%s308 + $0x88] sm:$0xff] %v2494
        %2527 = vst [vmem:[%s308 + $0x90] sm:$0xff] %v2495
        %2528 = vst [vmem:[%s308 + $0x98] sm:$0xff] %v2496
        %2529 = vst [vmem:[%s308 + $0xa0] sm:$0xff] %v2497
        %2530 = vst [vmem:[%s308 + $0xa8] sm:$0xff] %v2498
        %2531 = vst [vmem:[%s308 + $0xb0] sm:$0xff] %v2499
        %2532 = vst [vmem:[%s308 + $0xb8] sm:$0xff] %v2500
        %2533 = vst [vmem:[%s308 + $0xc0] sm:$0xff] %v2501
        %2534 = vst [vmem:[%s308 + $0xc8] sm:$0xff] %v2502
        %2535 = vst [vmem:[%s308 + $0xd0] sm:$0xff] %v2503
        %2536 = vst [vmem:[%s308 + $0xd8] sm:$0xff] %v2504
        %2537 = vst [vmem:[%s308 + $0xe0] sm:$0xff] %v2505
        %2538 = vst [vmem:[%s308 + $0xe8] sm:$0xff] %v2506
        %2539 = vst [vmem:[%s308 + $0xf0] sm:$0xff] %v2507
        %2540 = vst [vmem:[%s308 + $0xf8] sm:$0xff] %v2508
        %v2541 = vmul.f32 %v2290, 2.0
        %v2542 = vmul.f32 %v2291, 2.0
        %v2543 = vmul.f32 %v2292, 2.0
        %v2544 = vmul.f32 %v2293, 2.0
        %v2545 = vmul.f32 %v2294, 2.0
        %v2546 = vmul.f32 %v2295, 2.0
        %v2547 = vmul.f32 %v2296, 2.0
        %v2548 = vmul.f32 %v2297, 2.0
        %v2549 = vmul.f32 %v2298, 2.0
        %v2550 = vmul.f32 %v2299, 2.0
        %v2551 = vmul.f32 %v2300, 2.0
        %v2552 = vmul.f32 %v2301, 2.0
        %v2553 = vmul.f32 %v2302, 2.0
        %v2554 = vmul.f32 %v2303, 2.0
        %v2555 = vmul.f32 %v2304, 2.0
        %v2556 = vmul.f32 %v2305, 2.0
        %v2557 = vpack.c.bf16 %v2542, %v2541
        %v2558 = vpack.c.bf16 %v2544, %v2543
        %v2559 = vpack.c.bf16 %v2546, %v2545
        %v2560 = vpack.c.bf16 %v2548, %v2547
        %v2561 = vpack.c.bf16 %v2550, %v2549
        %v2562 = vpack.c.bf16 %v2552, %v2551
        %v2563 = vpack.c.bf16 %v2554, %v2553
        %v2564 = vpack.c.bf16 %v2556, %v2555
        %2565 = vmatprep.subr.bf16.mxu0 0
        %2566 = vmatpush1.bf16.msra.mxu0 %v2557
        %2567 = vmatprep.subr.bf16.mxu0 0
        %2568 = vmatpush1.bf16.msra.mxu0 %v2558
        %2569 = vmatprep.subr.bf16.mxu0 0
        %2570 = vmatpush1.bf16.msra.mxu0 %v2559
        %2571 = vmatprep.subr.bf16.mxu0 0
        %2572 = vmatpush1.bf16.msra.mxu0 %v2560
        %2573 = vmatprep.subr.bf16.mxu0 0
        %2574 = vmatpush1.bf16.msra.mxu0 %v2561
        %2575 = vmatprep.subr.bf16.mxu0 0
        %2576 = vmatpush1.bf16.msra.mxu0 %v2562
        %2577 = vmatprep.subr.bf16.mxu0 0
        %2578 = vmatpush1.bf16.msra.mxu0 %v2563
        %2579 = vmatprep.subr.bf16.mxu0 0
        %2580 = vmatpush1.bf16.msra.mxu0 %v2564
        %2581 = vmatprep.subr.bf16.mxu0 0
        %2582 = vmatpush1.bf16.msra.mxu0 0
        %2583 = vmatprep.subr.bf16.mxu0 0
        %2584 = vmatpush1.bf16.msra.mxu0 0
        %2585 = vmatprep.subr.bf16.mxu0 0
        %2586 = vmatpush1.bf16.msra.mxu0 0
        %2587 = vmatprep.subr.bf16.mxu0 0
        %2588 = vmatpush1.bf16.msra.mxu0 0
        %2589 = vmatprep.subr.bf16.mxu0 0
        %2590 = vmatpush1.bf16.msra.mxu0 0
        %2591 = vmatprep.subr.bf16.mxu0 0
        %2592 = vmatpush1.bf16.msra.mxu0 0
        %2593 = vmatprep.subr.bf16.mxu0 0
        %2594 = vmatpush1.bf16.msra.mxu0 0
        %2595 = vmatprep.subr.bf16.mxu0 0
        %2596 = vmatpush1.bf16.msra.mxu0 0
        %2597 = vmatprep.mubr.bf16.mxu0 0
        %2598 = vmatmul.mubr.bf16.gmra.mrb[0].mxu0 %v657
        %v2599 = vpop.f32.mrb[0].mxu0
        %v2600 = vadd.f32 0.0, %v2599
        %v2601 = vpop.f32.mrb[0].mxu0
        %v2602 = vpop.f32.mrb[0].mxu0
        %v2603 = vadd.f32 0.0, %v2602
        %v2604 = vpop.f32.mrb[0].mxu0
        %2605 = vmatprep.mubr.bf16.mxu0 0
        %2606 = vmatmul.mubr.bf16.gmra.mrb[0].mxu0 %v658
        %v2607 = vpop.f32.mrb[0].mxu0
        %v2608 = vadd.f32 0.0, %v2607
        %v2609 = vpop.f32.mrb[0].mxu0
        %v2610 = vpop.f32.mrb[0].mxu0
        %v2611 = vadd.f32 0.0, %v2610
        %v2612 = vpop.f32.mrb[0].mxu0
        %2613 = vmatprep.mubr.bf16.mxu0 0
        %2614 = vmatmul.mubr.bf16.gmra.mrb[0].mxu0 %v659
        %v2615 = vpop.f32.mrb[0].mxu0
        %v2616 = vadd.f32 0.0, %v2615
        %v2617 = vpop.f32.mrb[0].mxu0
        %v2618 = vpop.f32.mrb[0].mxu0
        %v2619 = vadd.f32 0.0, %v2618
        %v2620 = vpop.f32.mrb[0].mxu0
        %2621 = vmatprep.mubr.bf16.mxu0 0
        %2622 = vmatmul.mubr.bf16.gmra.mrb[0].mxu0 %v660
        %v2623 = vpop.f32.mrb[0].mxu0
        %v2624 = vadd.f32 0.0, %v2623
        %v2625 = vpop.f32.mrb[0].mxu0
        %v2626 = vpop.f32.mrb[0].mxu0
        %v2627 = vadd.f32 0.0, %v2626
        %v2628 = vpop.f32.mrb[0].mxu0
        %2629 = vmatprep.mubr.bf16.mxu0 0
        %2630 = vmatmul.mubr.bf16.gmra.mrb[0].mxu0 %v661
        %v2631 = vpop.f32.mrb[0].mxu0
        %v2632 = vadd.f32 0.0, %v2631
        %v2633 = vpop.f32.mrb[0].mxu0
        %v2634 = vpop.f32.mrb[0].mxu0
        %v2635 = vadd.f32 0.0, %v2634
        %v2636 = vpop.f32.mrb[0].mxu0
        %2637 = vmatprep.mubr.bf16.mxu0 0
        %2638 = vmatmul.mubr.bf16.gmra.mrb[0].mxu0 %v662
        %v2639 = vpop.f32.mrb[0].mxu0
        %v2640 = vadd.f32 0.0, %v2639
        %v2641 = vpop.f32.mrb[0].mxu0
        %v2642 = vpop.f32.mrb[0].mxu0
        %v2643 = vadd.f32 0.0, %v2642
        %v2644 = vpop.f32.mrb[0].mxu0
        %2645 = vmatprep.mubr.bf16.mxu0 0
        %2646 = vmatmul.mubr.bf16.gmra.mrb[0].mxu0 %v663
        %v2647 = vpop.f32.mrb[0].mxu0
        %v2648 = vadd.f32 0.0, %v2647
        %v2649 = vpop.f32.mrb[0].mxu0
        %v2650 = vpop.f32.mrb[0].mxu0
        %v2651 = vadd.f32 0.0, %v2650
        %v2652 = vpop.f32.mrb[0].mxu0
        %2653 = vmatprep.mubr.bf16.mxu0 0
        %2654 = vmatmul.mubr.bf16.gmra.mrb[0].mxu0 %v664
        %v2655 = vpop.f32.mrb[0].mxu0
        %v2656 = vadd.f32 0.0, %v2655
        %v2657 = vpop.f32.mrb[0].mxu0
        %v2658 = vpop.f32.mrb[0].mxu0
        %v2659 = vadd.f32 0.0, %v2658
        %v2660 = vpop.f32.mrb[0].mxu0
        %2661 = vdwg.mxu0
        %v2662 = vsub.f32 %v2600, %v1918
        %v2663 = vsub.f32 %v2603, %v1919
        %v2664 = vsub.f32 %v2608, %v1920
        %v2665 = vsub.f32 %v2611, %v1921
        %v2666 = vsub.f32 %v2616, %v1922
        %v2667 = vsub.f32 %v2619, %v1923
        %v2668 = vsub.f32 %v2624, %v1924
        %v2669 = vsub.f32 %v2627, %v1925
        %v2670 = vsub.f32 %v2632, %v1926
        %v2671 = vsub.f32 %v2635, %v1927
        %v2672 = vsub.f32 %v2640, %v1928
        %v2673 = vsub.f32 %v2643, %v1929
        %v2674 = vsub.f32 %v2648, %v1930
        %v2675 = vsub.f32 %v2651, %v1931
        %v2676 = vsub.f32 %v2656, %v1932
        %v2677 = vsub.f32 %v2659, %v1933
        %v2678 = vld [vmem:[%s308] sm:$0xff]
        %v2679 = vld [vmem:[%s308 + $0x8] sm:$0xff]
        %v2680 = vld [vmem:[%s308 + $0x10] sm:$0xff]
        %v2681 = vld [vmem:[%s308 + $0x18] sm:$0xff]
        %v2682 = vld [vmem:[%s308 + $0x20] sm:$0xff]
        %v2683 = vld [vmem:[%s308 + $0x28] sm:$0xff]
        %v2684 = vld [vmem:[%s308 + $0x30] sm:$0xff]
        %v2685 = vld [vmem:[%s308 + $0x38] sm:$0xff]
        %v2686 = vld [vmem:[%s308 + $0x40] sm:$0xff]
        %v2687 = vld [vmem:[%s308 + $0x48] sm:$0xff]
        %v2688 = vld [vmem:[%s308 + $0x50] sm:$0xff]
        %v2689 = vld [vmem:[%s308 + $0x58] sm:$0xff]
        %v2690 = vld [vmem:[%s308 + $0x60] sm:$0xff]
        %v2691 = vld [vmem:[%s308 + $0x68] sm:$0xff]
        %v2692 = vld [vmem:[%s308 + $0x70] sm:$0xff]
        %v2693 = vld [vmem:[%s308 + $0x78] sm:$0xff]
        %v2694 = vld [vmem:[%s308 + $0x80] sm:$0xff]
        %v2695 = vld [vmem:[%s308 + $0x88] sm:$0xff]
        %v2696 = vld [vmem:[%s308 + $0x90] sm:$0xff]
        %v2697 = vld [vmem:[%s308 + $0x98] sm:$0xff]
        %v2698 = vld [vmem:[%s308 + $0xa0] sm:$0xff]
        %v2699 = vld [vmem:[%s308 + $0xa8] sm:$0xff]
        %v2700 = vld [vmem:[%s308 + $0xb0] sm:$0xff]
        %v2701 = vld [vmem:[%s308 + $0xb8] sm:$0xff]
        %v2702 = vld [vmem:[%s308 + $0xc0] sm:$0xff]
        %v2703 = vld [vmem:[%s308 + $0xc8] sm:$0xff]
        %v2704 = vld [vmem:[%s308 + $0xd0] sm:$0xff]
        %v2705 = vld [vmem:[%s308 + $0xd8] sm:$0xff]
        %v2706 = vld [vmem:[%s308 + $0xe0] sm:$0xff]
        %v2707 = vld [vmem:[%s308 + $0xe8] sm:$0xff]
        %v2708 = vld [vmem:[%s308 + $0xf0] sm:$0xff]
        %v2709 = vld [vmem:[%s308 + $0xf8] sm:$0xff]
        %s2710 = sld [smem:[#allocation2 + $0x6]]
        %v2711 = vstv %s2710
        %v2712 = vmul.f32 %v2711, %v2662
        %v2713 = vmul.f32 %v2711, %v2663
        %v2714 = vmul.f32 %v2711, %v2664
        %v2715 = vmul.f32 %v2711, %v2665
        %v2716 = vmul.f32 %v2711, %v2666
        %v2717 = vmul.f32 %v2711, %v2667
        %v2718 = vmul.f32 %v2711, %v2668
        %v2719 = vmul.f32 %v2711, %v2669
        %v2720 = vmul.f32 %v2711, %v2670
        %v2721 = vmul.f32 %v2711, %v2671
        %v2722 = vmul.f32 %v2711, %v2672
        %v2723 = vmul.f32 %v2711, %v2673
        %v2724 = vmul.f32 %v2711, %v2674
        %v2725 = vmul.f32 %v2711, %v2675
        %v2726 = vmul.f32 %v2711, %v2676
        %v2727 = vmul.f32 %v2711, %v2677
        %v2728 = vpack.c.bf16 %v2713, %v2712
        %v2729 = vpack.c.bf16 %v2715, %v2714
        %v2730 = vpack.c.bf16 %v2717, %v2716
        %v2731 = vpack.c.bf16 %v2719, %v2718
        %v2732 = vpack.c.bf16 %v2721, %v2720
        %v2733 = vpack.c.bf16 %v2723, %v2722
        %v2734 = vpack.c.bf16 %v2725, %v2724
        %v2735 = vpack.c.bf16 %v2727, %v2726
        %2736 = vmatprep.subr.bf16.mxu0 %v449
        %2737 = vmatpush1.bf16.msra.mxu0 %v448
        %2738 = vmatprep.subr.bf16.mxu0 %v451
        %2739 = vmatpush1.bf16.msra.mxu0 %v450
        %2740 = vmatprep.subr.bf16.mxu0 %v453
        %2741 = vmatpush1.bf16.msra.mxu0 %v452
        %2742 = vmatprep.subr.bf16.mxu0 %v455
        %2743 = vmatpush1.bf16.msra.mxu0 %v454
        %2744 = vmatprep.subr.bf16.mxu0 %v457
        %2745 = vmatpush1.bf16.msra.mxu0 %v456
        %2746 = vmatprep.subr.bf16.mxu0 %v459
        %2747 = vmatpush1.bf16.msra.mxu0 %v458
        %2748 = vmatprep.subr.bf16.mxu0 %v461
        %2749 = vmatpush1.bf16.msra.mxu0 %v460
        %2750 = vmatprep.subr.bf16.mxu0 %v463
        %2751 = vmatpush1.bf16.msra.mxu0 %v462
        %2752 = vmatprep.subr.bf16.mxu0 0
        %2753 = vmatpush1.bf16.msra.mxu0 0
        %2754 = vmatprep.subr.bf16.mxu0 0
        %2755 = vmatpush1.bf16.msra.mxu0 0
        %2756 = vmatprep.subr.bf16.mxu0 0
        %2757 = vmatpush1.bf16.msra.mxu0 0
        %2758 = vmatprep.subr.bf16.mxu0 0
        %2759 = vmatpush1.bf16.msra.mxu0 0
        %2760 = vmatprep.subr.bf16.mxu0 0
        %2761 = vmatpush1.bf16.msra.mxu0 0
        %2762 = vmatprep.subr.bf16.mxu0 0
        %2763 = vmatpush1.bf16.msra.mxu0 0
        %2764 = vmatprep.subr.bf16.mxu0 0
        %2765 = vmatpush1.bf16.msra.mxu0 0
        %2766 = vmatprep.subr.bf16.mxu0 0
        %2767 = vmatpush1.bf16.msra.mxu0 0
        %2768 = vmatprep.mubr.bf16.mxu0 0
        %2769 = vmatmul.mubr.bf16.gmra.mrb[0].mxu0 %v2728
        %v2770 = vpop.f32.mrb[0].mxu0
        %v2771 = vadd.f32 0.0, %v2770
        %v2772 = vpop.f32.mrb[0].mxu0
        %v2773 = vadd.f32 0.0, %v2772
        %v2774 = vpop.f32.mrb[0].mxu0
        %v2775 = vadd.f32 0.0, %v2774
        %v2776 = vpop.f32.mrb[0].mxu0
        %v2777 = vadd.f32 0.0, %v2776
        %2778 = vmatprep.mubr.bf16.mxu0 0
        %2779 = vmatmul.mubr.bf16.gmra.mrb[0].mxu0 %v2729
        %v2780 = vpop.f32.mrb[0].mxu0
        %v2781 = vadd.f32 0.0, %v2780
        %v2782 = vpop.f32.mrb[0].mxu0
        %v2783 = vadd.f32 0.0, %v2782
        %v2784 = vpop.f32.mrb[0].mxu0
        %v2785 = vadd.f32 0.0, %v2784
        %v2786 = vpop.f32.mrb[0].mxu0
        %v2787 = vadd.f32 0.0, %v2786
        %2788 = vmatprep.mubr.bf16.mxu0 0
        %2789 = vmatmul.mubr.bf16.gmra.mrb[0].mxu0 %v2730
        %v2790 = vpop.f32.mrb[0].mxu0
        %v2791 = vadd.f32 0.0, %v2790
        %v2792 = vpop.f32.mrb[0].mxu0
        %v2793 = vadd.f32 0.0, %v2792
        %v2794 = vpop.f32.mrb[0].mxu0
        %v2795 = vadd.f32 0.0, %v2794
        %v2796 = vpop.f32.mrb[0].mxu0
        %v2797 = vadd.f32 0.0, %v2796
        %2798 = vmatprep.mubr.bf16.mxu0 0
        %2799 = vmatmul.mubr.bf16.gmra.mrb[0].mxu0 %v2731
        %v2800 = vpop.f32.mrb[0].mxu0
        %v2801 = vadd.f32 0.0, %v2800
        %v2802 = vpop.f32.mrb[0].mxu0
        %v2803 = vadd.f32 0.0, %v2802
        %v2804 = vpop.f32.mrb[0].mxu0
        %v2805 = vadd.f32 0.0, %v2804
        %v2806 = vpop.f32.mrb[0].mxu0
        %v2807 = vadd.f32 0.0, %v2806
        %2808 = vmatprep.mubr.bf16.mxu0 0
        %2809 = vmatmul.mubr.bf16.gmra.mrb[0].mxu0 %v2732
        %v2810 = vpop.f32.mrb[0].mxu0
        %v2811 = vadd.f32 0.0, %v2810
        %v2812 = vpop.f32.mrb[0].mxu0
        %v2813 = vadd.f32 0.0, %v2812
        %v2814 = vpop.f32.mrb[0].mxu0
        %v2815 = vadd.f32 0.0, %v2814
        %v2816 = vpop.f32.mrb[0].mxu0
        %v2817 = vadd.f32 0.0, %v2816
        %2818 = vmatprep.mubr.bf16.mxu0 0
        %2819 = vmatmul.mubr.bf16.gmra.mrb[0].mxu0 %v2733
        %v2820 = vpop.f32.mrb[0].mxu0
        %v2821 = vadd.f32 0.0, %v2820
        %v2822 = vpop.f32.mrb[0].mxu0
        %v2823 = vadd.f32 0.0, %v2822
        %v2824 = vpop.f32.mrb[0].mxu0
        %v2825 = vadd.f32 0.0, %v2824
        %v2826 = vpop.f32.mrb[0].mxu0
        %v2827 = vadd.f32 0.0, %v2826
        %2828 = vmatprep.mubr.bf16.mxu0 0
        %2829 = vmatmul.mubr.bf16.gmra.mrb[0].mxu0 %v2734
        %v2830 = vpop.f32.mrb[0].mxu0
        %v2831 = vadd.f32 0.0, %v2830
        %v2832 = vpop.f32.mrb[0].mxu0
        %v2833 = vadd.f32 0.0, %v2832
        %v2834 = vpop.f32.mrb[0].mxu0
        %v2835 = vadd.f32 0.0, %v2834
        %v2836 = vpop.f32.mrb[0].mxu0
        %v2837 = vadd.f32 0.0, %v2836
        %2838 = vmatprep.mubr.bf16.mxu0 0
        %2839 = vmatmul.mubr.bf16.gmra.mrb[0].mxu0 %v2735
        %v2840 = vpop.f32.mrb[0].mxu0
        %v2841 = vadd.f32 0.0, %v2840
        %v2842 = vpop.f32.mrb[0].mxu0
        %v2843 = vadd.f32 0.0, %v2842
        %v2844 = vpop.f32.mrb[0].mxu0
        %v2845 = vadd.f32 0.0, %v2844
        %v2846 = vpop.f32.mrb[0].mxu0
        %v2847 = vadd.f32 0.0, %v2846
        %2848 = vdwg.mxu0
        %v2849 = vadd.f32 %v2678, %v2771
        %v2850 = vadd.f32 %v2679, %v2773
        %v2851 = vadd.f32 %v2680, %v2775
        %v2852 = vadd.f32 %v2681, %v2777
        %v2853 = vadd.f32 %v2682, %v2781
        %v2854 = vadd.f32 %v2683, %v2783
        %v2855 = vadd.f32 %v2684, %v2785
        %v2856 = vadd.f32 %v2685, %v2787
        %v2857 = vadd.f32 %v2686, %v2791
        %v2858 = vadd.f32 %v2687, %v2793
        %v2859 = vadd.f32 %v2688, %v2795
        %v2860 = vadd.f32 %v2689, %v2797
        %v2861 = vadd.f32 %v2690, %v2801
        %v2862 = vadd.f32 %v2691, %v2803
        %v2863 = vadd.f32 %v2692, %v2805
        %v2864 = vadd.f32 %v2693, %v2807
        %v2865 = vadd.f32 %v2694, %v2811
        %v2866 = vadd.f32 %v2695, %v2813
        %v2867 = vadd.f32 %v2696, %v2815
        %v2868 = vadd.f32 %v2697, %v2817
        %v2869 = vadd.f32 %v2698, %v2821
        %v2870 = vadd.f32 %v2699, %v2823
        %v2871 = vadd.f32 %v2700, %v2825
        %v2872 = vadd.f32 %v2701, %v2827
        %v2873 = vadd.f32 %v2702, %v2831
        %v2874 = vadd.f32 %v2703, %v2833
        %v2875 = vadd.f32 %v2704, %v2835
        %v2876 = vadd.f32 %v2705, %v2837
        %v2877 = vadd.f32 %v2706, %v2841
        %v2878 = vadd.f32 %v2707, %v2843
        %v2879 = vadd.f32 %v2708, %v2845
        %v2880 = vadd.f32 %v2709, %v2847
        %2881 = vst [vmem:[%s308] sm:$0xff] %v2849
        %2882 = vst [vmem:[%s308 + $0x8] sm:$0xff] %v2850
        %2883 = vst [vmem:[%s308 + $0x10] sm:$0xff] %v2851
        %2884 = vst [vmem:[%s308 + $0x18] sm:$0xff] %v2852
        %2885 = vst [vmem:[%s308 + $0x20] sm:$0xff] %v2853
        %2886 = vst [vmem:[%s308 + $0x28] sm:$0xff] %v2854
        %2887 = vst [vmem:[%s308 + $0x30] sm:$0xff] %v2855
        %2888 = vst [vmem:[%s308 + $0x38] sm:$0xff] %v2856
        %2889 = vst [vmem:[%s308 + $0x40] sm:$0xff] %v2857
        %2890 = vst [vmem:[%s308 + $0x48] sm:$0xff] %v2858
        %2891 = vst [vmem:[%s308 + $0x50] sm:$0xff] %v2859
        %2892 = vst [vmem:[%s308 + $0x58] sm:$0xff] %v2860
        %2893 = vst [vmem:[%s308 + $0x60] sm:$0xff] %v2861
        %2894 = vst [vmem:[%s308 + $0x68] sm:$0xff] %v2862
        %2895 = vst [vmem:[%s308 + $0x70] sm:$0xff] %v2863
        %2896 = vst [vmem:[%s308 + $0x78] sm:$0xff] %v2864
        %2897 = vst [vmem:[%s308 + $0x80] sm:$0xff] %v2865
        %2898 = vst [vmem:[%s308 + $0x88] sm:$0xff] %v2866
        %2899 = vst [vmem:[%s308 + $0x90] sm:$0xff] %v2867
        %2900 = vst [vmem:[%s308 + $0x98] sm:$0xff] %v2868
        %2901 = vst [vmem:[%s308 + $0xa0] sm:$0xff] %v2869
        %2902 = vst [vmem:[%s308 + $0xa8] sm:$0xff] %v2870
        %2903 = vst [vmem:[%s308 + $0xb0] sm:$0xff] %v2871
        %2904 = vst [vmem:[%s308 + $0xb8] sm:$0xff] %v2872
        %2905 = vst [vmem:[%s308 + $0xc0] sm:$0xff] %v2873
        %2906 = vst [vmem:[%s308 + $0xc8] sm:$0xff] %v2874
        %2907 = vst [vmem:[%s308 + $0xd0] sm:$0xff] %v2875
        %2908 = vst [vmem:[%s308 + $0xd8] sm:$0xff] %v2876
        %2909 = vst [vmem:[%s308 + $0xe0] sm:$0xff] %v2877
        %2910 = vst [vmem:[%s308 + $0xe8] sm:$0xff] %v2878
        %2911 = vst [vmem:[%s308 + $0xf0] sm:$0xff] %v2879
        %2912 = vst [vmem:[%s308 + $0xf8] sm:$0xff] %v2880
        %v2913 = vmul.f32 %v2662, 2.0
        %v2914 = vmul.f32 %v2663, 2.0
        %v2915 = vmul.f32 %v2664, 2.0
        %v2916 = vmul.f32 %v2665, 2.0
        %v2917 = vmul.f32 %v2666, 2.0
        %v2918 = vmul.f32 %v2667, 2.0
        %v2919 = vmul.f32 %v2668, 2.0
        %v2920 = vmul.f32 %v2669, 2.0
        %v2921 = vmul.f32 %v2670, 2.0
        %v2922 = vmul.f32 %v2671, 2.0
        %v2923 = vmul.f32 %v2672, 2.0
        %v2924 = vmul.f32 %v2673, 2.0
        %v2925 = vmul.f32 %v2674, 2.0
        %v2926 = vmul.f32 %v2675, 2.0
        %v2927 = vmul.f32 %v2676, 2.0
        %v2928 = vmul.f32 %v2677, 2.0
        %v2929 = vpack.c.bf16 %v2914, %v2913
        %v2930 = vpack.c.bf16 %v2916, %v2915
        %v2931 = vpack.c.bf16 %v2918, %v2917
        %v2932 = vpack.c.bf16 %v2920, %v2919
        %v2933 = vpack.c.bf16 %v2922, %v2921
        %v2934 = vpack.c.bf16 %v2924, %v2923
        %v2935 = vpack.c.bf16 %v2926, %v2925
        %v2936 = vpack.c.bf16 %v2928, %v2927
        %2937 = vmatprep.subr.bf16.mxu0 0
        %2938 = vmatpush1.bf16.msra.mxu0 %v2929
        %2939 = vmatprep.subr.bf16.mxu0 0
        %2940 = vmatpush1.bf16.msra.mxu0 %v2930
        %2941 = vmatprep.subr.bf16.mxu0 0
        %2942 = vmatpush1.bf16.msra.mxu0 %v2931
        %2943 = vmatprep.subr.bf16.mxu0 0
        %2944 = vmatpush1.bf16.msra.mxu0 %v2932
        %2945 = vmatprep.subr.bf16.mxu0 0
        %2946 = vmatpush1.bf16.msra.mxu0 %v2933
        %2947 = vmatprep.subr.bf16.mxu0 0
        %2948 = vmatpush1.bf16.msra.mxu0 %v2934
        %2949 = vmatprep.subr.bf16.mxu0 0
        %2950 = vmatpush1.bf16.msra.mxu0 %v2935
        %2951 = vmatprep.subr.bf16.mxu0 0
        %2952 = vmatpush1.bf16.msra.mxu0 %v2936
        %2953 = vmatprep.subr.bf16.mxu0 0
        %2954 = vmatpush1.bf16.msra.mxu0 0
        %2955 = vmatprep.subr.bf16.mxu0 0
        %2956 = vmatpush1.bf16.msra.mxu0 0
        %2957 = vmatprep.subr.bf16.mxu0 0
        %2958 = vmatpush1.bf16.msra.mxu0 0
        %2959 = vmatprep.subr.bf16.mxu0 0
        %2960 = vmatpush1.bf16.msra.mxu0 0
        %2961 = vmatprep.subr.bf16.mxu0 0
        %2962 = vmatpush1.bf16.msra.mxu0 0
        %2963 = vmatprep.subr.bf16.mxu0 0
        %2964 = vmatpush1.bf16.msra.mxu0 0
        %2965 = vmatprep.subr.bf16.mxu0 0
        %2966 = vmatpush1.bf16.msra.mxu0 0
        %2967 = vmatprep.subr.bf16.mxu0 0
        %2968 = vmatpush1.bf16.msra.mxu0 0
        %2969 = vmatprep.mubr.bf16.mxu0 0
        %2970 = vmatmul.mubr.bf16.gmra.mrb[0].mxu0 %v657
        %v2971 = vpop.f32.mrb[0].mxu0
        %v2972 = vadd.f32 0.0, %v2971
        %v2973 = vpop.f32.mrb[0].mxu0
        %v2974 = vpop.f32.mrb[0].mxu0
        %v2975 = vadd.f32 0.0, %v2974
        %v2976 = vpop.f32.mrb[0].mxu0
        %2977 = vmatprep.mubr.bf16.mxu0 0
        %2978 = vmatmul.mubr.bf16.gmra.mrb[0].mxu0 %v658
        %v2979 = vpop.f32.mrb[0].mxu0
        %v2980 = vadd.f32 0.0, %v2979
        %v2981 = vpop.f32.mrb[0].mxu0
        %v2982 = vpop.f32.mrb[0].mxu0
        %v2983 = vadd.f32 0.0, %v2982
        %v2984 = vpop.f32.mrb[0].mxu0
        %2985 = vmatprep.mubr.bf16.mxu0 0
        %2986 = vmatmul.mubr.bf16.gmra.mrb[0].mxu0 %v659
        %v2987 = vpop.f32.mrb[0].mxu0
        %v2988 = vadd.f32 0.0, %v2987
        %v2989 = vpop.f32.mrb[0].mxu0
        %v2990 = vpop.f32.mrb[0].mxu0
        %v2991 = vadd.f32 0.0, %v2990
        %v2992 = vpop.f32.mrb[0].mxu0
        %2993 = vmatprep.mubr.bf16.mxu0 0
        %2994 = vmatmul.mubr.bf16.gmra.mrb[0].mxu0 %v660
        %v2995 = vpop.f32.mrb[0].mxu0
        %v2996 = vadd.f32 0.0, %v2995
        %v2997 = vpop.f32.mrb[0].mxu0
        %v2998 = vpop.f32.mrb[0].mxu0
        %v2999 = vadd.f32 0.0, %v2998
        %v3000 = vpop.f32.mrb[0].mxu0
        %3001 = vmatprep.mubr.bf16.mxu0 0
        %3002 = vmatmul.mubr.bf16.gmra.mrb[0].mxu0 %v661
        %v3003 = vpop.f32.mrb[0].mxu0
        %v3004 = vadd.f32 0.0, %v3003
        %v3005 = vpop.f32.mrb[0].mxu0
        %v3006 = vpop.f32.mrb[0].mxu0
        %v3007 = vadd.f32 0.0, %v3006
        %v3008 = vpop.f32.mrb[0].mxu0
        %3009 = vmatprep.mubr.bf16.mxu0 0
        %3010 = vmatmul.mubr.bf16.gmra.mrb[0].mxu0 %v662
        %v3011 = vpop.f32.mrb[0].mxu0
        %v3012 = vadd.f32 0.0, %v3011
        %v3013 = vpop.f32.mrb[0].mxu0
        %v3014 = vpop.f32.mrb[0].mxu0
        %v3015 = vadd.f32 0.0, %v3014
        %v3016 = vpop.f32.mrb[0].mxu0
        %3017 = vmatprep.mubr.bf16.mxu0 0
        %3018 = vmatmul.mubr.bf16.gmra.mrb[0].mxu0 %v663
        %v3019 = vpop.f32.mrb[0].mxu0
        %v3020 = vadd.f32 0.0, %v3019
        %v3021 = vpop.f32.mrb[0].mxu0
        %v3022 = vpop.f32.mrb[0].mxu0
        %v3023 = vadd.f32 0.0, %v3022
        %v3024 = vpop.f32.mrb[0].mxu0
        %3025 = vmatprep.mubr.bf16.mxu0 0
        %3026 = vmatmul.mubr.bf16.gmra.mrb[0].mxu0 %v664
        %v3027 = vpop.f32.mrb[0].mxu0
        %v3028 = vadd.f32 0.0, %v3027
        %v3029 = vpop.f32.mrb[0].mxu0
        %v3030 = vpop.f32.mrb[0].mxu0
        %v3031 = vadd.f32 0.0, %v3030
        %v3032 = vpop.f32.mrb[0].mxu0
        %3033 = vdwg.mxu0
        %v3034 = vsub.f32 %v2972, %v2290
        %v3035 = vsub.f32 %v2975, %v2291
        %v3036 = vsub.f32 %v2980, %v2292
        %v3037 = vsub.f32 %v2983, %v2293
        %v3038 = vsub.f32 %v2988, %v2294
        %v3039 = vsub.f32 %v2991, %v2295
        %v3040 = vsub.f32 %v2996, %v2296
        %v3041 = vsub.f32 %v2999, %v2297
        %v3042 = vsub.f32 %v3004, %v2298
        %v3043 = vsub.f32 %v3007, %v2299
        %v3044 = vsub.f32 %v3012, %v2300
        %v3045 = vsub.f32 %v3015, %v2301
        %v3046 = vsub.f32 %v3020, %v2302
        %v3047 = vsub.f32 %v3023, %v2303
        %v3048 = vsub.f32 %v3028, %v2304
        %v3049 = vsub.f32 %v3031, %v2305
        %v3050 = vld [vmem:[%s308] sm:$0xff]
        %v3051 = vld [vmem:[%s308 + $0x8] sm:$0xff]
        %v3052 = vld [vmem:[%s308 + $0x10] sm:$0xff]
        %v3053 = vld [vmem:[%s308 + $0x18] sm:$0xff]
        %v3054 = vld [vmem:[%s308 + $0x20] sm:$0xff]
        %v3055 = vld [vmem:[%s308 + $0x28] sm:$0xff]
        %v3056 = vld [vmem:[%s308 + $0x30] sm:$0xff]
        %v3057 = vld [vmem:[%s308 + $0x38] sm:$0xff]
        %v3058 = vld [vmem:[%s308 + $0x40] sm:$0xff]
        %v3059 = vld [vmem:[%s308 + $0x48] sm:$0xff]
        %v3060 = vld [vmem:[%s308 + $0x50] sm:$0xff]
        %v3061 = vld [vmem:[%s308 + $0x58] sm:$0xff]
        %v3062 = vld [vmem:[%s308 + $0x60] sm:$0xff]
        %v3063 = vld [vmem:[%s308 + $0x68] sm:$0xff]
        %v3064 = vld [vmem:[%s308 + $0x70] sm:$0xff]
        %v3065 = vld [vmem:[%s308 + $0x78] sm:$0xff]
        %v3066 = vld [vmem:[%s308 + $0x80] sm:$0xff]
        %v3067 = vld [vmem:[%s308 + $0x88] sm:$0xff]
        %v3068 = vld [vmem:[%s308 + $0x90] sm:$0xff]
        %v3069 = vld [vmem:[%s308 + $0x98] sm:$0xff]
        %v3070 = vld [vmem:[%s308 + $0xa0] sm:$0xff]
        %v3071 = vld [vmem:[%s308 + $0xa8] sm:$0xff]
        %v3072 = vld [vmem:[%s308 + $0xb0] sm:$0xff]
        %v3073 = vld [vmem:[%s308 + $0xb8] sm:$0xff]
        %v3074 = vld [vmem:[%s308 + $0xc0] sm:$0xff]
        %v3075 = vld [vmem:[%s308 + $0xc8] sm:$0xff]
        %v3076 = vld [vmem:[%s308 + $0xd0] sm:$0xff]
        %v3077 = vld [vmem:[%s308 + $0xd8] sm:$0xff]
        %v3078 = vld [vmem:[%s308 + $0xe0] sm:$0xff]
        %v3079 = vld [vmem:[%s308 + $0xe8] sm:$0xff]
        %v3080 = vld [vmem:[%s308 + $0xf0] sm:$0xff]
        %v3081 = vld [vmem:[%s308 + $0xf8] sm:$0xff]
        %s3082 = sld [smem:[#allocation2 + $0x7]]
        %v3083 = vstv %s3082
        %v3084 = vmul.f32 %v3083, %v3034
        %v3085 = vmul.f32 %v3083, %v3035
        %v3086 = vmul.f32 %v3083, %v3036
        %v3087 = vmul.f32 %v3083, %v3037
        %v3088 = vmul.f32 %v3083, %v3038
        %v3089 = vmul.f32 %v3083, %v3039
        %v3090 = vmul.f32 %v3083, %v3040
        %v3091 = vmul.f32 %v3083, %v3041
        %v3092 = vmul.f32 %v3083, %v3042
        %v3093 = vmul.f32 %v3083, %v3043
        %v3094 = vmul.f32 %v3083, %v3044
        %v3095 = vmul.f32 %v3083, %v3045
        %v3096 = vmul.f32 %v3083, %v3046
        %v3097 = vmul.f32 %v3083, %v3047
        %v3098 = vmul.f32 %v3083, %v3048
        %v3099 = vmul.f32 %v3083, %v3049
        %v3100 = vpack.c.bf16 %v3085, %v3084
        %v3101 = vpack.c.bf16 %v3087, %v3086
        %v3102 = vpack.c.bf16 %v3089, %v3088
        %v3103 = vpack.c.bf16 %v3091, %v3090
        %v3104 = vpack.c.bf16 %v3093, %v3092
        %v3105 = vpack.c.bf16 %v3095, %v3094
        %v3106 = vpack.c.bf16 %v3097, %v3096
        %v3107 = vpack.c.bf16 %v3099, %v3098
        %3108 = vmatprep.subr.bf16.mxu0 %v449
        %3109 = vmatpush1.bf16.msra.mxu0 %v448
        %3110 = vmatprep.subr.bf16.mxu0 %v451
        %3111 = vmatpush1.bf16.msra.mxu0 %v450
        %3112 = vmatprep.subr.bf16.mxu0 %v453
        %3113 = vmatpush1.bf16.msra.mxu0 %v452
        %3114 = vmatprep.subr.bf16.mxu0 %v455
        %3115 = vmatpush1.bf16.msra.mxu0 %v454
        %3116 = vmatprep.subr.bf16.mxu0 %v457
        %3117 = vmatpush1.bf16.msra.mxu0 %v456
        %3118 = vmatprep.subr.bf16.mxu0 %v459
        %3119 = vmatpush1.bf16.msra.mxu0 %v458
        %3120 = vmatprep.subr.bf16.mxu0 %v461
        %3121 = vmatpush1.bf16.msra.mxu0 %v460
        %3122 = vmatprep.subr.bf16.mxu0 %v463
        %3123 = vmatpush1.bf16.msra.mxu0 %v462
        %3124 = vmatprep.subr.bf16.mxu0 0
        %3125 = vmatpush1.bf16.msra.mxu0 0
        %3126 = vmatprep.subr.bf16.mxu0 0
        %3127 = vmatpush1.bf16.msra.mxu0 0
        %3128 = vmatprep.subr.bf16.mxu0 0
        %3129 = vmatpush1.bf16.msra.mxu0 0
        %3130 = vmatprep.subr.bf16.mxu0 0
        %3131 = vmatpush1.bf16.msra.mxu0 0
        %3132 = vmatprep.subr.bf16.mxu0 0
        %3133 = vmatpush1.bf16.msra.mxu0 0
        %3134 = vmatprep.subr.bf16.mxu0 0
        %3135 = vmatpush1.bf16.msra.mxu0 0
        %3136 = vmatprep.subr.bf16.mxu0 0
        %3137 = vmatpush1.bf16.msra.mxu0 0
        %3138 = vmatprep.subr.bf16.mxu0 0
        %3139 = vmatpush1.bf16.msra.mxu0 0
        %3140 = vmatprep.mubr.bf16.mxu0 0
        %3141 = vmatmul.mubr.bf16.gmra.mrb[0].mxu0 %v3100
        %v3142 = vpop.f32.mrb[0].mxu0
        %v3143 = vadd.f32 0.0, %v3142
        %v3144 = vpop.f32.mrb[0].mxu0
        %v3145 = vadd.f32 0.0, %v3144
        %v3146 = vpop.f32.mrb[0].mxu0
        %v3147 = vadd.f32 0.0, %v3146
        %v3148 = vpop.f32.mrb[0].mxu0
        %v3149 = vadd.f32 0.0, %v3148
        %3150 = vmatprep.mubr.bf16.mxu0 0
        %3151 = vmatmul.mubr.bf16.gmra.mrb[0].mxu0 %v3101
        %v3152 = vpop.f32.mrb[0].mxu0
        %v3153 = vadd.f32 0.0, %v3152
        %v3154 = vpop.f32.mrb[0].mxu0
        %v3155 = vadd.f32 0.0, %v3154
        %v3156 = vpop.f32.mrb[0].mxu0
        %v3157 = vadd.f32 0.0, %v3156
        %v3158 = vpop.f32.mrb[0].mxu0
        %v3159 = vadd.f32 0.0, %v3158
        %3160 = vmatprep.mubr.bf16.mxu0 0
        %3161 = vmatmul.mubr.bf16.gmra.mrb[0].mxu0 %v3102
        %v3162 = vpop.f32.mrb[0].mxu0
        %v3163 = vadd.f32 0.0, %v3162
        %v3164 = vpop.f32.mrb[0].mxu0
        %v3165 = vadd.f32 0.0, %v3164
        %v3166 = vpop.f32.mrb[0].mxu0
        %v3167 = vadd.f32 0.0, %v3166
        %v3168 = vpop.f32.mrb[0].mxu0
        %v3169 = vadd.f32 0.0, %v3168
        %3170 = vmatprep.mubr.bf16.mxu0 0
        %3171 = vmatmul.mubr.bf16.gmra.mrb[0].mxu0 %v3103
        %v3172 = vpop.f32.mrb[0].mxu0
        %v3173 = vadd.f32 0.0, %v3172
        %v3174 = vpop.f32.mrb[0].mxu0
        %v3175 = vadd.f32 0.0, %v3174
        %v3176 = vpop.f32.mrb[0].mxu0
        %v3177 = vadd.f32 0.0, %v3176
        %v3178 = vpop.f32.mrb[0].mxu0
        %v3179 = vadd.f32 0.0, %v3178
        %3180 = vmatprep.mubr.bf16.mxu0 0
        %3181 = vmatmul.mubr.bf16.gmra.mrb[0].mxu0 %v3104
        %v3182 = vpop.f32.mrb[0].mxu0
        %v3183 = vadd.f32 0.0, %v3182
        %v3184 = vpop.f32.mrb[0].mxu0
        %v3185 = vadd.f32 0.0, %v3184
        %v3186 = vpop.f32.mrb[0].mxu0
        %v3187 = vadd.f32 0.0, %v3186
        %v3188 = vpop.f32.mrb[0].mxu0
        %v3189 = vadd.f32 0.0, %v3188
        %3190 = vmatprep.mubr.bf16.mxu0 0
        %3191 = vmatmul.mubr.bf16.gmra.mrb[0].mxu0 %v3105
        %v3192 = vpop.f32.mrb[0].mxu0
        %v3193 = vadd.f32 0.0, %v3192
        %v3194 = vpop.f32.mrb[0].mxu0
        %v3195 = vadd.f32 0.0, %v3194
        %v3196 = vpop.f32.mrb[0].mxu0
        %v3197 = vadd.f32 0.0, %v3196
        %v3198 = vpop.f32.mrb[0].mxu0
        %v3199 = vadd.f32 0.0, %v3198
        %3200 = vmatprep.mubr.bf16.mxu0 0
        %3201 = vmatmul.mubr.bf16.gmra.mrb[0].mxu0 %v3106
        %v3202 = vpop.f32.mrb[0].mxu0
        %v3203 = vadd.f32 0.0, %v3202
        %v3204 = vpop.f32.mrb[0].mxu0
        %v3205 = vadd.f32 0.0, %v3204
        %v3206 = vpop.f32.mrb[0].mxu0
        %v3207 = vadd.f32 0.0, %v3206
        %v3208 = vpop.f32.mrb[0].mxu0
        %v3209 = vadd.f32 0.0, %v3208
        %3210 = vmatprep.mubr.bf16.mxu0 0
        %3211 = vmatmul.mubr.bf16.gmra.mrb[0].mxu0 %v3107
        %v3212 = vpop.f32.mrb[0].mxu0
        %v3213 = vadd.f32 0.0, %v3212
        %v3214 = vpop.f32.mrb[0].mxu0
        %v3215 = vadd.f32 0.0, %v3214
        %v3216 = vpop.f32.mrb[0].mxu0
        %v3217 = vadd.f32 0.0, %v3216
        %v3218 = vpop.f32.mrb[0].mxu0
        %v3219 = vadd.f32 0.0, %v3218
        %3220 = vdwg.mxu0
        %v3221 = vadd.f32 %v3050, %v3143
        %v3222 = vadd.f32 %v3051, %v3145
        %v3223 = vadd.f32 %v3052, %v3147
        %v3224 = vadd.f32 %v3053, %v3149
        %v3225 = vadd.f32 %v3054, %v3153
        %v3226 = vadd.f32 %v3055, %v3155
        %v3227 = vadd.f32 %v3056, %v3157
        %v3228 = vadd.f32 %v3057, %v3159
        %v3229 = vadd.f32 %v3058, %v3163
        %v3230 = vadd.f32 %v3059, %v3165
        %v3231 = vadd.f32 %v3060, %v3167
        %v3232 = vadd.f32 %v3061, %v3169
        %v3233 = vadd.f32 %v3062, %v3173
        %v3234 = vadd.f32 %v3063, %v3175
        %v3235 = vadd.f32 %v3064, %v3177
        %v3236 = vadd.f32 %v3065, %v3179
        %v3237 = vadd.f32 %v3066, %v3183
        %v3238 = vadd.f32 %v3067, %v3185
        %v3239 = vadd.f32 %v3068, %v3187
        %v3240 = vadd.f32 %v3069, %v3189
        %v3241 = vadd.f32 %v3070, %v3193
        %v3242 = vadd.f32 %v3071, %v3195
        %v3243 = vadd.f32 %v3072, %v3197
        %v3244 = vadd.f32 %v3073, %v3199
        %v3245 = vadd.f32 %v3074, %v3203
        %v3246 = vadd.f32 %v3075, %v3205
        %v3247 = vadd.f32 %v3076, %v3207
        %v3248 = vadd.f32 %v3077, %v3209
        %v3249 = vadd.f32 %v3078, %v3213
        %v3250 = vadd.f32 %v3079, %v3215
        %v3251 = vadd.f32 %v3080, %v3217
        %v3252 = vadd.f32 %v3081, %v3219
        %3253 = vst [vmem:[%s308] sm:$0xff] %v3221
        %3254 = vst [vmem:[%s308 + $0x8] sm:$0xff] %v3222
        %3255 = vst [vmem:[%s308 + $0x10] sm:$0xff] %v3223
        %3256 = vst [vmem:[%s308 + $0x18] sm:$0xff] %v3224
        %3257 = vst [vmem:[%s308 + $0x20] sm:$0xff] %v3225
        %3258 = vst [vmem:[%s308 + $0x28] sm:$0xff] %v3226
        %3259 = vst [vmem:[%s308 + $0x30] sm:$0xff] %v3227
        %3260 = vst [vmem:[%s308 + $0x38] sm:$0xff] %v3228
        %3261 = vst [vmem:[%s308 + $0x40] sm:$0xff] %v3229
        %3262 = vst [vmem:[%s308 + $0x48] sm:$0xff] %v3230
        %3263 = vst [vmem:[%s308 + $0x50] sm:$0xff] %v3231
        %3264 = vst [vmem:[%s308 + $0x58] sm:$0xff] %v3232
        %3265 = vst [vmem:[%s308 + $0x60] sm:$0xff] %v3233
        %3266 = vst [vmem:[%s308 + $0x68] sm:$0xff] %v3234
        %3267 = vst [vmem:[%s308 + $0x70] sm:$0xff] %v3235
        %3268 = vst [vmem:[%s308 + $0x78] sm:$0xff] %v3236
        %3269 = vst [vmem:[%s308 + $0x80] sm:$0xff] %v3237
        %3270 = vst [vmem:[%s308 + $0x88] sm:$0xff] %v3238
        %3271 = vst [vmem:[%s308 + $0x90] sm:$0xff] %v3239
        %3272 = vst [vmem:[%s308 + $0x98] sm:$0xff] %v3240
        %3273 = vst [vmem:[%s308 + $0xa0] sm:$0xff] %v3241
        %3274 = vst [vmem:[%s308 + $0xa8] sm:$0xff] %v3242
        %3275 = vst [vmem:[%s308 + $0xb0] sm:$0xff] %v3243
        %3276 = vst [vmem:[%s308 + $0xb8] sm:$0xff] %v3244
        %3277 = vst [vmem:[%s308 + $0xc0] sm:$0xff] %v3245
        %3278 = vst [vmem:[%s308 + $0xc8] sm:$0xff] %v3246
        %3279 = vst [vmem:[%s308 + $0xd0] sm:$0xff] %v3247
        %3280 = vst [vmem:[%s308 + $0xd8] sm:$0xff] %v3248
        %3281 = vst [vmem:[%s308 + $0xe0] sm:$0xff] %v3249
        %3282 = vst [vmem:[%s308 + $0xe8] sm:$0xff] %v3250
        %3283 = vst [vmem:[%s308 + $0xf0] sm:$0xff] %v3251
        %3284 = vst [vmem:[%s308 + $0xf8] sm:$0xff] %v3252
        %v3285 = vmul.f32 %v3034, 2.0
        %v3286 = vmul.f32 %v3035, 2.0
        %v3287 = vmul.f32 %v3036, 2.0
        %v3288 = vmul.f32 %v3037, 2.0
        %v3289 = vmul.f32 %v3038, 2.0
        %v3290 = vmul.f32 %v3039, 2.0
        %v3291 = vmul.f32 %v3040, 2.0
        %v3292 = vmul.f32 %v3041, 2.0
        %v3293 = vmul.f32 %v3042, 2.0
        %v3294 = vmul.f32 %v3043, 2.0
        %v3295 = vmul.f32 %v3044, 2.0
        %v3296 = vmul.f32 %v3045, 2.0
        %v3297 = vmul.f32 %v3046, 2.0
        %v3298 = vmul.f32 %v3047, 2.0
        %v3299 = vmul.f32 %v3048, 2.0
        %v3300 = vmul.f32 %v3049, 2.0
        %v3301 = vpack.c.bf16 %v3286, %v3285
        %v3302 = vpack.c.bf16 %v3288, %v3287
        %v3303 = vpack.c.bf16 %v3290, %v3289
        %v3304 = vpack.c.bf16 %v3292, %v3291
        %v3305 = vpack.c.bf16 %v3294, %v3293
        %v3306 = vpack.c.bf16 %v3296, %v3295
        %v3307 = vpack.c.bf16 %v3298, %v3297
        %v3308 = vpack.c.bf16 %v3300, %v3299
        %3309 = vmatprep.subr.bf16.mxu0 0
        %3310 = vmatpush1.bf16.msra.mxu0 %v3301
        %3311 = vmatprep.subr.bf16.mxu0 0
        %3312 = vmatpush1.bf16.msra.mxu0 %v3302
        %3313 = vmatprep.subr.bf16.mxu0 0
        %3314 = vmatpush1.bf16.msra.mxu0 %v3303
        %3315 = vmatprep.subr.bf16.mxu0 0
        %3316 = vmatpush1.bf16.msra.mxu0 %v3304
        %3317 = vmatprep.subr.bf16.mxu0 0
        %3318 = vmatpush1.bf16.msra.mxu0 %v3305
        %3319 = vmatprep.subr.bf16.mxu0 0
        %3320 = vmatpush1.bf16.msra.mxu0 %v3306
        %3321 = vmatprep.subr.bf16.mxu0 0
        %3322 = vmatpush1.bf16.msra.mxu0 %v3307
        %3323 = vmatprep.subr.bf16.mxu0 0
        %3324 = vmatpush1.bf16.msra.mxu0 %v3308
        %3325 = vmatprep.subr.bf16.mxu0 0
        %3326 = vmatpush1.bf16.msra.mxu0 0
        %3327 = vmatprep.subr.bf16.mxu0 0
        %3328 = vmatpush1.bf16.msra.mxu0 0
        %3329 = vmatprep.subr.bf16.mxu0 0
        %3330 = vmatpush1.bf16.msra.mxu0 0
        %3331 = vmatprep.subr.bf16.mxu0 0
        %3332 = vmatpush1.bf16.msra.mxu0 0
        %3333 = vmatprep.subr.bf16.mxu0 0
        %3334 = vmatpush1.bf16.msra.mxu0 0
        %3335 = vmatprep.subr.bf16.mxu0 0
        %3336 = vmatpush1.bf16.msra.mxu0 0
        %3337 = vmatprep.subr.bf16.mxu0 0
        %3338 = vmatpush1.bf16.msra.mxu0 0
        %3339 = vmatprep.subr.bf16.mxu0 0
        %3340 = vmatpush1.bf16.msra.mxu0 0
        %3341 = vmatprep.mubr.bf16.mxu0 0
        %3342 = vmatmul.mubr.bf16.gmra.mrb[0].mxu0 %v657
        %v3343 = vpop.f32.mrb[0].mxu0
        %v3344 = vadd.f32 0.0, %v3343
        %v3345 = vpop.f32.mrb[0].mxu0
        %v3346 = vpop.f32.mrb[0].mxu0
        %v3347 = vadd.f32 0.0, %v3346
        %v3348 = vpop.f32.mrb[0].mxu0
        %3349 = vmatprep.mubr.bf16.mxu0 0
        %3350 = vmatmul.mubr.bf16.gmra.mrb[0].mxu0 %v658
        %v3351 = vpop.f32.mrb[0].mxu0
        %v3352 = vadd.f32 0.0, %v3351
        %v3353 = vpop.f32.mrb[0].mxu0
        %v3354 = vpop.f32.mrb[0].mxu0
        %v3355 = vadd.f32 0.0, %v3354
        %v3356 = vpop.f32.mrb[0].mxu0
        %3357 = vmatprep.mubr.bf16.mxu0 0
        %3358 = vmatmul.mubr.bf16.gmra.mrb[0].mxu0 %v659
        %v3359 = vpop.f32.mrb[0].mxu0
        %v3360 = vadd.f32 0.0, %v3359
        %v3361 = vpop.f32.mrb[0].mxu0
        %v3362 = vpop.f32.mrb[0].mxu0
        %v3363 = vadd.f32 0.0, %v3362
        %v3364 = vpop.f32.mrb[0].mxu0
        %3365 = vmatprep.mubr.bf16.mxu0 0
        %3366 = vmatmul.mubr.bf16.gmra.mrb[0].mxu0 %v660
        %v3367 = vpop.f32.mrb[0].mxu0
        %v3368 = vadd.f32 0.0, %v3367
        %v3369 = vpop.f32.mrb[0].mxu0
        %v3370 = vpop.f32.mrb[0].mxu0
        %v3371 = vadd.f32 0.0, %v3370
        %v3372 = vpop.f32.mrb[0].mxu0
        %3373 = vmatprep.mubr.bf16.mxu0 0
        %3374 = vmatmul.mubr.bf16.gmra.mrb[0].mxu0 %v661
        %v3375 = vpop.f32.mrb[0].mxu0
        %v3376 = vadd.f32 0.0, %v3375
        %v3377 = vpop.f32.mrb[0].mxu0
        %v3378 = vpop.f32.mrb[0].mxu0
        %v3379 = vadd.f32 0.0, %v3378
        %v3380 = vpop.f32.mrb[0].mxu0
        %3381 = vmatprep.mubr.bf16.mxu0 0
        %3382 = vmatmul.mubr.bf16.gmra.mrb[0].mxu0 %v662
        %v3383 = vpop.f32.mrb[0].mxu0
        %v3384 = vadd.f32 0.0, %v3383
        %v3385 = vpop.f32.mrb[0].mxu0
        %v3386 = vpop.f32.mrb[0].mxu0
        %v3387 = vadd.f32 0.0, %v3386
        %v3388 = vpop.f32.mrb[0].mxu0
        %3389 = vmatprep.mubr.bf16.mxu0 0
        %3390 = vmatmul.mubr.bf16.gmra.mrb[0].mxu0 %v663
        %v3391 = vpop.f32.mrb[0].mxu0
        %v3392 = vadd.f32 0.0, %v3391
        %v3393 = vpop.f32.mrb[0].mxu0
        %v3394 = vpop.f32.mrb[0].mxu0
        %v3395 = vadd.f32 0.0, %v3394
        %v3396 = vpop.f32.mrb[0].mxu0
        %3397 = vmatprep.mubr.bf16.mxu0 0
        %3398 = vmatmul.mubr.bf16.gmra.mrb[0].mxu0 %v664
        %v3399 = vpop.f32.mrb[0].mxu0
        %v3400 = vadd.f32 0.0, %v3399
        %v3401 = vpop.f32.mrb[0].mxu0
        %v3402 = vpop.f32.mrb[0].mxu0
        %v3403 = vadd.f32 0.0, %v3402
        %v3404 = vpop.f32.mrb[0].mxu0
        %3405 = vdwg.mxu0
        %v3406 = vsub.f32 %v3344, %v2662
        %v3407 = vsub.f32 %v3347, %v2663
        %v3408 = vsub.f32 %v3352, %v2664
        %v3409 = vsub.f32 %v3355, %v2665
        %v3410 = vsub.f32 %v3360, %v2666
        %v3411 = vsub.f32 %v3363, %v2667
        %v3412 = vsub.f32 %v3368, %v2668
        %v3413 = vsub.f32 %v3371, %v2669
        %v3414 = vsub.f32 %v3376, %v2670
        %v3415 = vsub.f32 %v3379, %v2671
        %v3416 = vsub.f32 %v3384, %v2672
        %v3417 = vsub.f32 %v3387, %v2673
        %v3418 = vsub.f32 %v3392, %v2674
        %v3419 = vsub.f32 %v3395, %v2675
        %v3420 = vsub.f32 %v3400, %v2676
        %v3421 = vsub.f32 %v3403, %v2677
        %v3422 = vld [vmem:[%s308] sm:$0xff]
        %v3423 = vld [vmem:[%s308 + $0x8] sm:$0xff]
        %v3424 = vld [vmem:[%s308 + $0x10] sm:$0xff]
        %v3425 = vld [vmem:[%s308 + $0x18] sm:$0xff]
        %v3426 = vld [vmem:[%s308 + $0x20] sm:$0xff]
        %v3427 = vld [vmem:[%s308 + $0x28] sm:$0xff]
        %v3428 = vld [vmem:[%s308 + $0x30] sm:$0xff]
        %v3429 = vld [vmem:[%s308 + $0x38] sm:$0xff]
        %v3430 = vld [vmem:[%s308 + $0x40] sm:$0xff]
        %v3431 = vld [vmem:[%s308 + $0x48] sm:$0xff]
        %v3432 = vld [vmem:[%s308 + $0x50] sm:$0xff]
        %v3433 = vld [vmem:[%s308 + $0x58] sm:$0xff]
        %v3434 = vld [vmem:[%s308 + $0x60] sm:$0xff]
        %v3435 = vld [vmem:[%s308 + $0x68] sm:$0xff]
        %v3436 = vld [vmem:[%s308 + $0x70] sm:$0xff]
        %v3437 = vld [vmem:[%s308 + $0x78] sm:$0xff]
        %v3438 = vld [vmem:[%s308 + $0x80] sm:$0xff]
        %v3439 = vld [vmem:[%s308 + $0x88] sm:$0xff]
        %v3440 = vld [vmem:[%s308 + $0x90] sm:$0xff]
        %v3441 = vld [vmem:[%s308 + $0x98] sm:$0xff]
        %v3442 = vld [vmem:[%s308 + $0xa0] sm:$0xff]
        %v3443 = vld [vmem:[%s308 + $0xa8] sm:$0xff]
        %v3444 = vld [vmem:[%s308 + $0xb0] sm:$0xff]
        %v3445 = vld [vmem:[%s308 + $0xb8] sm:$0xff]
        %v3446 = vld [vmem:[%s308 + $0xc0] sm:$0xff]
        %v3447 = vld [vmem:[%s308 + $0xc8] sm:$0xff]
        %v3448 = vld [vmem:[%s308 + $0xd0] sm:$0xff]
        %v3449 = vld [vmem:[%s308 + $0xd8] sm:$0xff]
        %v3450 = vld [vmem:[%s308 + $0xe0] sm:$0xff]
        %v3451 = vld [vmem:[%s308 + $0xe8] sm:$0xff]
        %v3452 = vld [vmem:[%s308 + $0xf0] sm:$0xff]
        %v3453 = vld [vmem:[%s308 + $0xf8] sm:$0xff]
        %s3454 = sld [smem:[#allocation2 + $0x8]]
        %v3455 = vstv %s3454
        %v3456 = vmul.f32 %v3455, %v3406
        %v3457 = vmul.f32 %v3455, %v3407
        %v3458 = vmul.f32 %v3455, %v3408
        %v3459 = vmul.f32 %v3455, %v3409
        %v3460 = vmul.f32 %v3455, %v3410
        %v3461 = vmul.f32 %v3455, %v3411
        %v3462 = vmul.f32 %v3455, %v3412
        %v3463 = vmul.f32 %v3455, %v3413
        %v3464 = vmul.f32 %v3455, %v3414
        %v3465 = vmul.f32 %v3455, %v3415
        %v3466 = vmul.f32 %v3455, %v3416
        %v3467 = vmul.f32 %v3455, %v3417
        %v3468 = vmul.f32 %v3455, %v3418
        %v3469 = vmul.f32 %v3455, %v3419
        %v3470 = vmul.f32 %v3455, %v3420
        %v3471 = vmul.f32 %v3455, %v3421
        %v3472 = vpack.c.bf16 %v3457, %v3456
        %v3473 = vpack.c.bf16 %v3459, %v3458
        %v3474 = vpack.c.bf16 %v3461, %v3460
        %v3475 = vpack.c.bf16 %v3463, %v3462
        %v3476 = vpack.c.bf16 %v3465, %v3464
        %v3477 = vpack.c.bf16 %v3467, %v3466
        %v3478 = vpack.c.bf16 %v3469, %v3468
        %v3479 = vpack.c.bf16 %v3471, %v3470
        %3480 = vmatprep.subr.bf16.mxu0 %v449
        %3481 = vmatpush1.bf16.msra.mxu0 %v448
        %3482 = vmatprep.subr.bf16.mxu0 %v451
        %3483 = vmatpush1.bf16.msra.mxu0 %v450
        %3484 = vmatprep.subr.bf16.mxu0 %v453
        %3485 = vmatpush1.bf16.msra.mxu0 %v452
        %3486 = vmatprep.subr.bf16.mxu0 %v455
        %3487 = vmatpush1.bf16.msra.mxu0 %v454
        %3488 = vmatprep.subr.bf16.mxu0 %v457
        %3489 = vmatpush1.bf16.msra.mxu0 %v456
        %3490 = vmatprep.subr.bf16.mxu0 %v459
        %3491 = vmatpush1.bf16.msra.mxu0 %v458
        %3492 = vmatprep.subr.bf16.mxu0 %v461
        %3493 = vmatpush1.bf16.msra.mxu0 %v460
        %3494 = vmatprep.subr.bf16.mxu0 %v463
        %3495 = vmatpush1.bf16.msra.mxu0 %v462
        %3496 = vmatprep.subr.bf16.mxu0 0
        %3497 = vmatpush1.bf16.msra.mxu0 0
        %3498 = vmatprep.subr.bf16.mxu0 0
        %3499 = vmatpush1.bf16.msra.mxu0 0
        %3500 = vmatprep.subr.bf16.mxu0 0
        %3501 = vmatpush1.bf16.msra.mxu0 0
        %3502 = vmatprep.subr.bf16.mxu0 0
        %3503 = vmatpush1.bf16.msra.mxu0 0
        %3504 = vmatprep.subr.bf16.mxu0 0
        %3505 = vmatpush1.bf16.msra.mxu0 0
        %3506 = vmatprep.subr.bf16.mxu0 0
        %3507 = vmatpush1.bf16.msra.mxu0 0
        %3508 = vmatprep.subr.bf16.mxu0 0
        %3509 = vmatpush1.bf16.msra.mxu0 0
        %3510 = vmatprep.subr.bf16.mxu0 0
        %3511 = vmatpush1.bf16.msra.mxu0 0
        %3512 = vmatprep.mubr.bf16.mxu0 0
        %3513 = vmatmul.mubr.bf16.gmra.mrb[0].mxu0 %v3472
        %v3514 = vpop.f32.mrb[0].mxu0
        %v3515 = vadd.f32 0.0, %v3514
        %v3516 = vpop.f32.mrb[0].mxu0
        %v3517 = vadd.f32 0.0, %v3516
        %v3518 = vpop.f32.mrb[0].mxu0
        %v3519 = vadd.f32 0.0, %v3518
        %v3520 = vpop.f32.mrb[0].mxu0
        %v3521 = vadd.f32 0.0, %v3520
        %3522 = vmatprep.mubr.bf16.mxu0 0
        %3523 = vmatmul.mubr.bf16.gmra.mrb[0].mxu0 %v3473
        %v3524 = vpop.f32.mrb[0].mxu0
        %v3525 = vadd.f32 0.0, %v3524
        %v3526 = vpop.f32.mrb[0].mxu0
        %v3527 = vadd.f32 0.0, %v3526
        %v3528 = vpop.f32.mrb[0].mxu0
        %v3529 = vadd.f32 0.0, %v3528
        %v3530 = vpop.f32.mrb[0].mxu0
        %v3531 = vadd.f32 0.0, %v3530
        %3532 = vmatprep.mubr.bf16.mxu0 0
        %3533 = vmatmul.mubr.bf16.gmra.mrb[0].mxu0 %v3474
        %v3534 = vpop.f32.mrb[0].mxu0
        %v3535 = vadd.f32 0.0, %v3534
        %v3536 = vpop.f32.mrb[0].mxu0
        %v3537 = vadd.f32 0.0, %v3536
        %v3538 = vpop.f32.mrb[0].mxu0
        %v3539 = vadd.f32 0.0, %v3538
        %v3540 = vpop.f32.mrb[0].mxu0
        %v3541 = vadd.f32 0.0, %v3540
        %3542 = vmatprep.mubr.bf16.mxu0 0
        %3543 = vmatmul.mubr.bf16.gmra.mrb[0].mxu0 %v3475
        %v3544 = vpop.f32.mrb[0].mxu0
        %v3545 = vadd.f32 0.0, %v3544
        %v3546 = vpop.f32.mrb[0].mxu0
        %v3547 = vadd.f32 0.0, %v3546
        %v3548 = vpop.f32.mrb[0].mxu0
        %v3549 = vadd.f32 0.0, %v3548
        %v3550 = vpop.f32.mrb[0].mxu0
        %v3551 = vadd.f32 0.0, %v3550
        %3552 = vmatprep.mubr.bf16.mxu0 0
        %3553 = vmatmul.mubr.bf16.gmra.mrb[0].mxu0 %v3476
        %v3554 = vpop.f32.mrb[0].mxu0
        %v3555 = vadd.f32 0.0, %v3554
        %v3556 = vpop.f32.mrb[0].mxu0
        %v3557 = vadd.f32 0.0, %v3556
        %v3558 = vpop.f32.mrb[0].mxu0
        %v3559 = vadd.f32 0.0, %v3558
        %v3560 = vpop.f32.mrb[0].mxu0
        %v3561 = vadd.f32 0.0, %v3560
        %3562 = vmatprep.mubr.bf16.mxu0 0
        %3563 = vmatmul.mubr.bf16.gmra.mrb[0].mxu0 %v3477
        %v3564 = vpop.f32.mrb[0].mxu0
        %v3565 = vadd.f32 0.0, %v3564
        %v3566 = vpop.f32.mrb[0].mxu0
        %v3567 = vadd.f32 0.0, %v3566
        %v3568 = vpop.f32.mrb[0].mxu0
        %v3569 = vadd.f32 0.0, %v3568
        %v3570 = vpop.f32.mrb[0].mxu0
        %v3571 = vadd.f32 0.0, %v3570
        %3572 = vmatprep.mubr.bf16.mxu0 0
        %3573 = vmatmul.mubr.bf16.gmra.mrb[0].mxu0 %v3478
        %v3574 = vpop.f32.mrb[0].mxu0
        %v3575 = vadd.f32 0.0, %v3574
        %v3576 = vpop.f32.mrb[0].mxu0
        %v3577 = vadd.f32 0.0, %v3576
        %v3578 = vpop.f32.mrb[0].mxu0
        %v3579 = vadd.f32 0.0, %v3578
        %v3580 = vpop.f32.mrb[0].mxu0
        %v3581 = vadd.f32 0.0, %v3580
        %3582 = vmatprep.mubr.bf16.mxu0 0
        %3583 = vmatmul.mubr.bf16.gmra.mrb[0].mxu0 %v3479
        %v3584 = vpop.f32.mrb[0].mxu0
        %v3585 = vadd.f32 0.0, %v3584
        %v3586 = vpop.f32.mrb[0].mxu0
        %v3587 = vadd.f32 0.0, %v3586
        %v3588 = vpop.f32.mrb[0].mxu0
        %v3589 = vadd.f32 0.0, %v3588
        %v3590 = vpop.f32.mrb[0].mxu0
        %v3591 = vadd.f32 0.0, %v3590
        %3592 = vdwg.mxu0
        %v3593 = vadd.f32 %v3422, %v3515
        %v3594 = vadd.f32 %v3423, %v3517
        %v3595 = vadd.f32 %v3424, %v3519
        %v3596 = vadd.f32 %v3425, %v3521
        %v3597 = vadd.f32 %v3426, %v3525
        %v3598 = vadd.f32 %v3427, %v3527
        %v3599 = vadd.f32 %v3428, %v3529
        %v3600 = vadd.f32 %v3429, %v3531
        %v3601 = vadd.f32 %v3430, %v3535
        %v3602 = vadd.f32 %v3431, %v3537
        %v3603 = vadd.f32 %v3432, %v3539
        %v3604 = vadd.f32 %v3433, %v3541
        %v3605 = vadd.f32 %v3434, %v3545
        %v3606 = vadd.f32 %v3435, %v3547
        %v3607 = vadd.f32 %v3436, %v3549
        %v3608 = vadd.f32 %v3437, %v3551
        %v3609 = vadd.f32 %v3438, %v3555
        %v3610 = vadd.f32 %v3439, %v3557
        %v3611 = vadd.f32 %v3440, %v3559
        %v3612 = vadd.f32 %v3441, %v3561
        %v3613 = vadd.f32 %v3442, %v3565
        %v3614 = vadd.f32 %v3443, %v3567
        %v3615 = vadd.f32 %v3444, %v3569
        %v3616 = vadd.f32 %v3445, %v3571
        %v3617 = vadd.f32 %v3446, %v3575
        %v3618 = vadd.f32 %v3447, %v3577
        %v3619 = vadd.f32 %v3448, %v3579
        %v3620 = vadd.f32 %v3449, %v3581
        %v3621 = vadd.f32 %v3450, %v3585
        %v3622 = vadd.f32 %v3451, %v3587
        %v3623 = vadd.f32 %v3452, %v3589
        %v3624 = vadd.f32 %v3453, %v3591
        %3625 = vst [vmem:[%s308] sm:$0xff] %v3593
        %3626 = vst [vmem:[%s308 + $0x8] sm:$0xff] %v3594
        %3627 = vst [vmem:[%s308 + $0x10] sm:$0xff] %v3595
        %3628 = vst [vmem:[%s308 + $0x18] sm:$0xff] %v3596
        %3629 = vst [vmem:[%s308 + $0x20] sm:$0xff] %v3597
        %3630 = vst [vmem:[%s308 + $0x28] sm:$0xff] %v3598
        %3631 = vst [vmem:[%s308 + $0x30] sm:$0xff] %v3599
        %3632 = vst [vmem:[%s308 + $0x38] sm:$0xff] %v3600
        %3633 = vst [vmem:[%s308 + $0x40] sm:$0xff] %v3601
        %3634 = vst [vmem:[%s308 + $0x48] sm:$0xff] %v3602
        %3635 = vst [vmem:[%s308 + $0x50] sm:$0xff] %v3603
        %3636 = vst [vmem:[%s308 + $0x58] sm:$0xff] %v3604
        %3637 = vst [vmem:[%s308 + $0x60] sm:$0xff] %v3605
        %3638 = vst [vmem:[%s308 + $0x68] sm:$0xff] %v3606
        %3639 = vst [vmem:[%s308 + $0x70] sm:$0xff] %v3607
        %3640 = vst [vmem:[%s308 + $0x78] sm:$0xff] %v3608
        %3641 = vst [vmem:[%s308 + $0x80] sm:$0xff] %v3609
        %3642 = vst [vmem:[%s308 + $0x88] sm:$0xff] %v3610
        %3643 = vst [vmem:[%s308 + $0x90] sm:$0xff] %v3611
        %3644 = vst [vmem:[%s308 + $0x98] sm:$0xff] %v3612
        %3645 = vst [vmem:[%s308 + $0xa0] sm:$0xff] %v3613
        %3646 = vst [vmem:[%s308 + $0xa8] sm:$0xff] %v3614
        %3647 = vst [vmem:[%s308 + $0xb0] sm:$0xff] %v3615
        %3648 = vst [vmem:[%s308 + $0xb8] sm:$0xff] %v3616
        %3649 = vst [vmem:[%s308 + $0xc0] sm:$0xff] %v3617
        %3650 = vst [vmem:[%s308 + $0xc8] sm:$0xff] %v3618
        %3651 = vst [vmem:[%s308 + $0xd0] sm:$0xff] %v3619
        %3652 = vst [vmem:[%s308 + $0xd8] sm:$0xff] %v3620
        %3653 = vst [vmem:[%s308 + $0xe0] sm:$0xff] %v3621
        %3654 = vst [vmem:[%s308 + $0xe8] sm:$0xff] %v3622
        %3655 = vst [vmem:[%s308 + $0xf0] sm:$0xff] %v3623
        %3656 = vst [vmem:[%s308 + $0xf8] sm:$0xff] %v3624
        %v3657 = vmul.f32 %v3406, 2.0
        %v3658 = vmul.f32 %v3407, 2.0
        %v3659 = vmul.f32 %v3408, 2.0
        %v3660 = vmul.f32 %v3409, 2.0
        %v3661 = vmul.f32 %v3410, 2.0
        %v3662 = vmul.f32 %v3411, 2.0
        %v3663 = vmul.f32 %v3412, 2.0
        %v3664 = vmul.f32 %v3413, 2.0
        %v3665 = vmul.f32 %v3414, 2.0
        %v3666 = vmul.f32 %v3415, 2.0
        %v3667 = vmul.f32 %v3416, 2.0
        %v3668 = vmul.f32 %v3417, 2.0
        %v3669 = vmul.f32 %v3418, 2.0
        %v3670 = vmul.f32 %v3419, 2.0
        %v3671 = vmul.f32 %v3420, 2.0
        %v3672 = vmul.f32 %v3421, 2.0
        %v3673 = vpack.c.bf16 %v3658, %v3657
        %v3674 = vpack.c.bf16 %v3660, %v3659
        %v3675 = vpack.c.bf16 %v3662, %v3661
        %v3676 = vpack.c.bf16 %v3664, %v3663
        %v3677 = vpack.c.bf16 %v3666, %v3665
        %v3678 = vpack.c.bf16 %v3668, %v3667
        %v3679 = vpack.c.bf16 %v3670, %v3669
        %v3680 = vpack.c.bf16 %v3672, %v3671
        %3681 = vmatprep.subr.bf16.mxu0 0
        %3682 = vmatpush1.bf16.msra.mxu0 %v3673
        %3683 = vmatprep.subr.bf16.mxu0 0
        %3684 = vmatpush1.bf16.msra.mxu0 %v3674
        %3685 = vmatprep.subr.bf16.mxu0 0
        %3686 = vmatpush1.bf16.msra.mxu0 %v3675
        %3687 = vmatprep.subr.bf16.mxu0 0
        %3688 = vmatpush1.bf16.msra.mxu0 %v3676
        %3689 = vmatprep.subr.bf16.mxu0 0
        %3690 = vmatpush1.bf16.msra.mxu0 %v3677
        %3691 = vmatprep.subr.bf16.mxu0 0
        %3692 = vmatpush1.bf16.msra.mxu0 %v3678
        %3693 = vmatprep.subr.bf16.mxu0 0
        %3694 = vmatpush1.bf16.msra.mxu0 %v3679
        %3695 = vmatprep.subr.bf16.mxu0 0
        %3696 = vmatpush1.bf16.msra.mxu0 %v3680
        %3697 = vmatprep.subr.bf16.mxu0 0
        %3698 = vmatpush1.bf16.msra.mxu0 0
        %3699 = vmatprep.subr.bf16.mxu0 0
        %3700 = vmatpush1.bf16.msra.mxu0 0
        %3701 = vmatprep.subr.bf16.mxu0 0
        %3702 = vmatpush1.bf16.msra.mxu0 0
        %3703 = vmatprep.subr.bf16.mxu0 0
        %3704 = vmatpush1.bf16.msra.mxu0 0
        %3705 = vmatprep.subr.bf16.mxu0 0
        %3706 = vmatpush1.bf16.msra.mxu0 0
        %3707 = vmatprep.subr.bf16.mxu0 0
        %3708 = vmatpush1.bf16.msra.mxu0 0
        %3709 = vmatprep.subr.bf16.mxu0 0
        %3710 = vmatpush1.bf16.msra.mxu0 0
        %3711 = vmatprep.subr.bf16.mxu0 0
        %3712 = vmatpush1.bf16.msra.mxu0 0
        %3713 = vmatprep.mubr.bf16.mxu0 0
        %3714 = vmatmul.mubr.bf16.gmra.mrb[0].mxu0 %v657
        %v3715 = vpop.f32.mrb[0].mxu0
        %v3716 = vadd.f32 0.0, %v3715
        %v3717 = vpop.f32.mrb[0].mxu0
        %v3718 = vpop.f32.mrb[0].mxu0
        %v3719 = vadd.f32 0.0, %v3718
        %v3720 = vpop.f32.mrb[0].mxu0
        %3721 = vmatprep.mubr.bf16.mxu0 0
        %3722 = vmatmul.mubr.bf16.gmra.mrb[0].mxu0 %v658
        %v3723 = vpop.f32.mrb[0].mxu0
        %v3724 = vadd.f32 0.0, %v3723
        %v3725 = vpop.f32.mrb[0].mxu0
        %v3726 = vpop.f32.mrb[0].mxu0
        %v3727 = vadd.f32 0.0, %v3726
        %v3728 = vpop.f32.mrb[0].mxu0
        %3729 = vmatprep.mubr.bf16.mxu0 0
        %3730 = vmatmul.mubr.bf16.gmra.mrb[0].mxu0 %v659
        %v3731 = vpop.f32.mrb[0].mxu0
        %v3732 = vadd.f32 0.0, %v3731
        %v3733 = vpop.f32.mrb[0].mxu0
        %v3734 = vpop.f32.mrb[0].mxu0
        %v3735 = vadd.f32 0.0, %v3734
        %v3736 = vpop.f32.mrb[0].mxu0
        %3737 = vmatprep.mubr.bf16.mxu0 0
        %3738 = vmatmul.mubr.bf16.gmra.mrb[0].mxu0 %v660
        %v3739 = vpop.f32.mrb[0].mxu0
        %v3740 = vadd.f32 0.0, %v3739
        %v3741 = vpop.f32.mrb[0].mxu0
        %v3742 = vpop.f32.mrb[0].mxu0
        %v3743 = vadd.f32 0.0, %v3742
        %v3744 = vpop.f32.mrb[0].mxu0
        %3745 = vmatprep.mubr.bf16.mxu0 0
        %3746 = vmatmul.mubr.bf16.gmra.mrb[0].mxu0 %v661
        %v3747 = vpop.f32.mrb[0].mxu0
        %v3748 = vadd.f32 0.0, %v3747
        %v3749 = vpop.f32.mrb[0].mxu0
        %v3750 = vpop.f32.mrb[0].mxu0
        %v3751 = vadd.f32 0.0, %v3750
        %v3752 = vpop.f32.mrb[0].mxu0
        %3753 = vmatprep.mubr.bf16.mxu0 0
        %3754 = vmatmul.mubr.bf16.gmra.mrb[0].mxu0 %v662
        %v3755 = vpop.f32.mrb[0].mxu0
        %v3756 = vadd.f32 0.0, %v3755
        %v3757 = vpop.f32.mrb[0].mxu0
        %v3758 = vpop.f32.mrb[0].mxu0
        %v3759 = vadd.f32 0.0, %v3758
        %v3760 = vpop.f32.mrb[0].mxu0
        %3761 = vmatprep.mubr.bf16.mxu0 0
        %3762 = vmatmul.mubr.bf16.gmra.mrb[0].mxu0 %v663
        %v3763 = vpop.f32.mrb[0].mxu0
        %v3764 = vadd.f32 0.0, %v3763
        %v3765 = vpop.f32.mrb[0].mxu0
        %v3766 = vpop.f32.mrb[0].mxu0
        %v3767 = vadd.f32 0.0, %v3766
        %v3768 = vpop.f32.mrb[0].mxu0
        %3769 = vmatprep.mubr.bf16.mxu0 0
        %3770 = vmatmul.mubr.bf16.gmra.mrb[0].mxu0 %v664
        %v3771 = vpop.f32.mrb[0].mxu0
        %v3772 = vadd.f32 0.0, %v3771
        %v3773 = vpop.f32.mrb[0].mxu0
        %v3774 = vpop.f32.mrb[0].mxu0
        %v3775 = vadd.f32 0.0, %v3774
        %v3776 = vpop.f32.mrb[0].mxu0
        %3777 = vdwg.mxu0
        %v3778 = vsub.f32 %v3716, %v3034
        %v3779 = vsub.f32 %v3719, %v3035
        %v3780 = vsub.f32 %v3724, %v3036
        %v3781 = vsub.f32 %v3727, %v3037
        %v3782 = vsub.f32 %v3732, %v3038
        %v3783 = vsub.f32 %v3735, %v3039
        %v3784 = vsub.f32 %v3740, %v3040
        %v3785 = vsub.f32 %v3743, %v3041
        %v3786 = vsub.f32 %v3748, %v3042
        %v3787 = vsub.f32 %v3751, %v3043
        %v3788 = vsub.f32 %v3756, %v3044
        %v3789 = vsub.f32 %v3759, %v3045
        %v3790 = vsub.f32 %v3764, %v3046
        %v3791 = vsub.f32 %v3767, %v3047
        %v3792 = vsub.f32 %v3772, %v3048
        %v3793 = vsub.f32 %v3775, %v3049
        %v3794 = vld [vmem:[%s308] sm:$0xff]
        %v3795 = vld [vmem:[%s308 + $0x8] sm:$0xff]
        %v3796 = vld [vmem:[%s308 + $0x10] sm:$0xff]
        %v3797 = vld [vmem:[%s308 + $0x18] sm:$0xff]
        %v3798 = vld [vmem:[%s308 + $0x20] sm:$0xff]
        %v3799 = vld [vmem:[%s308 + $0x28] sm:$0xff]
        %v3800 = vld [vmem:[%s308 + $0x30] sm:$0xff]
        %v3801 = vld [vmem:[%s308 + $0x38] sm:$0xff]
        %v3802 = vld [vmem:[%s308 + $0x40] sm:$0xff]
        %v3803 = vld [vmem:[%s308 + $0x48] sm:$0xff]
        %v3804 = vld [vmem:[%s308 + $0x50] sm:$0xff]
        %v3805 = vld [vmem:[%s308 + $0x58] sm:$0xff]
        %v3806 = vld [vmem:[%s308 + $0x60] sm:$0xff]
        %v3807 = vld [vmem:[%s308 + $0x68] sm:$0xff]
        %v3808 = vld [vmem:[%s308 + $0x70] sm:$0xff]
        %v3809 = vld [vmem:[%s308 + $0x78] sm:$0xff]
        %v3810 = vld [vmem:[%s308 + $0x80] sm:$0xff]
        %v3811 = vld [vmem:[%s308 + $0x88] sm:$0xff]
        %v3812 = vld [vmem:[%s308 + $0x90] sm:$0xff]
        %v3813 = vld [vmem:[%s308 + $0x98] sm:$0xff]
        %v3814 = vld [vmem:[%s308 + $0xa0] sm:$0xff]
        %v3815 = vld [vmem:[%s308 + $0xa8] sm:$0xff]
        %v3816 = vld [vmem:[%s308 + $0xb0] sm:$0xff]
        %v3817 = vld [vmem:[%s308 + $0xb8] sm:$0xff]
        %v3818 = vld [vmem:[%s308 + $0xc0] sm:$0xff]
        %v3819 = vld [vmem:[%s308 + $0xc8] sm:$0xff]
        %v3820 = vld [vmem:[%s308 + $0xd0] sm:$0xff]
        %v3821 = vld [vmem:[%s308 + $0xd8] sm:$0xff]
        %v3822 = vld [vmem:[%s308 + $0xe0] sm:$0xff]
        %v3823 = vld [vmem:[%s308 + $0xe8] sm:$0xff]
        %v3824 = vld [vmem:[%s308 + $0xf0] sm:$0xff]
        %v3825 = vld [vmem:[%s308 + $0xf8] sm:$0xff]
        %s3826 = sld [smem:[#allocation2 + $0x9]]
        %v3827 = vstv %s3826
        %v3828 = vmul.f32 %v3827, %v3778
        %v3829 = vmul.f32 %v3827, %v3779
        %v3830 = vmul.f32 %v3827, %v3780
        %v3831 = vmul.f32 %v3827, %v3781
        %v3832 = vmul.f32 %v3827, %v3782
        %v3833 = vmul.f32 %v3827, %v3783
        %v3834 = vmul.f32 %v3827, %v3784
        %v3835 = vmul.f32 %v3827, %v3785
        %v3836 = vmul.f32 %v3827, %v3786
        %v3837 = vmul.f32 %v3827, %v3787
        %v3838 = vmul.f32 %v3827, %v3788
        %v3839 = vmul.f32 %v3827, %v3789
        %v3840 = vmul.f32 %v3827, %v3790
        %v3841 = vmul.f32 %v3827, %v3791
        %v3842 = vmul.f32 %v3827, %v3792
        %v3843 = vmul.f32 %v3827, %v3793
        %v3844 = vpack.c.bf16 %v3829, %v3828
        %v3845 = vpack.c.bf16 %v3831, %v3830
        %v3846 = vpack.c.bf16 %v3833, %v3832
        %v3847 = vpack.c.bf16 %v3835, %v3834
        %v3848 = vpack.c.bf16 %v3837, %v3836
        %v3849 = vpack.c.bf16 %v3839, %v3838
        %v3850 = vpack.c.bf16 %v3841, %v3840
        %v3851 = vpack.c.bf16 %v3843, %v3842
        %3852 = vmatprep.subr.bf16.mxu0 %v449
        %3853 = vmatpush1.bf16.msra.mxu0 %v448
        %3854 = vmatprep.subr.bf16.mxu0 %v451
        %3855 = vmatpush1.bf16.msra.mxu0 %v450
        %3856 = vmatprep.subr.bf16.mxu0 %v453
        %3857 = vmatpush1.bf16.msra.mxu0 %v452
        %3858 = vmatprep.subr.bf16.mxu0 %v455
        %3859 = vmatpush1.bf16.msra.mxu0 %v454
        %3860 = vmatprep.subr.bf16.mxu0 %v457
        %3861 = vmatpush1.bf16.msra.mxu0 %v456
        %3862 = vmatprep.subr.bf16.mxu0 %v459
        %3863 = vmatpush1.bf16.msra.mxu0 %v458
        %3864 = vmatprep.subr.bf16.mxu0 %v461
        %3865 = vmatpush1.bf16.msra.mxu0 %v460
        %3866 = vmatprep.subr.bf16.mxu0 %v463
        %3867 = vmatpush1.bf16.msra.mxu0 %v462
        %3868 = vmatprep.subr.bf16.mxu0 0
        %3869 = vmatpush1.bf16.msra.mxu0 0
        %3870 = vmatprep.subr.bf16.mxu0 0
        %3871 = vmatpush1.bf16.msra.mxu0 0
        %3872 = vmatprep.subr.bf16.mxu0 0
        %3873 = vmatpush1.bf16.msra.mxu0 0
        %3874 = vmatprep.subr.bf16.mxu0 0
        %3875 = vmatpush1.bf16.msra.mxu0 0
        %3876 = vmatprep.subr.bf16.mxu0 0
        %3877 = vmatpush1.bf16.msra.mxu0 0
        %3878 = vmatprep.subr.bf16.mxu0 0
        %3879 = vmatpush1.bf16.msra.mxu0 0
        %3880 = vmatprep.subr.bf16.mxu0 0
        %3881 = vmatpush1.bf16.msra.mxu0 0
        %3882 = vmatprep.subr.bf16.mxu0 0
        %3883 = vmatpush1.bf16.msra.mxu0 0
        %3884 = vmatprep.mubr.bf16.mxu0 0
        %3885 = vmatmul.mubr.bf16.gmra.mrb[0].mxu0 %v3844
        %v3886 = vpop.f32.mrb[0].mxu0
        %v3887 = vadd.f32 0.0, %v3886
        %v3888 = vpop.f32.mrb[0].mxu0
        %v3889 = vadd.f32 0.0, %v3888
        %v3890 = vpop.f32.mrb[0].mxu0
        %v3891 = vadd.f32 0.0, %v3890
        %v3892 = vpop.f32.mrb[0].mxu0
        %v3893 = vadd.f32 0.0, %v3892
        %3894 = vmatprep.mubr.bf16.mxu0 0
        %3895 = vmatmul.mubr.bf16.gmra.mrb[0].mxu0 %v3845
        %v3896 = vpop.f32.mrb[0].mxu0
        %v3897 = vadd.f32 0.0, %v3896
        %v3898 = vpop.f32.mrb[0].mxu0
        %v3899 = vadd.f32 0.0, %v3898
        %v3900 = vpop.f32.mrb[0].mxu0
        %v3901 = vadd.f32 0.0, %v3900
        %v3902 = vpop.f32.mrb[0].mxu0
        %v3903 = vadd.f32 0.0, %v3902
        %3904 = vmatprep.mubr.bf16.mxu0 0
        %3905 = vmatmul.mubr.bf16.gmra.mrb[0].mxu0 %v3846
        %v3906 = vpop.f32.mrb[0].mxu0
        %v3907 = vadd.f32 0.0, %v3906
        %v3908 = vpop.f32.mrb[0].mxu0
        %v3909 = vadd.f32 0.0, %v3908
        %v3910 = vpop.f32.mrb[0].mxu0
        %v3911 = vadd.f32 0.0, %v3910
        %v3912 = vpop.f32.mrb[0].mxu0
        %v3913 = vadd.f32 0.0, %v3912
        %3914 = vmatprep.mubr.bf16.mxu0 0
        %3915 = vmatmul.mubr.bf16.gmra.mrb[0].mxu0 %v3847
        %v3916 = vpop.f32.mrb[0].mxu0
        %v3917 = vadd.f32 0.0, %v3916
        %v3918 = vpop.f32.mrb[0].mxu0
        %v3919 = vadd.f32 0.0, %v3918
        %v3920 = vpop.f32.mrb[0].mxu0
        %v3921 = vadd.f32 0.0, %v3920
        %v3922 = vpop.f32.mrb[0].mxu0
        %v3923 = vadd.f32 0.0, %v3922
        %3924 = vmatprep.mubr.bf16.mxu0 0
        %3925 = vmatmul.mubr.bf16.gmra.mrb[0].mxu0 %v3848
        %v3926 = vpop.f32.mrb[0].mxu0
        %v3927 = vadd.f32 0.0, %v3926
        %v3928 = vpop.f32.mrb[0].mxu0
        %v3929 = vadd.f32 0.0, %v3928
        %v3930 = vpop.f32.mrb[0].mxu0
        %v3931 = vadd.f32 0.0, %v3930
        %v3932 = vpop.f32.mrb[0].mxu0
        %v3933 = vadd.f32 0.0, %v3932
        %3934 = vmatprep.mubr.bf16.mxu0 0
        %3935 = vmatmul.mubr.bf16.gmra.mrb[0].mxu0 %v3849
        %v3936 = vpop.f32.mrb[0].mxu0
        %v3937 = vadd.f32 0.0, %v3936
        %v3938 = vpop.f32.mrb[0].mxu0
        %v3939 = vadd.f32 0.0, %v3938
        %v3940 = vpop.f32.mrb[0].mxu0
        %v3941 = vadd.f32 0.0, %v3940
        %v3942 = vpop.f32.mrb[0].mxu0
        %v3943 = vadd.f32 0.0, %v3942
        %3944 = vmatprep.mubr.bf16.mxu0 0
        %3945 = vmatmul.mubr.bf16.gmra.mrb[0].mxu0 %v3850
        %v3946 = vpop.f32.mrb[0].mxu0
        %v3947 = vadd.f32 0.0, %v3946
        %v3948 = vpop.f32.mrb[0].mxu0
        %v3949 = vadd.f32 0.0, %v3948
        %v3950 = vpop.f32.mrb[0].mxu0
        %v3951 = vadd.f32 0.0, %v3950
        %v3952 = vpop.f32.mrb[0].mxu0
        %v3953 = vadd.f32 0.0, %v3952
        %3954 = vmatprep.mubr.bf16.mxu0 0
        %3955 = vmatmul.mubr.bf16.gmra.mrb[0].mxu0 %v3851
        %v3956 = vpop.f32.mrb[0].mxu0
        %v3957 = vadd.f32 0.0, %v3956
        %v3958 = vpop.f32.mrb[0].mxu0
        %v3959 = vadd.f32 0.0, %v3958
        %v3960 = vpop.f32.mrb[0].mxu0
        %v3961 = vadd.f32 0.0, %v3960
        %v3962 = vpop.f32.mrb[0].mxu0
        %v3963 = vadd.f32 0.0, %v3962
        %3964 = vdwg.mxu0
        %v3965 = vadd.f32 %v3794, %v3887
        %v3966 = vadd.f32 %v3795, %v3889
        %v3967 = vadd.f32 %v3796, %v3891
        %v3968 = vadd.f32 %v3797, %v3893
        %v3969 = vadd.f32 %v3798, %v3897
        %v3970 = vadd.f32 %v3799, %v3899
        %v3971 = vadd.f32 %v3800, %v3901
        %v3972 = vadd.f32 %v3801, %v3903
        %v3973 = vadd.f32 %v3802, %v3907
        %v3974 = vadd.f32 %v3803, %v3909
        %v3975 = vadd.f32 %v3804, %v3911
        %v3976 = vadd.f32 %v3805, %v3913
        %v3977 = vadd.f32 %v3806, %v3917
        %v3978 = vadd.f32 %v3807, %v3919
        %v3979 = vadd.f32 %v3808, %v3921
        %v3980 = vadd.f32 %v3809, %v3923
        %v3981 = vadd.f32 %v3810, %v3927
        %v3982 = vadd.f32 %v3811, %v3929
        %v3983 = vadd.f32 %v3812, %v3931
        %v3984 = vadd.f32 %v3813, %v3933
        %v3985 = vadd.f32 %v3814, %v3937
        %v3986 = vadd.f32 %v3815, %v3939
        %v3987 = vadd.f32 %v3816, %v3941
        %v3988 = vadd.f32 %v3817, %v3943
        %v3989 = vadd.f32 %v3818, %v3947
        %v3990 = vadd.f32 %v3819, %v3949
        %v3991 = vadd.f32 %v3820, %v3951
        %v3992 = vadd.f32 %v3821, %v3953
        %v3993 = vadd.f32 %v3822, %v3957
        %v3994 = vadd.f32 %v3823, %v3959
        %v3995 = vadd.f32 %v3824, %v3961
        %v3996 = vadd.f32 %v3825, %v3963
        %3997 = vst [vmem:[%s308] sm:$0xff] %v3965
        %3998 = vst [vmem:[%s308 + $0x8] sm:$0xff] %v3966
        %3999 = vst [vmem:[%s308 + $0x10] sm:$0xff] %v3967
        %4000 = vst [vmem:[%s308 + $0x18] sm:$0xff] %v3968
        %4001 = vst [vmem:[%s308 + $0x20] sm:$0xff] %v3969
        %4002 = vst [vmem:[%s308 + $0x28] sm:$0xff] %v3970
        %4003 = vst [vmem:[%s308 + $0x30] sm:$0xff] %v3971
        %4004 = vst [vmem:[%s308 + $0x38] sm:$0xff] %v3972
        %4005 = vst [vmem:[%s308 + $0x40] sm:$0xff] %v3973
        %4006 = vst [vmem:[%s308 + $0x48] sm:$0xff] %v3974
        %4007 = vst [vmem:[%s308 + $0x50] sm:$0xff] %v3975
        %4008 = vst [vmem:[%s308 + $0x58] sm:$0xff] %v3976
        %4009 = vst [vmem:[%s308 + $0x60] sm:$0xff] %v3977
        %4010 = vst [vmem:[%s308 + $0x68] sm:$0xff] %v3978
        %4011 = vst [vmem:[%s308 + $0x70] sm:$0xff] %v3979
        %4012 = vst [vmem:[%s308 + $0x78] sm:$0xff] %v3980
        %4013 = vst [vmem:[%s308 + $0x80] sm:$0xff] %v3981
        %4014 = vst [vmem:[%s308 + $0x88] sm:$0xff] %v3982
        %4015 = vst [vmem:[%s308 + $0x90] sm:$0xff] %v3983
        %4016 = vst [vmem:[%s308 + $0x98] sm:$0xff] %v3984
        %4017 = vst [vmem:[%s308 + $0xa0] sm:$0xff] %v3985
        %4018 = vst [vmem:[%s308 + $0xa8] sm:$0xff] %v3986
        %4019 = vst [vmem:[%s308 + $0xb0] sm:$0xff] %v3987
        %4020 = vst [vmem:[%s308 + $0xb8] sm:$0xff] %v3988
        %4021 = vst [vmem:[%s308 + $0xc0] sm:$0xff] %v3989
        %4022 = vst [vmem:[%s308 + $0xc8] sm:$0xff] %v3990
        %4023 = vst [vmem:[%s308 + $0xd0] sm:$0xff] %v3991
        %4024 = vst [vmem:[%s308 + $0xd8] sm:$0xff] %v3992
        %4025 = vst [vmem:[%s308 + $0xe0] sm:$0xff] %v3993
        %4026 = vst [vmem:[%s308 + $0xe8] sm:$0xff] %v3994
        %4027 = vst [vmem:[%s308 + $0xf0] sm:$0xff] %v3995
        %4028 = vst [vmem:[%s308 + $0xf8] sm:$0xff] %v3996
        %v4029 = vmul.f32 %v3778, 2.0
        %v4030 = vmul.f32 %v3779, 2.0
        %v4031 = vmul.f32 %v3780, 2.0
        %v4032 = vmul.f32 %v3781, 2.0
        %v4033 = vmul.f32 %v3782, 2.0
        %v4034 = vmul.f32 %v3783, 2.0
        %v4035 = vmul.f32 %v3784, 2.0
        %v4036 = vmul.f32 %v3785, 2.0
        %v4037 = vmul.f32 %v3786, 2.0
        %v4038 = vmul.f32 %v3787, 2.0
        %v4039 = vmul.f32 %v3788, 2.0
        %v4040 = vmul.f32 %v3789, 2.0
        %v4041 = vmul.f32 %v3790, 2.0
        %v4042 = vmul.f32 %v3791, 2.0
        %v4043 = vmul.f32 %v3792, 2.0
        %v4044 = vmul.f32 %v3793, 2.0
        %v4045 = vpack.c.bf16 %v4030, %v4029
        %v4046 = vpack.c.bf16 %v4032, %v4031
        %v4047 = vpack.c.bf16 %v4034, %v4033
        %v4048 = vpack.c.bf16 %v4036, %v4035
        %v4049 = vpack.c.bf16 %v4038, %v4037
        %v4050 = vpack.c.bf16 %v4040, %v4039
        %v4051 = vpack.c.bf16 %v4042, %v4041
        %v4052 = vpack.c.bf16 %v4044, %v4043
        %4053 = vmatprep.subr.bf16.mxu0 0
        %4054 = vmatpush1.bf16.msra.mxu0 %v4045
        %4055 = vmatprep.subr.bf16.mxu0 0
        %4056 = vmatpush1.bf16.msra.mxu0 %v4046
        %4057 = vmatprep.subr.bf16.mxu0 0
        %4058 = vmatpush1.bf16.msra.mxu0 %v4047
        %4059 = vmatprep.subr.bf16.mxu0 0
        %4060 = vmatpush1.bf16.msra.mxu0 %v4048
        %4061 = vmatprep.subr.bf16.mxu0 0
        %4062 = vmatpush1.bf16.msra.mxu0 %v4049
        %4063 = vmatprep.subr.bf16.mxu0 0
        %4064 = vmatpush1.bf16.msra.mxu0 %v4050
        %4065 = vmatprep.subr.bf16.mxu0 0
        %4066 = vmatpush1.bf16.msra.mxu0 %v4051
        %4067 = vmatprep.subr.bf16.mxu0 0
        %4068 = vmatpush1.bf16.msra.mxu0 %v4052
        %4069 = vmatprep.subr.bf16.mxu0 0
        %4070 = vmatpush1.bf16.msra.mxu0 0
        %4071 = vmatprep.subr.bf16.mxu0 0
        %4072 = vmatpush1.bf16.msra.mxu0 0
        %4073 = vmatprep.subr.bf16.mxu0 0
        %4074 = vmatpush1.bf16.msra.mxu0 0
        %4075 = vmatprep.subr.bf16.mxu0 0
        %4076 = vmatpush1.bf16.msra.mxu0 0
        %4077 = vmatprep.subr.bf16.mxu0 0
        %4078 = vmatpush1.bf16.msra.mxu0 0
        %4079 = vmatprep.subr.bf16.mxu0 0
        %4080 = vmatpush1.bf16.msra.mxu0 0
        %4081 = vmatprep.subr.bf16.mxu0 0
        %4082 = vmatpush1.bf16.msra.mxu0 0
        %4083 = vmatprep.subr.bf16.mxu0 0
        %4084 = vmatpush1.bf16.msra.mxu0 0
        %4085 = vmatprep.mubr.bf16.mxu0 0
        %4086 = vmatmul.mubr.bf16.gmra.mrb[0].mxu0 %v657
        %v4087 = vpop.f32.mrb[0].mxu0
        %v4088 = vadd.f32 0.0, %v4087
        %v4089 = vpop.f32.mrb[0].mxu0
        %v4090 = vpop.f32.mrb[0].mxu0
        %v4091 = vadd.f32 0.0, %v4090
        %v4092 = vpop.f32.mrb[0].mxu0
        %4093 = vmatprep.mubr.bf16.mxu0 0
        %4094 = vmatmul.mubr.bf16.gmra.mrb[0].mxu0 %v658
        %v4095 = vpop.f32.mrb[0].mxu0
        %v4096 = vadd.f32 0.0, %v4095
        %v4097 = vpop.f32.mrb[0].mxu0
        %v4098 = vpop.f32.mrb[0].mxu0
        %v4099 = vadd.f32 0.0, %v4098
        %v4100 = vpop.f32.mrb[0].mxu0
        %4101 = vmatprep.mubr.bf16.mxu0 0
        %4102 = vmatmul.mubr.bf16.gmra.mrb[0].mxu0 %v659
        %v4103 = vpop.f32.mrb[0].mxu0
        %v4104 = vadd.f32 0.0, %v4103
        %v4105 = vpop.f32.mrb[0].mxu0
        %v4106 = vpop.f32.mrb[0].mxu0
        %v4107 = vadd.f32 0.0, %v4106
        %v4108 = vpop.f32.mrb[0].mxu0
        %4109 = vmatprep.mubr.bf16.mxu0 0
        %4110 = vmatmul.mubr.bf16.gmra.mrb[0].mxu0 %v660
        %v4111 = vpop.f32.mrb[0].mxu0
        %v4112 = vadd.f32 0.0, %v4111
        %v4113 = vpop.f32.mrb[0].mxu0
        %v4114 = vpop.f32.mrb[0].mxu0
        %v4115 = vadd.f32 0.0, %v4114
        %v4116 = vpop.f32.mrb[0].mxu0
        %4117 = vmatprep.mubr.bf16.mxu0 0
        %4118 = vmatmul.mubr.bf16.gmra.mrb[0].mxu0 %v661
        %v4119 = vpop.f32.mrb[0].mxu0
        %v4120 = vadd.f32 0.0, %v4119
        %v4121 = vpop.f32.mrb[0].mxu0
        %v4122 = vpop.f32.mrb[0].mxu0
        %v4123 = vadd.f32 0.0, %v4122
        %v4124 = vpop.f32.mrb[0].mxu0
        %4125 = vmatprep.mubr.bf16.mxu0 0
        %4126 = vmatmul.mubr.bf16.gmra.mrb[0].mxu0 %v662
        %v4127 = vpop.f32.mrb[0].mxu0
        %v4128 = vadd.f32 0.0, %v4127
        %v4129 = vpop.f32.mrb[0].mxu0
        %v4130 = vpop.f32.mrb[0].mxu0
        %v4131 = vadd.f32 0.0, %v4130
        %v4132 = vpop.f32.mrb[0].mxu0
        %4133 = vmatprep.mubr.bf16.mxu0 0
        %4134 = vmatmul.mubr.bf16.gmra.mrb[0].mxu0 %v663
        %v4135 = vpop.f32.mrb[0].mxu0
        %v4136 = vadd.f32 0.0, %v4135
        %v4137 = vpop.f32.mrb[0].mxu0
        %v4138 = vpop.f32.mrb[0].mxu0
        %v4139 = vadd.f32 0.0, %v4138
        %v4140 = vpop.f32.mrb[0].mxu0
        %4141 = vmatprep.mubr.bf16.mxu0 0
        %4142 = vmatmul.mubr.bf16.gmra.mrb[0].mxu0 %v664
        %v4143 = vpop.f32.mrb[0].mxu0
        %v4144 = vadd.f32 0.0, %v4143
        %v4145 = vpop.f32.mrb[0].mxu0
        %v4146 = vpop.f32.mrb[0].mxu0
        %v4147 = vadd.f32 0.0, %v4146
        %v4148 = vpop.f32.mrb[0].mxu0
        %4149 = vdwg.mxu0
        %v4150 = vsub.f32 %v4088, %v3406
        %v4151 = vsub.f32 %v4091, %v3407
        %v4152 = vsub.f32 %v4096, %v3408
        %v4153 = vsub.f32 %v4099, %v3409
        %v4154 = vsub.f32 %v4104, %v3410
        %v4155 = vsub.f32 %v4107, %v3411
        %v4156 = vsub.f32 %v4112, %v3412
        %v4157 = vsub.f32 %v4115, %v3413
        %v4158 = vsub.f32 %v4120, %v3414
        %v4159 = vsub.f32 %v4123, %v3415
        %v4160 = vsub.f32 %v4128, %v3416
        %v4161 = vsub.f32 %v4131, %v3417
        %v4162 = vsub.f32 %v4136, %v3418
        %v4163 = vsub.f32 %v4139, %v3419
        %v4164 = vsub.f32 %v4144, %v3420
        %v4165 = vsub.f32 %v4147, %v3421
        %v4166 = vld [vmem:[%s308] sm:$0xff]
        %v4167 = vld [vmem:[%s308 + $0x8] sm:$0xff]
        %v4168 = vld [vmem:[%s308 + $0x10] sm:$0xff]
        %v4169 = vld [vmem:[%s308 + $0x18] sm:$0xff]
        %v4170 = vld [vmem:[%s308 + $0x20] sm:$0xff]
        %v4171 = vld [vmem:[%s308 + $0x28] sm:$0xff]
        %v4172 = vld [vmem:[%s308 + $0x30] sm:$0xff]
        %v4173 = vld [vmem:[%s308 + $0x38] sm:$0xff]
        %v4174 = vld [vmem:[%s308 + $0x40] sm:$0xff]
        %v4175 = vld [vmem:[%s308 + $0x48] sm:$0xff]
        %v4176 = vld [vmem:[%s308 + $0x50] sm:$0xff]
        %v4177 = vld [vmem:[%s308 + $0x58] sm:$0xff]
        %v4178 = vld [vmem:[%s308 + $0x60] sm:$0xff]
        %v4179 = vld [vmem:[%s308 + $0x68] sm:$0xff]
        %v4180 = vld [vmem:[%s308 + $0x70] sm:$0xff]
        %v4181 = vld [vmem:[%s308 + $0x78] sm:$0xff]
        %v4182 = vld [vmem:[%s308 + $0x80] sm:$0xff]
        %v4183 = vld [vmem:[%s308 + $0x88] sm:$0xff]
        %v4184 = vld [vmem:[%s308 + $0x90] sm:$0xff]
        %v4185 = vld [vmem:[%s308 + $0x98] sm:$0xff]
        %v4186 = vld [vmem:[%s308 + $0xa0] sm:$0xff]
        %v4187 = vld [vmem:[%s308 + $0xa8] sm:$0xff]
        %v4188 = vld [vmem:[%s308 + $0xb0] sm:$0xff]
        %v4189 = vld [vmem:[%s308 + $0xb8] sm:$0xff]
        %v4190 = vld [vmem:[%s308 + $0xc0] sm:$0xff]
        %v4191 = vld [vmem:[%s308 + $0xc8] sm:$0xff]
        %v4192 = vld [vmem:[%s308 + $0xd0] sm:$0xff]
        %v4193 = vld [vmem:[%s308 + $0xd8] sm:$0xff]
        %v4194 = vld [vmem:[%s308 + $0xe0] sm:$0xff]
        %v4195 = vld [vmem:[%s308 + $0xe8] sm:$0xff]
        %v4196 = vld [vmem:[%s308 + $0xf0] sm:$0xff]
        %v4197 = vld [vmem:[%s308 + $0xf8] sm:$0xff]
        %s4198 = sld [smem:[#allocation2 + $0xa]]
        %v4199 = vstv %s4198
        %v4200 = vmul.f32 %v4199, %v4150
        %v4201 = vmul.f32 %v4199, %v4151
        %v4202 = vmul.f32 %v4199, %v4152
        %v4203 = vmul.f32 %v4199, %v4153
        %v4204 = vmul.f32 %v4199, %v4154
        %v4205 = vmul.f32 %v4199, %v4155
        %v4206 = vmul.f32 %v4199, %v4156
        %v4207 = vmul.f32 %v4199, %v4157
        %v4208 = vmul.f32 %v4199, %v4158
        %v4209 = vmul.f32 %v4199, %v4159
        %v4210 = vmul.f32 %v4199, %v4160
        %v4211 = vmul.f32 %v4199, %v4161
        %v4212 = vmul.f32 %v4199, %v4162
        %v4213 = vmul.f32 %v4199, %v4163
        %v4214 = vmul.f32 %v4199, %v4164
        %v4215 = vmul.f32 %v4199, %v4165
        %v4216 = vpack.c.bf16 %v4201, %v4200
        %v4217 = vpack.c.bf16 %v4203, %v4202
        %v4218 = vpack.c.bf16 %v4205, %v4204
        %v4219 = vpack.c.bf16 %v4207, %v4206
        %v4220 = vpack.c.bf16 %v4209, %v4208
        %v4221 = vpack.c.bf16 %v4211, %v4210
        %v4222 = vpack.c.bf16 %v4213, %v4212
        %v4223 = vpack.c.bf16 %v4215, %v4214
        %4224 = vmatprep.subr.bf16.mxu0 %v449
        %4225 = vmatpush1.bf16.msra.mxu0 %v448
        %4226 = vmatprep.subr.bf16.mxu0 %v451
        %4227 = vmatpush1.bf16.msra.mxu0 %v450
        %4228 = vmatprep.subr.bf16.mxu0 %v453
        %4229 = vmatpush1.bf16.msra.mxu0 %v452
        %4230 = vmatprep.subr.bf16.mxu0 %v455
        %4231 = vmatpush1.bf16.msra.mxu0 %v454
        %4232 = vmatprep.subr.bf16.mxu0 %v457
        %4233 = vmatpush1.bf16.msra.mxu0 %v456
        %4234 = vmatprep.subr.bf16.mxu0 %v459
        %4235 = vmatpush1.bf16.msra.mxu0 %v458
        %4236 = vmatprep.subr.bf16.mxu0 %v461
        %4237 = vmatpush1.bf16.msra.mxu0 %v460
        %4238 = vmatprep.subr.bf16.mxu0 %v463
        %4239 = vmatpush1.bf16.msra.mxu0 %v462
        %4240 = vmatprep.subr.bf16.mxu0 0
        %4241 = vmatpush1.bf16.msra.mxu0 0
        %4242 = vmatprep.subr.bf16.mxu0 0
        %4243 = vmatpush1.bf16.msra.mxu0 0
        %4244 = vmatprep.subr.bf16.mxu0 0
        %4245 = vmatpush1.bf16.msra.mxu0 0
        %4246 = vmatprep.subr.bf16.mxu0 0
        %4247 = vmatpush1.bf16.msra.mxu0 0
        %4248 = vmatprep.subr.bf16.mxu0 0
        %4249 = vmatpush1.bf16.msra.mxu0 0
        %4250 = vmatprep.subr.bf16.mxu0 0
        %4251 = vmatpush1.bf16.msra.mxu0 0
        %4252 = vmatprep.subr.bf16.mxu0 0
        %4253 = vmatpush1.bf16.msra.mxu0 0
        %4254 = vmatprep.subr.bf16.mxu0 0
        %4255 = vmatpush1.bf16.msra.mxu0 0
        %4256 = vmatprep.mubr.bf16.mxu0 0
        %4257 = vmatmul.mubr.bf16.gmra.mrb[0].mxu0 %v4216
        %v4258 = vpop.f32.mrb[0].mxu0
        %v4259 = vadd.f32 0.0, %v4258
        %v4260 = vpop.f32.mrb[0].mxu0
        %v4261 = vadd.f32 0.0, %v4260
        %v4262 = vpop.f32.mrb[0].mxu0
        %v4263 = vadd.f32 0.0, %v4262
        %v4264 = vpop.f32.mrb[0].mxu0
        %v4265 = vadd.f32 0.0, %v4264
        %4266 = vmatprep.mubr.bf16.mxu0 0
        %4267 = vmatmul.mubr.bf16.gmra.mrb[0].mxu0 %v4217
        %v4268 = vpop.f32.mrb[0].mxu0
        %v4269 = vadd.f32 0.0, %v4268
        %v4270 = vpop.f32.mrb[0].mxu0
        %v4271 = vadd.f32 0.0, %v4270
        %v4272 = vpop.f32.mrb[0].mxu0
        %v4273 = vadd.f32 0.0, %v4272
        %v4274 = vpop.f32.mrb[0].mxu0
        %v4275 = vadd.f32 0.0, %v4274
        %4276 = vmatprep.mubr.bf16.mxu0 0
        %4277 = vmatmul.mubr.bf16.gmra.mrb[0].mxu0 %v4218
        %v4278 = vpop.f32.mrb[0].mxu0
        %v4279 = vadd.f32 0.0, %v4278
        %v4280 = vpop.f32.mrb[0].mxu0
        %v4281 = vadd.f32 0.0, %v4280
        %v4282 = vpop.f32.mrb[0].mxu0
        %v4283 = vadd.f32 0.0, %v4282
        %v4284 = vpop.f32.mrb[0].mxu0
        %v4285 = vadd.f32 0.0, %v4284
        %4286 = vmatprep.mubr.bf16.mxu0 0
        %4287 = vmatmul.mubr.bf16.gmra.mrb[0].mxu0 %v4219
        %v4288 = vpop.f32.mrb[0].mxu0
        %v4289 = vadd.f32 0.0, %v4288
        %v4290 = vpop.f32.mrb[0].mxu0
        %v4291 = vadd.f32 0.0, %v4290
        %v4292 = vpop.f32.mrb[0].mxu0
        %v4293 = vadd.f32 0.0, %v4292
        %v4294 = vpop.f32.mrb[0].mxu0
        %v4295 = vadd.f32 0.0, %v4294
        %4296 = vmatprep.mubr.bf16.mxu0 0
        %4297 = vmatmul.mubr.bf16.gmra.mrb[0].mxu0 %v4220
        %v4298 = vpop.f32.mrb[0].mxu0
        %v4299 = vadd.f32 0.0, %v4298
        %v4300 = vpop.f32.mrb[0].mxu0
        %v4301 = vadd.f32 0.0, %v4300
        %v4302 = vpop.f32.mrb[0].mxu0
        %v4303 = vadd.f32 0.0, %v4302
        %v4304 = vpop.f32.mrb[0].mxu0
        %v4305 = vadd.f32 0.0, %v4304
        %4306 = vmatprep.mubr.bf16.mxu0 0
        %4307 = vmatmul.mubr.bf16.gmra.mrb[0].mxu0 %v4221
        %v4308 = vpop.f32.mrb[0].mxu0
        %v4309 = vadd.f32 0.0, %v4308
        %v4310 = vpop.f32.mrb[0].mxu0
        %v4311 = vadd.f32 0.0, %v4310
        %v4312 = vpop.f32.mrb[0].mxu0
        %v4313 = vadd.f32 0.0, %v4312
        %v4314 = vpop.f32.mrb[0].mxu0
        %v4315 = vadd.f32 0.0, %v4314
        %4316 = vmatprep.mubr.bf16.mxu0 0
        %4317 = vmatmul.mubr.bf16.gmra.mrb[0].mxu0 %v4222
        %v4318 = vpop.f32.mrb[0].mxu0
        %v4319 = vadd.f32 0.0, %v4318
        %v4320 = vpop.f32.mrb[0].mxu0
        %v4321 = vadd.f32 0.0, %v4320
        %v4322 = vpop.f32.mrb[0].mxu0
        %v4323 = vadd.f32 0.0, %v4322
        %v4324 = vpop.f32.mrb[0].mxu0
        %v4325 = vadd.f32 0.0, %v4324
        %4326 = vmatprep.mubr.bf16.mxu0 0
        %4327 = vmatmul.mubr.bf16.gmra.mrb[0].mxu0 %v4223
        %v4328 = vpop.f32.mrb[0].mxu0
        %v4329 = vadd.f32 0.0, %v4328
        %v4330 = vpop.f32.mrb[0].mxu0
        %v4331 = vadd.f32 0.0, %v4330
        %v4332 = vpop.f32.mrb[0].mxu0
        %v4333 = vadd.f32 0.0, %v4332
        %v4334 = vpop.f32.mrb[0].mxu0
        %v4335 = vadd.f32 0.0, %v4334
        %4336 = vdwg.mxu0
        %v4337 = vadd.f32 %v4166, %v4259
        %v4338 = vadd.f32 %v4167, %v4261
        %v4339 = vadd.f32 %v4168, %v4263
        %v4340 = vadd.f32 %v4169, %v4265
        %v4341 = vadd.f32 %v4170, %v4269
        %v4342 = vadd.f32 %v4171, %v4271
        %v4343 = vadd.f32 %v4172, %v4273
        %v4344 = vadd.f32 %v4173, %v4275
        %v4345 = vadd.f32 %v4174, %v4279
        %v4346 = vadd.f32 %v4175, %v4281
        %v4347 = vadd.f32 %v4176, %v4283
        %v4348 = vadd.f32 %v4177, %v4285
        %v4349 = vadd.f32 %v4178, %v4289
        %v4350 = vadd.f32 %v4179, %v4291
        %v4351 = vadd.f32 %v4180, %v4293
        %v4352 = vadd.f32 %v4181, %v4295
        %v4353 = vadd.f32 %v4182, %v4299
        %v4354 = vadd.f32 %v4183, %v4301
        %v4355 = vadd.f32 %v4184, %v4303
        %v4356 = vadd.f32 %v4185, %v4305
        %v4357 = vadd.f32 %v4186, %v4309
        %v4358 = vadd.f32 %v4187, %v4311
        %v4359 = vadd.f32 %v4188, %v4313
        %v4360 = vadd.f32 %v4189, %v4315
        %v4361 = vadd.f32 %v4190, %v4319
        %v4362 = vadd.f32 %v4191, %v4321
        %v4363 = vadd.f32 %v4192, %v4323
        %v4364 = vadd.f32 %v4193, %v4325
        %v4365 = vadd.f32 %v4194, %v4329
        %v4366 = vadd.f32 %v4195, %v4331
        %v4367 = vadd.f32 %v4196, %v4333
        %v4368 = vadd.f32 %v4197, %v4335
        %4369 = vst [vmem:[%s308] sm:$0xff] %v4337
        %4370 = vst [vmem:[%s308 + $0x8] sm:$0xff] %v4338
        %4371 = vst [vmem:[%s308 + $0x10] sm:$0xff] %v4339
        %4372 = vst [vmem:[%s308 + $0x18] sm:$0xff] %v4340
        %4373 = vst [vmem:[%s308 + $0x20] sm:$0xff] %v4341
        %4374 = vst [vmem:[%s308 + $0x28] sm:$0xff] %v4342
        %4375 = vst [vmem:[%s308 + $0x30] sm:$0xff] %v4343
        %4376 = vst [vmem:[%s308 + $0x38] sm:$0xff] %v4344
        %4377 = vst [vmem:[%s308 + $0x40] sm:$0xff] %v4345
        %4378 = vst [vmem:[%s308 + $0x48] sm:$0xff] %v4346
        %4379 = vst [vmem:[%s308 + $0x50] sm:$0xff] %v4347
        %4380 = vst [vmem:[%s308 + $0x58] sm:$0xff] %v4348
        %4381 = vst [vmem:[%s308 + $0x60] sm:$0xff] %v4349
        %4382 = vst [vmem:[%s308 + $0x68] sm:$0xff] %v4350
        %4383 = vst [vmem:[%s308 + $0x70] sm:$0xff] %v4351
        %4384 = vst [vmem:[%s308 + $0x78] sm:$0xff] %v4352
        %4385 = vst [vmem:[%s308 + $0x80] sm:$0xff] %v4353
        %4386 = vst [vmem:[%s308 + $0x88] sm:$0xff] %v4354
        %4387 = vst [vmem:[%s308 + $0x90] sm:$0xff] %v4355
        %4388 = vst [vmem:[%s308 + $0x98] sm:$0xff] %v4356
        %4389 = vst [vmem:[%s308 + $0xa0] sm:$0xff] %v4357
        %4390 = vst [vmem:[%s308 + $0xa8] sm:$0xff] %v4358
        %4391 = vst [vmem:[%s308 + $0xb0] sm:$0xff] %v4359
        %4392 = vst [vmem:[%s308 + $0xb8] sm:$0xff] %v4360
        %4393 = vst [vmem:[%s308 + $0xc0] sm:$0xff] %v4361
        %4394 = vst [vmem:[%s308 + $0xc8] sm:$0xff] %v4362
        %4395 = vst [vmem:[%s308 + $0xd0] sm:$0xff] %v4363
        %4396 = vst [vmem:[%s308 + $0xd8] sm:$0xff] %v4364
        %4397 = vst [vmem:[%s308 + $0xe0] sm:$0xff] %v4365
        %4398 = vst [vmem:[%s308 + $0xe8] sm:$0xff] %v4366
        %4399 = vst [vmem:[%s308 + $0xf0] sm:$0xff] %v4367
        %4400 = vst [vmem:[%s308 + $0xf8] sm:$0xff] %v4368
        %v4401 = vld [vmem:[%s308] sm:$0xff]
        %v4402 = vld [vmem:[%s308 + $0x8] sm:$0xff]
        %v4403 = vld [vmem:[%s308 + $0x10] sm:$0xff]
        %v4404 = vld [vmem:[%s308 + $0x18] sm:$0xff]
        %v4405 = vld [vmem:[%s308 + $0x20] sm:$0xff]
        %v4406 = vld [vmem:[%s308 + $0x28] sm:$0xff]
        %v4407 = vld [vmem:[%s308 + $0x30] sm:$0xff]
        %v4408 = vld [vmem:[%s308 + $0x38] sm:$0xff]
        %v4409 = vld [vmem:[%s308 + $0x40] sm:$0xff]
        %v4410 = vld [vmem:[%s308 + $0x48] sm:$0xff]
        %v4411 = vld [vmem:[%s308 + $0x50] sm:$0xff]
        %v4412 = vld [vmem:[%s308 + $0x58] sm:$0xff]
        %v4413 = vld [vmem:[%s308 + $0x60] sm:$0xff]
        %v4414 = vld [vmem:[%s308 + $0x68] sm:$0xff]
        %v4415 = vld [vmem:[%s308 + $0x70] sm:$0xff]
        %v4416 = vld [vmem:[%s308 + $0x78] sm:$0xff]
        %v4417 = vld [vmem:[%s308 + $0x80] sm:$0xff]
        %v4418 = vld [vmem:[%s308 + $0x88] sm:$0xff]
        %v4419 = vld [vmem:[%s308 + $0x90] sm:$0xff]
        %v4420 = vld [vmem:[%s308 + $0x98] sm:$0xff]
        %v4421 = vld [vmem:[%s308 + $0xa0] sm:$0xff]
        %v4422 = vld [vmem:[%s308 + $0xa8] sm:$0xff]
        %v4423 = vld [vmem:[%s308 + $0xb0] sm:$0xff]
        %v4424 = vld [vmem:[%s308 + $0xb8] sm:$0xff]
        %v4425 = vld [vmem:[%s308 + $0xc0] sm:$0xff]
        %v4426 = vld [vmem:[%s308 + $0xc8] sm:$0xff]
        %v4427 = vld [vmem:[%s308 + $0xd0] sm:$0xff]
        %v4428 = vld [vmem:[%s308 + $0xd8] sm:$0xff]
        %v4429 = vld [vmem:[%s308 + $0xe0] sm:$0xff]
        %v4430 = vld [vmem:[%s308 + $0xe8] sm:$0xff]
        %v4431 = vld [vmem:[%s308 + $0xf0] sm:$0xff]
        %v4432 = vld [vmem:[%s308 + $0xf8] sm:$0xff]
        %v4433 = vld [vmem:[%s4] sm:$0x3]
        %v4435 = vlaneseq
        %v4436 = vshrl.u32 %v4435, 7
        %v4437 = vsub.s32 0, %v4436
        %v4438 = vrot.slane %v4433, %v4437
        %v4439 = vlaneseq
        %v4440 = vshrl.u32 %v4439, 7
        %v4441 = vsub.s32 1, %v4440
        %v4442 = vrot.slane %v4433, %v4441
        %v4445 = vadd.f32 %v4401, %v4438
        %v4446 = vadd.f32 %v4402, %v4442
        %v4447 = vadd.f32 %v4403, %v4438
        %v4448 = vadd.f32 %v4404, %v4442
        %v4449 = vadd.f32 %v4405, %v4438
        %v4450 = vadd.f32 %v4406, %v4442
        %v4451 = vadd.f32 %v4407, %v4438
        %v4452 = vadd.f32 %v4408, %v4442
        %v4453 = vadd.f32 %v4409, %v4438
        %v4454 = vadd.f32 %v4410, %v4442
        %v4455 = vadd.f32 %v4411, %v4438
        %v4456 = vadd.f32 %v4412, %v4442
        %v4457 = vadd.f32 %v4413, %v4438
        %v4458 = vadd.f32 %v4414, %v4442
        %v4459 = vadd.f32 %v4415, %v4438
        %v4460 = vadd.f32 %v4416, %v4442
        %v4461 = vadd.f32 %v4417, %v4438
        %v4462 = vadd.f32 %v4418, %v4442
        %v4463 = vadd.f32 %v4419, %v4438
        %v4464 = vadd.f32 %v4420, %v4442
        %v4465 = vadd.f32 %v4421, %v4438
        %v4466 = vadd.f32 %v4422, %v4442
        %v4467 = vadd.f32 %v4423, %v4438
        %v4468 = vadd.f32 %v4424, %v4442
        %v4469 = vadd.f32 %v4425, %v4438
        %v4470 = vadd.f32 %v4426, %v4442
        %v4471 = vadd.f32 %v4427, %v4438
        %v4472 = vadd.f32 %v4428, %v4442
        %v4473 = vadd.f32 %v4429, %v4438
        %v4474 = vadd.f32 %v4430, %v4442
        %v4475 = vadd.f32 %v4431, %v4438
        %v4476 = vadd.f32 %v4432, %v4442
        %v4477 = vmax.f32 %v4445, 0.0
        %v4478 = vmax.f32 %v4446, 0.0
        %v4479 = vmax.f32 %v4447, 0.0
        %v4480 = vmax.f32 %v4448, 0.0
        %v4481 = vmax.f32 %v4449, 0.0
        %v4482 = vmax.f32 %v4450, 0.0
        %v4483 = vmax.f32 %v4451, 0.0
        %v4484 = vmax.f32 %v4452, 0.0
        %v4485 = vmax.f32 %v4453, 0.0
        %v4486 = vmax.f32 %v4454, 0.0
        %v4487 = vmax.f32 %v4455, 0.0
        %v4488 = vmax.f32 %v4456, 0.0
        %v4489 = vmax.f32 %v4457, 0.0
        %v4490 = vmax.f32 %v4458, 0.0
        %v4491 = vmax.f32 %v4459, 0.0
        %v4492 = vmax.f32 %v4460, 0.0
        %v4493 = vmax.f32 %v4461, 0.0
        %v4494 = vmax.f32 %v4462, 0.0
        %v4495 = vmax.f32 %v4463, 0.0
        %v4496 = vmax.f32 %v4464, 0.0
        %v4497 = vmax.f32 %v4465, 0.0
        %v4498 = vmax.f32 %v4466, 0.0
        %v4499 = vmax.f32 %v4467, 0.0
        %v4500 = vmax.f32 %v4468, 0.0
        %v4501 = vmax.f32 %v4469, 0.0
        %v4502 = vmax.f32 %v4470, 0.0
        %v4503 = vmax.f32 %v4471, 0.0
        %v4504 = vmax.f32 %v4472, 0.0
        %v4505 = vmax.f32 %v4473, 0.0
        %v4506 = vmax.f32 %v4474, 0.0
        %v4507 = vmax.f32 %v4475, 0.0
        %v4508 = vmax.f32 %v4476, 0.0
        %4509 = vst [vmem:[%s308] sm:$0xff] %v4477
        %4510 = vst [vmem:[%s308 + $0x8] sm:$0xff] %v4478
        %4511 = vst [vmem:[%s308 + $0x10] sm:$0xff] %v4479
        %4512 = vst [vmem:[%s308 + $0x18] sm:$0xff] %v4480
        %4513 = vst [vmem:[%s308 + $0x20] sm:$0xff] %v4481
        %4514 = vst [vmem:[%s308 + $0x28] sm:$0xff] %v4482
        %4515 = vst [vmem:[%s308 + $0x30] sm:$0xff] %v4483
        %4516 = vst [vmem:[%s308 + $0x38] sm:$0xff] %v4484
        %4517 = vst [vmem:[%s308 + $0x40] sm:$0xff] %v4485
        %4518 = vst [vmem:[%s308 + $0x48] sm:$0xff] %v4486
        %4519 = vst [vmem:[%s308 + $0x50] sm:$0xff] %v4487
        %4520 = vst [vmem:[%s308 + $0x58] sm:$0xff] %v4488
        %4521 = vst [vmem:[%s308 + $0x60] sm:$0xff] %v4489
        %4522 = vst [vmem:[%s308 + $0x68] sm:$0xff] %v4490
        %4523 = vst [vmem:[%s308 + $0x70] sm:$0xff] %v4491
        %4524 = vst [vmem:[%s308 + $0x78] sm:$0xff] %v4492
        %4525 = vst [vmem:[%s308 + $0x80] sm:$0xff] %v4493
        %4526 = vst [vmem:[%s308 + $0x88] sm:$0xff] %v4494
        %4527 = vst [vmem:[%s308 + $0x90] sm:$0xff] %v4495
        %4528 = vst [vmem:[%s308 + $0x98] sm:$0xff] %v4496
        %4529 = vst [vmem:[%s308 + $0xa0] sm:$0xff] %v4497
        %4530 = vst [vmem:[%s308 + $0xa8] sm:$0xff] %v4498
        %4531 = vst [vmem:[%s308 + $0xb0] sm:$0xff] %v4499
        %4532 = vst [vmem:[%s308 + $0xb8] sm:$0xff] %v4500
        %4533 = vst [vmem:[%s308 + $0xc0] sm:$0xff] %v4501
        %4534 = vst [vmem:[%s308 + $0xc8] sm:$0xff] %v4502
        %4535 = vst [vmem:[%s308 + $0xd0] sm:$0xff] %v4503
        %4536 = vst [vmem:[%s308 + $0xd8] sm:$0xff] %v4504
        %4537 = vst [vmem:[%s308 + $0xe0] sm:$0xff] %v4505
        %4538 = vst [vmem:[%s308 + $0xe8] sm:$0xff] %v4506
        %4539 = vst [vmem:[%s308 + $0xf0] sm:$0xff] %v4507
        %4540 = vst [vmem:[%s308 + $0xf8] sm:$0xff] %v4508
        %s4541 = sand.u32 %s149, 1
        %s4542 = scalar_lea.sflag [#allocation4], %s4541
        %s4543 = sand.u32 %s149, 1
        %s4544 = smul.addr %s4543, 256
        %s4545 = scalar_lea.vmem [#allocation10], %s4544
        // Predicated region
        $region57: #{tpu_custom_call.1} parent=39 // pred_check
          %p4546 = pneg %p159
        $region58: #{tpu_custom_call.1} parent=39 // pred_check_branch
          %4548 = sbr.rel (%p4546) target = $region60
        $region59: #{tpu_custom_call.1} parent=39 // pred_region
          %s4550 = ssub.s32 4096, 4096
          %4551 = vsyncadd %s4542, %s4550
          %s4552 = smul.addr %s26, 32
          %s4553 = smul.addr %s4552, 128
          %s4554 = scalar_lea.hbm %s5, %s4553
          %s4555 = sshll.u32 %s4545, 4
          %s4556 = int_to_ptr.vmem [resolvable:$true] %s4555
          %4561 = dma.vmem_to_hbm [thread:$0]  %s4556, 4096, %s4554, %s4542, 256, 256, 16
        $region60: #{tpu_custom_call.1} parent=39 // pred_fallthru
          _
      $region40: #{tpu_custom_call.1} parent=5 // pred_fallthru
        _
      %p4562 = scmp.le.s32.totalorder 2, %s21
      // Predicated region
      $region61: #{tpu_custom_call.1} parent=5 // pred_check
        %p4563 = pneg %p4562
      $region62: #{tpu_custom_call.1} parent=5 // pred_check_branch
        %4565 = sbr.rel (%p4563) target = $region64
      $region63: #{tpu_custom_call.1} parent=5 // pred_region
        %s4566 = ssub.s32 %s21, 2
        // Predicated region
        $region65: #{tpu_custom_call.1} parent=63 // pred_check
          %p4567 = pneg %p165
        $region66: #{tpu_custom_call.1} parent=63 // pred_check_branch
          %4569 = sbr.rel (%p4567) target = $region68
        $region67: #{tpu_custom_call.1} parent=63 // pred_region
          %s4570 = sand.u32 %s150, 1
          %s4571 = scalar_lea.sflag [#allocation4], %s4570
          %s4572 = sand.u32 %s150, 1
          %s4573 = smul.addr %s4572, 256
          %s4574 = scalar_lea.vmem [#allocation10], %s4573
          %4575 = dma.done %s4571, 4096
        $region68: #{tpu_custom_call.1} parent=63 // pred_fallthru
          _
      $region64: #{tpu_custom_call.1} parent=5 // pred_fallthru
        _
    $region6: #{tpu_custom_call.1} parent=1 // loop_footer
      %s25 = sadd.s32 1, %s21
    $region7: #{tpu_custom_call.1} parent=1 // loop_footer_branch
      %20 = sbr.rel target = $region3
    $region8: #{tpu_custom_call.1} parent=1 // loop_exit
      _
    %4576 = vsyncpa [#allocation3], 1
    %s4577 = scalar_lea.sflag [#allocation3], 1
    %4578 = vsyncpa %s4577, 1
    %4579 = vsyncpa [#allocation8], 1
    %s4580 = scalar_lea.sflag [#allocation8], 1
    %4581 = vsyncpa %s4580, 1
    %4582 = vsyncpa [#allocation4], 1
    %s4583 = scalar_lea.sflag [#allocation4], 1
    %4584 = vsyncpa %s4583, 1
    %4585 = vsyncpa [#allocation5], 1
    %s4586 = scalar_lea.sflag [#allocation5], 1
    %4587 = vsyncpa %s4586, 1

</llo_original>
